<compile_context>
chip_gen: v5e
topology: v5e:2x2
jax: 0.10.0
libtpu: 0.0.40
codegen_flags: <defaults>
</compile_context>

<pallas_src>
import functools

import jax
import jax.numpy as jnp
from jax.experimental import pallas as pl
from jax.experimental.pallas import tpu as pltpu


def _round_up(x, m):
    return (x + m - 1) // m * m


# ---------------------------------------------------------------------------
# Kernel
# ---------------------------------------------------------------------------
def _res_lstm_kernel(input_eq_hidden,
                     x_ref, wx_ref, wh_ref, wc_ref, bx_ref, bhh_ref,
                     h0_ref, c0_ref,
                     y_ref, hN_ref, cN_ref,
                     h_scr, c_scr):
    g = pl.program_id(0)
    Bp, Hp = h_scr.shape
    Tc = y_ref.shape[0]
    mxu_dtype = wx_ref.dtype

    # Load the initial hidden/cell state into the carried scratch once.
    @pl.when(g == 0)
    def _():
        h_scr[...] = h0_ref[...]
        c_scr[...] = c0_ref[...]

    # ---- chunk-wide x projection, hoisted off the serial recurrence --------
    # One (Tc*Bp, Ip) @ (Ip, Gx) MXU matmul covering the three Wii gate blocks
    # (+ the Wir residual block when input_size != hidden_size); fused gate
    # bias added once per chunk.  Each Hp-wide output block is lane-aligned.
    x2 = x_ref[...]                                          # (Tc*Bp, Ip) f32
    xg = (jnp.dot(x2.astype(mxu_dtype), wx_ref[...],
                  preferred_element_type=jnp.float32)
          + bx_ref[...])                                     # (Tc*Bp, Gx) f32
    # b_hh broadcast hoisted once per chunk (JAX does not CSE broadcasts).
    bhh = jnp.broadcast_to(bhh_ref[...], (Bp, Hp))

    # ---- serial recurrence ---------------------------------------------------
    h = h_scr[...]
    c = c_scr[...]
    for t in range(Tc):          # unrolled; Tc capped by the wrapper heuristic
        row = t * Bp
        xg_t = xg[row:row + Bp, :]
        # Split recurrence matmuls (no [h|c] concat copy, no zero c->cellgate
        # block); the c-side matmul only depends on c_t, so it can issue before
        # the previous step's tanh/outgate tail retires.
        hg = jnp.dot(h.astype(mxu_dtype), wh_ref[...],
                     preferred_element_type=jnp.float32)     # (Bp, 4*Hp)
        cg = jnp.dot(c.astype(mxu_dtype), wc_ref[...],
                     preferred_element_type=jnp.float32)     # (Bp, 3*Hp)
        pre_ifo = xg_t[:, :3 * Hp] + hg[:, :3 * Hp] + cg
        gates = jax.nn.sigmoid(pre_ifo)       # single EUP pass over i/f/o gates
        ingate = gates[:, 0 * Hp:1 * Hp]
        forgetgate = gates[:, 1 * Hp:2 * Hp]
        outgate = gates[:, 2 * Hp:3 * Hp]
        cellgate = jnp.tanh(hg[:, 3 * Hp:4 * Hp] + bhh)
        c = forgetgate * c + ingate * cellgate
        ry = jnp.tanh(c)
        if input_eq_hidden:      # static Python branch (mirrors the torch buffer test)
            res = x2[row:row + Bp, :]
        else:
            res = xg_t[:, 3 * Hp:4 * Hp]      # Wir residual projection (no bias)
        h = outgate * (ry + res)
        y_ref[t] = h

    # Carry state to the next chunk.
    h_scr[...] = h
    c_scr[...] = c

    # Final-state outputs are resident blocks; only store them once.
    @pl.when(g == pl.num_programs(0) - 1)
    def _():
        hN_ref[...] = h
        cN_ref[...] = c


# ---------------------------------------------------------------------------
# Weight packing
# ---------------------------------------------------------------------------
def _build_fused_weights(params, I, H, Ip, Hp, input_eq_hidden, mxu_dtype):
    """Pack weights into lane-aligned fused matrices (no explicit zero blocks).

    wx : (Ip, Gx)      x -> [ingate | forgetgate | outgate (| residual)]
    wh : (Hp, 4*Hp)    h -> [ingate | forgetgate | outgate | cellgate]
    wc : (Hp, 3*Hp)    c -> [ingate | forgetgate | outgate]
    bx : (1, Gx)       fused b_ii + b_ih + b_ic on the gate blocks
    bhh: (1, Hp)       cellgate bias
    """
    n_xblk = 3 if input_eq_hidden else 4
    Gx = n_xblk * Hp

    wii_t, wih_t, wic_t = params["wii_t"], params["wih_t"], params["wic_t"]
    b3 = params["b_ii"] + params["b_ih"] + params["b_ic"]

    wx = jnp.zeros((Ip, Gx), jnp.float32)
    wh = jnp.zeros((Hp, 4 * Hp), jnp.float32)
    wc = jnp.zeros((Hp, 3 * Hp), jnp.float32)
    bx = jnp.zeros((1, Gx), jnp.float32)
    bhh = jnp.zeros((1, Hp), jnp.float32).at[0, :H].set(params["b_hh"])

    for g in range(3):
        wx = wx.at[:I, g * Hp:g * Hp + H].set(wii_t[:, g * H:(g + 1) * H])
        wh = wh.at[:H, g * Hp:g * Hp + H].set(wih_t[:, g * H:(g + 1) * H])
        wc = wc.at[:H, g * Hp:g * Hp + H].set(wic_t[:, g * H:(g + 1) * H])
        bx = bx.at[0, g * Hp:g * Hp + H].set(b3[g * H:(g + 1) * H])
    wh = wh.at[:H, 3 * Hp:3 * Hp + H].set(params["whh_t"])
    if not input_eq_hidden:
        wx = wx.at[:I, 3 * Hp:3 * Hp + H].set(params["wir_t"])   # no bias on residual

    return (wx.astype(mxu_dtype), wh.astype(mxu_dtype), wc.astype(mxu_dtype),
            bx, bhh)


# ---------------------------------------------------------------------------
# pallas_call wrapper
# ---------------------------------------------------------------------------
_SINGLE_BUFFER_WEIGHTS_OK = True   # flipped off if pipeline_mode=Buffered(1) is rejected


def _forward_call(xp, wx, wh, wc, bx, bhh, h0p, c0p, *,
                  Tc, n_chunks, Bp, Hp, Ip, input_eq_hidden,
                  single_buffer_weights, vmem_limit_bytes):
    T = Tc * n_chunks
    kernel = functools.partial(_res_lstm_kernel, input_eq_hidden)
    # Grid-invariant blocks: single-buffer to halve their VMEM footprint.
    spec_kw = {"pipeline_mode": pl.Buffered(1)} if single_buffer_weights else {}

    def inv(shape):
        n = len(shape)
        return pl.BlockSpec(shape, lambda g, _n=n: (0,) * _n, **spec_kw)

    return pl.pallas_call(
        kernel,
        out_shape=(
            jax.ShapeDtypeStruct((T, Bp, Hp), jnp.float32),
            jax.ShapeDtypeStruct((Bp, Hp), jnp.float32),
            jax.ShapeDtypeStruct((Bp, Hp), jnp.float32),
        ),
        grid_spec=pltpu.PrefetchScalarGridSpec(
            num_scalar_prefetch=0,
            grid=(n_chunks,),
            in_specs=[
                pl.BlockSpec((pl.Squeezed(), Tc * Bp, Ip),
                             lambda g: (g, 0, 0)),   # x chunk (lane-dense slab)
                inv(wx.shape),    # fused x-projection weight (gates [+ residual])
                inv(wh.shape),    # h recurrence weight (gates + cellgate)
                inv(wc.shape),    # c recurrence weight (gates only)
                inv(bx.shape),    # fused gate bias
                inv(bhh.shape),   # cellgate bias b_hh
                inv((Bp, Hp)),    # h0
                inv((Bp, Hp)),    # c0
            ],
            out_specs=[
                pl.BlockSpec((Tc, Bp, Hp), lambda g: (g, 0, 0)),  # per-step outputs
                pl.BlockSpec((Bp, Hp), lambda g: (0, 0)),         # final h (resident)
                pl.BlockSpec((Bp, Hp), lambda g: (0, 0)),         # final c (resident)
            ],
            scratch_shapes=[
                pltpu.VMEM((Bp, Hp), jnp.float32),   # carried h
                pltpu.VMEM((Bp, Hp), jnp.float32),   # carried c
            ],
        ),
        compiler_params=pltpu.CompilerParams(
            dimension_semantics=("arbitrary",),      # time recurrence is serial
            vmem_limit_bytes=vmem_limit_bytes),
    )(xp, wx, wh, wc, bx, bhh, h0p, c0p)


def _pick_time_chunk(T, Bp, Ip, Hp, Gx, *, budget_bytes=24 << 20, max_unroll=32):
    """Largest Tc (divides T, <= max_unroll, fits a per-chunk VMEM budget) with
    a preference for the smallest Tc that reaches Tc*Bp >= 256 MXU rows."""
    def chunk_bytes(tc):
        # x chunk (x2 buffers) + y chunk (x2 buffers) + hoisted xg slab, all f32.
        return 4 * tc * Bp * (2 * Ip + 2 * Hp + Gx)

    divisors = [d for d in range(1, min(T, max_unroll) + 1) if T % d == 0]
    fit = [d for d in divisors if chunk_bytes(d) <= budget_bytes] or divisors[:1]
    full_rows = [d for d in fit if d * Bp >= 256]     # v6e/v7x 2x256^2 MXU rows
    return min(full_rows) if full_rows else max(fit)


def res_lstm_layer(x, h0, c0, params, *, mxu_dtype=jnp.bfloat16, time_chunk=None):
    """x: (T, B, I) f32; h0, c0: (B, H) f32. Returns (y (T,B,H), (hN, cN))."""
    global _SINGLE_BUFFER_WEIGHTS_OK
    T, B, I = x.shape
    H = params["whh_t"].shape[1]
    input_eq_hidden = (I == H)

    Bp = _round_up(B, 8)                    # sublane alignment
    Hp = _round_up(H, 128)                  # lane alignment -> aligned gate slices
    Ip = Hp if input_eq_hidden else I       # pad x features only if used as residual
    Gx = (3 if input_eq_hidden else 4) * Hp

    if time_chunk is None:
        time_chunk = _pick_time_chunk(T, Bp, Ip, Hp, Gx)
    Tc = time_chunk
    if T % Tc != 0:
        raise ValueError("time_chunk must divide T")
    n_chunks = T // Tc

    wx, wh, wc, bx, bhh = _build_fused_weights(params, I, H, Ip, Hp,
                                               input_eq_hidden, mxu_dtype)

    # Pad only when required (avoids an extra HBM round-trip of x when B, I are
    # already aligned).  The chunk reshape below is contiguous -> metadata-only.
    # Padded lanes provably stay zero through the recurrence (zero weights, zero
    # bias, zero initial state); padded batch rows accumulate row-independent
    # garbage that is sliced off at the end.
    if (B, I) == (Bp, Ip):
        xp = x
    else:
        xp = jnp.zeros((T, Bp, Ip), x.dtype).at[:, :B, :I].set(x)
    xp = xp.reshape(n_chunks, Tc * Bp, Ip)
    if (B, H) == (Bp, Hp):
        h0p, c0p = h0, c0
    else:
        h0p = jnp.zeros((Bp, Hp), jnp.float32).at[:B, :H].set(h0)
        c0p = jnp.zeros((Bp, Hp), jnp.float32).at[:B, :H].set(c0)

    # Scoped-VMEM budget sized from the actual buffers (raises v5e's 16 MiB
    # default; stays within v7x's 64 MiB physical VMEM).
    wbytes = jnp.dtype(mxu_dtype).itemsize
    weight_bytes = (wx.size + wh.size + wc.size) * wbytes + (bx.size + bhh.size) * 4
    est = (2 * Tc * Bp * Ip * 4          # x chunk, double-buffered
           + 2 * Tc * Bp * Hp * 4        # y chunk, double-buffered
           + Tc * Bp * Gx * 4            # hoisted xg slab (live across the unrolled loop)
           + 2 * weight_bytes            # invariant weights (conservatively x2)
           + 8 * Bp * Hp * 4)            # h0/c0, hN/cN blocks, h/c scratch
    vmem_limit = int(min(64 * 1024 * 1024, max(32 * 1024 * 1024, 2 * est)))

    call = functools.partial(
        _forward_call, xp, wx, wh, wc, bx, bhh, h0p, c0p,
        Tc=Tc, n_chunks=n_chunks, Bp=Bp, Hp=Hp, Ip=Ip,
        input_eq_hidden=input_eq_hidden, vmem_limit_bytes=vmem_limit)

    if _SINGLE_BUFFER_WEIGHTS_OK:
        try:
            y, hN, cN = call(single_buffer_weights=True)
        except Exception:
            # pipeline_mode=pl.Buffered(1) not supported by this build; fall back
            # to default double-buffered invariant blocks (correctness identical).
            _SINGLE_BUFFER_WEIGHTS_OK = False
            y, hN, cN = call(single_buffer_weights=False)
    else:
        y, hN, cN = call(single_buffer_weights=False)

    return y[:, :B, :H], (hN[:B, :H], cN[:B, :H])


# ---------------------------------------------------------------------------
# Pure-JAX reference + params (for correctness checking)
# ---------------------------------------------------------------------------
def res_lstm_reference(x, h0, c0, params, mxu_dtype=jnp.float32):
    """Pure-JAX replica of ResLSTMLayer.forward."""
    I = x.shape[-1]
    H = h0.shape[-1]
    input_eq_hidden = (I == H)

    def mm(a, b):
        return jnp.dot(a.astype(mxu_dtype), b.astype(mxu_dtype),
                       preferred_element_type=jnp.float32)

    def step(carry, xt):
        hx, cx = carry
        ifo = (mm(xt, params["wii_t"]) + params["b_ii"]
               + mm(hx, params["wih_t"]) + params["b_ih"]
               + mm(cx, params["wic_t"]) + params["b_ic"])
        ingate, forgetgate, outgate = jnp.split(ifo, 3, axis=1)
        cellgate = jnp.tanh(mm(hx, params["whh_t"]) + params["b_hh"])
        ingate = jax.nn.sigmoid(ingate)
        forgetgate = jax.nn.sigmoid(forgetgate)
        outgate = jax.nn.sigmoid(outgate)
        cy = forgetgate * cx + ingate * cellgate
        ry = jnp.tanh(cy)
        res = xt if input_eq_hidden else mm(xt, params["wir_t"])
        hy = outgate * (ry + res)
        return (hy, cy), hy

    (hN, cN), ys = jax.lax.scan(step, (h0, c0), x)
    return ys, (hN, cN)


def init_params(key, input_size, hidden_size):
    ks = jax.random.split(key, 9)
    H, I = hidden_size, input_size
    # torch.randn-style init; store matmul weights pre-transposed (in, out).
    return {
        "wii_t": jax.random.normal(ks[0], (3 * H, I), jnp.float32).T,
        "wic_t": jax.random.normal(ks[1], (3 * H, H), jnp.float32).T,
        "wih_t": jax.random.normal(ks[2], (3 * H, H), jnp.float32).T,
        "b_ii": jax.random.normal(ks[3], (3 * H,), jnp.float32),
        "b_ic": jax.random.normal(ks[4], (3 * H,), jnp.float32),
        "b_ih": jax.random.normal(ks[5], (3 * H,), jnp.float32),
        "whh_t": jax.random.normal(ks[6], (H, H), jnp.float32).T,
        "b_hh": jax.random.normal(ks[7], (H,), jnp.float32),
        "wir_t": jax.random.normal(ks[8], (H, I), jnp.float32).T,
    }


if __name__ == "__main__":
    key = jax.random.PRNGKey(0)
    kx, kh, kc, kp, kx2, kh2, kc2, kp2 = jax.random.split(key, 8)

    # --- input_size != hidden_size (Wir residual projection path) -----------
    T, B, I, H = 8, 2, 16, 32   # seq=8, batch=2, input_size=16, hidden_size=32
    x = jax.random.normal(kx, (T, B, I), jnp.float32)
    # PyTorch hidden comes in as (1, B, H) and is squeeze(0)'d inside the cell.
    h0 = jax.random.normal(kh, (B, H), jnp.float32)
    c0 = jax.random.normal(kc, (B, H), jnp.float32)
    params = init_params(kp, I, H)

    # f32 MXU path, chunked so the h/c carry crosses grid steps (grid = 2).
    y, (hN, cN) = res_lstm_layer(x, h0, c0, params,
                                 mxu_dtype=jnp.float32, time_chunk=4)
    jax.block_until_ready((y, hN, cN))
    y_r, (hN_r, cN_r) = res_lstm_reference(x, h0, c0, params)
    assert jnp.allclose(y, y_r, atol=5e-4, rtol=5e-4)
    assert jnp.allclose(hN, hN_r, atol=5e-4, rtol=5e-4)
    assert jnp.allclose(cN, cN_r, atol=5e-4, rtol=5e-4)

    # Default path: bf16 MXU operands, auto time_chunk.  f32 accumulation,
    # f32 carried state and f32 gate math; compared against a reference that
    # casts its matmul operands the same way.
    y16, (hN16, cN16) = res_lstm_layer(x, h0, c0, params)
    jax.block_until_ready((y16, hN16, cN16))
    y_r16, (hN_r16, cN_r16) = res_lstm_reference(x, h0, c0, params,
                                                 mxu_dtype=jnp.bfloat16)
    assert jnp.allclose(y16, y_r16, atol=2e-2, rtol=2e-2)
    assert jnp.allclose(hN16, hN_r16, atol=2e-2, rtol=2e-2)
    assert jnp.allclose(cN16, cN_r16, atol=2e-2, rtol=2e-2)

    # --- input_size == hidden_size (identity residual path) -----------------
    I2 = H2 = 32
    x2 = jax.random.normal(kx2, (T, B, I2), jnp.float32)
    h02 = jax.random.normal(kh2, (B, H2), jnp.float32)
    c02 = jax.random.normal(kc2, (B, H2), jnp.float32)
    params2 = init_params(kp2, I2, H2)
    y2, (hN2, cN2) = res_lstm_layer(x2, h02, c02, params2,
                                    mxu_dtype=jnp.float32, time_chunk=2)
    jax.block_until_ready((y2, hN2, cN2))
    y2_r, (hN2_r, cN2_r) = res_lstm_reference(x2, h02, c02, params2)
    assert jnp.allclose(y2, y2_r, atol=5e-4, rtol=5e-4)
    assert jnp.allclose(hN2, hN2_r, atol=5e-4, rtol=5e-4)
    assert jnp.allclose(cN2, cN2_r, atol=5e-4, rtol=5e-4)

    print("KERNEL_OK")
</pallas_src>

<mosaic_0001>
module attributes {stable_mosaic.version = 11 : i64} {
  func.func @_res_lstm_kernel(%arg0: i32, %arg1: memref<1x32x16xf32, #tpu.memory_space<vmem>>, %arg2: memref<16x512xf32, #tpu.memory_space<vmem>>, %arg3: memref<128x512xf32, #tpu.memory_space<vmem>>, %arg4: memref<128x384xf32, #tpu.memory_space<vmem>>, %arg5: memref<1x512xf32, #tpu.memory_space<vmem>>, %arg6: memref<1x128xf32, #tpu.memory_space<vmem>>, %arg7: memref<8x128xf32, #tpu.memory_space<vmem>>, %arg8: memref<8x128xf32, #tpu.memory_space<vmem>>, %arg9: memref<4x8x128xf32, #tpu.memory_space<vmem>>, %arg10: memref<8x128xf32, #tpu.memory_space<vmem>>, %arg11: memref<8x128xf32, #tpu.memory_space<vmem>>, %arg12: memref<8x128xf32, #tpu.memory_space<vmem>>, %arg13: memref<8x128xf32, #tpu.memory_space<vmem>>) attributes {dimension_semantics = [#tpu.dimension_semantics<arbitrary>], iteration_bounds = array<i64: 2>, scalar_prefetch = 0 : i64, scratch_operands = 2 : i64, tpu.core_type = #tpu.core_type<tc>, window_params = [{transform_indices = @transform_0, window_bounds = array<i64: 1, 32, 16>}, {pipeline_mode = #tpu.pipeline_mode<synchronous>, transform_indices = @transform_1, window_bounds = array<i64: 16, 512>}, {pipeline_mode = #tpu.pipeline_mode<synchronous>, transform_indices = @transform_2, window_bounds = array<i64: 128, 512>}, {pipeline_mode = #tpu.pipeline_mode<synchronous>, transform_indices = @transform_3, window_bounds = array<i64: 128, 384>}, {pipeline_mode = #tpu.pipeline_mode<synchronous>, transform_indices = @transform_4, window_bounds = array<i64: 1, 512>}, {pipeline_mode = #tpu.pipeline_mode<synchronous>, transform_indices = @transform_5, window_bounds = array<i64: 1, 128>}, {pipeline_mode = #tpu.pipeline_mode<synchronous>, transform_indices = @transform_6, window_bounds = array<i64: 8, 128>}, {pipeline_mode = #tpu.pipeline_mode<synchronous>, transform_indices = @transform_7, window_bounds = array<i64: 8, 128>}, {transform_indices = @transform_8, window_bounds = array<i64: 4, 8, 128>}, {pipeline_mode = #tpu.pipeline_mode<synchronous>, transform_indices = @transform_9, window_bounds = array<i64: 8, 128>}, {pipeline_mode = #tpu.pipeline_mode<synchronous>, transform_indices = @transform_10, window_bounds = array<i64: 8, 128>}]} {
    %c0_i32 = arith.constant 0 : i32
    %0 = arith.cmpi eq, %arg0, %c0_i32 : i32
    %1 = arith.extui %0 : i1 to i32
    %c0_i32_0 = arith.constant 0 : i32
    %2 = arith.cmpi ne, %1, %c0_i32_0 : i32
    scf.if %2 {
      %c0_55 = arith.constant 0 : index
      %c0_56 = arith.constant 0 : index
      %140 = vector.load %arg7[%c0_55, %c0_56] : memref<8x128xf32, #tpu.memory_space<vmem>>, vector<8x128xf32>
      %c0_57 = arith.constant 0 : index
      %c0_58 = arith.constant 0 : index
      %141 = vector.load %arg12[%c0_57, %c0_58] : memref<8x128xf32, #tpu.memory_space<vmem>>, vector<8x128xf32>
      tpu.vector_store %arg12[%c0_57, %c0_58], %140 {strides = array<i32>} : memref<8x128xf32, #tpu.memory_space<vmem>>, vector<8x128xf32>,
      %c0_59 = arith.constant 0 : index
      %c0_60 = arith.constant 0 : index
      %142 = vector.load %arg8[%c0_59, %c0_60] : memref<8x128xf32, #tpu.memory_space<vmem>>, vector<8x128xf32>
      %c0_61 = arith.constant 0 : index
      %c0_62 = arith.constant 0 : index
      %143 = vector.load %arg13[%c0_61, %c0_62] : memref<8x128xf32, #tpu.memory_space<vmem>>, vector<8x128xf32>
      tpu.vector_store %arg13[%c0_61, %c0_62], %142 {strides = array<i32>} : memref<8x128xf32, #tpu.memory_space<vmem>>, vector<8x128xf32>,
    } else {
    }
    %c0 = arith.constant 0 : index
    %c0_1 = arith.constant 0 : index
    %c0_2 = arith.constant 0 : index
    %3 = vector.load %arg1[%c0, %c0_1, %c0_2] : memref<1x32x16xf32, #tpu.memory_space<vmem>>, vector<1x32x16xf32>
    %4 = vector.shape_cast %3 : vector<1x32x16xf32> to vector<32x16xf32>
    %c0_3 = arith.constant 0 : index
    %c0_4 = arith.constant 0 : index
    %5 = vector.load %arg2[%c0_3, %c0_4] : memref<16x512xf32, #tpu.memory_space<vmem>>, vector<16x512xf32>
    %cst = arith.constant dense<0.000000e+00> : vector<32x512xf32>
    %6 = tpu.matmul %4, %5, %cst {dimension_numbers = #tpu.dot_dimension_numbers<[1], [0], [0], [1], [0, 0, 1, 1], [], []>} : vector<32x16xf32>, vector<16x512xf32>, vector<32x512xf32> -> vector<32x512xf32>
    %c0_5 = arith.constant 0 : index
    %c0_6 = arith.constant 0 : index
    %7 = vector.load %arg5[%c0_5, %c0_6] : memref<1x512xf32, #tpu.memory_space<vmem>>, vector<1x512xf32>
    %8 = vector.broadcast %7 : vector<1x512xf32> to vector<32x512xf32>
    %9 = arith.addf %6, %8 : vector<32x512xf32>
    %c0_7 = arith.constant 0 : index
    %c0_8 = arith.constant 0 : index
    %10 = vector.load %arg6[%c0_7, %c0_8] : memref<1x128xf32, #tpu.memory_space<vmem>>, vector<1x128xf32>
    %11 = vector.shape_cast %10 : vector<1x128xf32> to vector<1x128xf32>
    %12 = vector.broadcast %11 : vector<1x128xf32> to vector<8x128xf32>
    %c0_9 = arith.constant 0 : index
    %c0_10 = arith.constant 0 : index
    %13 = vector.load %arg12[%c0_9, %c0_10] : memref<8x128xf32, #tpu.memory_space<vmem>>, vector<8x128xf32>
    %c0_11 = arith.constant 0 : index
    %c0_12 = arith.constant 0 : index
    %14 = vector.load %arg13[%c0_11, %c0_12] : memref<8x128xf32, #tpu.memory_space<vmem>>, vector<8x128xf32>
    %15 = vector.extract_strided_slice %9 {offsets = [0, 0], sizes = [8, 512], strides = [1, 1]} : vector<32x512xf32> to vector<8x512xf32>
    %c0_13 = arith.constant 0 : index
    %c0_14 = arith.constant 0 : index
    %16 = vector.load %arg3[%c0_13, %c0_14] : memref<128x512xf32, #tpu.memory_space<vmem>>, vector<128x512xf32>
    %cst_15 = arith.constant dense<0.000000e+00> : vector<8x512xf32>
    %17 = tpu.matmul %13, %16, %cst_15 {dimension_numbers = #tpu.dot_dimension_numbers<[1], [0], [0], [1], [0, 0, 1, 1], [], []>} : vector<8x128xf32>, vector<128x512xf32>, vector<8x512xf32> -> vector<8x512xf32>
    %c0_16 = arith.constant 0 : index
    %c0_17 = arith.constant 0 : index
    %18 = vector.load %arg4[%c0_16, %c0_17] : memref<128x384xf32, #tpu.memory_space<vmem>>, vector<128x384xf32>
    %cst_18 = arith.constant dense<0.000000e+00> : vector<8x384xf32>
    %19 = tpu.matmul %14, %18, %cst_18 {dimension_numbers = #tpu.dot_dimension_numbers<[1], [0], [0], [1], [0, 0, 1, 1], [], []>} : vector<8x128xf32>, vector<128x384xf32>, vector<8x384xf32> -> vector<8x384xf32>
    %20 = vector.extract_strided_slice %15 {offsets = [0, 0], sizes = [8, 384], strides = [1, 1]} : vector<8x512xf32> to vector<8x384xf32>
    %21 = vector.extract_strided_slice %17 {offsets = [0, 0], sizes = [8, 384], strides = [1, 1]} : vector<8x512xf32> to vector<8x384xf32>
    %22 = arith.addf %20, %21 : vector<8x384xf32>
    %23 = arith.addf %22, %19 : vector<8x384xf32>
    %24 = arith.negf %23 : vector<8x384xf32>
    %25 = math.exp %24 : vector<8x384xf32>
    %cst_19 = arith.constant 1.000000e+00 : f32
    %26 = vector.broadcast %cst_19 : f32 to vector<8x384xf32>
    %27 = arith.addf %26, %25 : vector<8x384xf32>
    %28 = arith.divf %26, %27 : vector<8x384xf32>
    %29 = vector.extract_strided_slice %28 {offsets = [0, 0], sizes = [8, 128], strides = [1, 1]} : vector<8x384xf32> to vector<8x128xf32>
    %30 = vector.extract_strided_slice %28 {offsets = [0, 128], sizes = [8, 128], strides = [1, 1]} : vector<8x384xf32> to vector<8x128xf32>
    %31 = vector.extract_strided_slice %28 {offsets = [0, 256], sizes = [8, 128], strides = [1, 1]} : vector<8x384xf32> to vector<8x128xf32>
    %32 = vector.extract_strided_slice %17 {offsets = [0, 384], sizes = [8, 128], strides = [1, 1]} : vector<8x512xf32> to vector<8x128xf32>
    %33 = arith.addf %32, %12 : vector<8x128xf32>
    %34 = math.tanh %33 : vector<8x128xf32>
    %35 = arith.mulf %30, %14 : vector<8x128xf32>
    %36 = arith.mulf %29, %34 : vector<8x128xf32>
    %37 = arith.addf %35, %36 : vector<8x128xf32>
    %38 = math.tanh %37 : vector<8x128xf32>
    %39 = vector.extract_strided_slice %15 {offsets = [0, 384], sizes = [8, 128], strides = [1, 1]} : vector<8x512xf32> to vector<8x128xf32>
    %40 = arith.addf %38, %39 : vector<8x128xf32>
    %41 = arith.mulf %31, %40 : vector<8x128xf32>
    %c0_20 = arith.constant 0 : index
    %c0_21 = arith.constant 0 : index
    %c0_22 = arith.constant 0 : index
    %42 = vector.load %arg9[%c0_20, %c0_21, %c0_22] : memref<4x8x128xf32, #tpu.memory_space<vmem>>, vector<1x8x128xf32>
    %43 = vector.shape_cast %42 : vector<1x8x128xf32> to vector<8x128xf32>
    %44 = vector.shape_cast %41 : vector<8x128xf32> to vector<1x8x128xf32>
    tpu.vector_store %arg9[%c0_20, %c0_21, %c0_22], %44 {strides = array<i32>} : memref<4x8x128xf32, #tpu.memory_space<vmem>>, vector<1x8x128xf32>,
    %45 = vector.extract_strided_slice %9 {offsets = [8, 0], sizes = [8, 512], strides = [1, 1]} : vector<32x512xf32> to vector<8x512xf32>
    %c0_23 = arith.constant 0 : index
    %c0_24 = arith.constant 0 : index
    %46 = vector.load %arg3[%c0_23, %c0_24] : memref<128x512xf32, #tpu.memory_space<vmem>>, vector<128x512xf32>
    %cst_25 = arith.constant dense<0.000000e+00> : vector<8x512xf32>
    %47 = tpu.matmul %41, %46, %cst_25 {dimension_numbers = #tpu.dot_dimension_numbers<[1], [0], [0], [1], [0, 0, 1, 1], [], []>} : vector<8x128xf32>, vector<128x512xf32>, vector<8x512xf32> -> vector<8x512xf32>
    %c0_26 = arith.constant 0 : index
    %c0_27 = arith.constant 0 : index
    %48 = vector.load %arg4[%c0_26, %c0_27] : memref<128x384xf32, #tpu.memory_space<vmem>>, vector<128x384xf32>
    %cst_28 = arith.constant dense<0.000000e+00> : vector<8x384xf32>
    %49 = tpu.matmul %37, %48, %cst_28 {dimension_numbers = #tpu.dot_dimension_numbers<[1], [0], [0], [1], [0, 0, 1, 1], [], []>} : vector<8x128xf32>, vector<128x384xf32>, vector<8x384xf32> -> vector<8x384xf32>
    %50 = vector.extract_strided_slice %45 {offsets = [0, 0], sizes = [8, 384], strides = [1, 1]} : vector<8x512xf32> to vector<8x384xf32>
    %51 = vector.extract_strided_slice %47 {offsets = [0, 0], sizes = [8, 384], strides = [1, 1]} : vector<8x512xf32> to vector<8x384xf32>
    %52 = arith.addf %50, %51 : vector<8x384xf32>
    %53 = arith.addf %52, %49 : vector<8x384xf32>
    %54 = arith.negf %53 : vector<8x384xf32>
    %55 = math.exp %54 : vector<8x384xf32>
    %cst_29 = arith.constant 1.000000e+00 : f32
    %56 = vector.broadcast %cst_29 : f32 to vector<8x384xf32>
    %57 = arith.addf %56, %55 : vector<8x384xf32>
    %58 = arith.divf %56, %57 : vector<8x384xf32>
    %59 = vector.extract_strided_slice %58 {offsets = [0, 0], sizes = [8, 128], strides = [1, 1]} : vector<8x384xf32> to vector<8x128xf32>
    %60 = vector.extract_strided_slice %58 {offsets = [0, 128], sizes = [8, 128], strides = [1, 1]} : vector<8x384xf32> to vector<8x128xf32>
    %61 = vector.extract_strided_slice %58 {offsets = [0, 256], sizes = [8, 128], strides = [1, 1]} : vector<8x384xf32> to vector<8x128xf32>
    %62 = vector.extract_strided_slice %47 {offsets = [0, 384], sizes = [8, 128], strides = [1, 1]} : vector<8x512xf32> to vector<8x128xf32>
    %63 = arith.addf %62, %12 : vector<8x128xf32>
    %64 = math.tanh %63 : vector<8x128xf32>
    %65 = arith.mulf %60, %37 : vector<8x128xf32>
    %66 = arith.mulf %59, %64 : vector<8x128xf32>
    %67 = arith.addf %65, %66 : vector<8x128xf32>
    %68 = math.tanh %67 : vector<8x128xf32>
    %69 = vector.extract_strided_slice %45 {offsets = [0, 384], sizes = [8, 128], strides = [1, 1]} : vector<8x512xf32> to vector<8x128xf32>
    %70 = arith.addf %68, %69 : vector<8x128xf32>
    %71 = arith.mulf %61, %70 : vector<8x128xf32>
    %c1 = arith.constant 1 : index
    %c0_30 = arith.constant 0 : index
    %c0_31 = arith.constant 0 : index
    %72 = vector.load %arg9[%c1, %c0_30, %c0_31] : memref<4x8x128xf32, #tpu.memory_space<vmem>>, vector<1x8x128xf32>
    %73 = vector.shape_cast %72 : vector<1x8x128xf32> to vector<8x128xf32>
    %74 = vector.shape_cast %71 : vector<8x128xf32> to vector<1x8x128xf32>
    tpu.vector_store %arg9[%c1, %c0_30, %c0_31], %74 {strides = array<i32>} : memref<4x8x128xf32, #tpu.memory_space<vmem>>, vector<1x8x128xf32>,
    %75 = vector.extract_strided_slice %9 {offsets = [16, 0], sizes = [8, 512], strides = [1, 1]} : vector<32x512xf32> to vector<8x512xf32>
    %c0_32 = arith.constant 0 : index
    %c0_33 = arith.constant 0 : index
    %76 = vector.load %arg3[%c0_32, %c0_33] : memref<128x512xf32, #tpu.memory_space<vmem>>, vector<128x512xf32>
    %cst_34 = arith.constant dense<0.000000e+00> : vector<8x512xf32>
    %77 = tpu.matmul %71, %76, %cst_34 {dimension_numbers = #tpu.dot_dimension_numbers<[1], [0], [0], [1], [0, 0, 1, 1], [], []>} : vector<8x128xf32>, vector<128x512xf32>, vector<8x512xf32> -> vector<8x512xf32>
    %c0_35 = arith.constant 0 : index
    %c0_36 = arith.constant 0 : index
    %78 = vector.load %arg4[%c0_35, %c0_36] : memref<128x384xf32, #tpu.memory_space<vmem>>, vector<128x384xf32>
    %cst_37 = arith.constant dense<0.000000e+00> : vector<8x384xf32>
    %79 = tpu.matmul %67, %78, %cst_37 {dimension_numbers = #tpu.dot_dimension_numbers<[1], [0], [0], [1], [0, 0, 1, 1], [], []>} : vector<8x128xf32>, vector<128x384xf32>, vector<8x384xf32> -> vector<8x384xf32>
    %80 = vector.extract_strided_slice %75 {offsets = [0, 0], sizes = [8, 384], strides = [1, 1]} : vector<8x512xf32> to vector<8x384xf32>
    %81 = vector.extract_strided_slice %77 {offsets = [0, 0], sizes = [8, 384], strides = [1, 1]} : vector<8x512xf32> to vector<8x384xf32>
    %82 = arith.addf %80, %81 : vector<8x384xf32>
    %83 = arith.addf %82, %79 : vector<8x384xf32>
    %84 = arith.negf %83 : vector<8x384xf32>
    %85 = math.exp %84 : vector<8x384xf32>
    %cst_38 = arith.constant 1.000000e+00 : f32
    %86 = vector.broadcast %cst_38 : f32 to vector<8x384xf32>
    %87 = arith.addf %86, %85 : vector<8x384xf32>
    %88 = arith.divf %86, %87 : vector<8x384xf32>
    %89 = vector.extract_strided_slice %88 {offsets = [0, 0], sizes = [8, 128], strides = [1, 1]} : vector<8x384xf32> to vector<8x128xf32>
    %90 = vector.extract_strided_slice %88 {offsets = [0, 128], sizes = [8, 128], strides = [1, 1]} : vector<8x384xf32> to vector<8x128xf32>
    %91 = vector.extract_strided_slice %88 {offsets = [0, 256], sizes = [8, 128], strides = [1, 1]} : vector<8x384xf32> to vector<8x128xf32>
    %92 = vector.extract_strided_slice %77 {offsets = [0, 384], sizes = [8, 128], strides = [1, 1]} : vector<8x512xf32> to vector<8x128xf32>
    %93 = arith.addf %92, %12 : vector<8x128xf32>
    %94 = math.tanh %93 : vector<8x128xf32>
    %95 = arith.mulf %90, %67 : vector<8x128xf32>
    %96 = arith.mulf %89, %94 : vector<8x128xf32>
    %97 = arith.addf %95, %96 : vector<8x128xf32>
    %98 = math.tanh %97 : vector<8x128xf32>
    %99 = vector.extract_strided_slice %75 {offsets = [0, 384], sizes = [8, 128], strides = [1, 1]} : vector<8x512xf32> to vector<8x128xf32>
    %100 = arith.addf %98, %99 : vector<8x128xf32>
    %101 = arith.mulf %91, %100 : vector<8x128xf32>
    %c2 = arith.constant 2 : index
    %c0_39 = arith.constant 0 : index
    %c0_40 = arith.constant 0 : index
    %102 = vector.load %arg9[%c2, %c0_39, %c0_40] : memref<4x8x128xf32, #tpu.memory_space<vmem>>, vector<1x8x128xf32>
    %103 = vector.shape_cast %102 : vector<1x8x128xf32> to vector<8x128xf32>
    %104 = vector.shape_cast %101 : vector<8x128xf32> to vector<1x8x128xf32>
    tpu.vector_store %arg9[%c2, %c0_39, %c0_40], %104 {strides = array<i32>} : memref<4x8x128xf32, #tpu.memory_space<vmem>>, vector<1x8x128xf32>,
    %105 = vector.extract_strided_slice %9 {offsets = [24, 0], sizes = [8, 512], strides = [1, 1]} : vector<32x512xf32> to vector<8x512xf32>
    %c0_41 = arith.constant 0 : index
    %c0_42 = arith.constant 0 : index
    %106 = vector.load %arg3[%c0_41, %c0_42] : memref<128x512xf32, #tpu.memory_space<vmem>>, vector<128x512xf32>
    %cst_43 = arith.constant dense<0.000000e+00> : vector<8x512xf32>
    %107 = tpu.matmul %101, %106, %cst_43 {dimension_numbers = #tpu.dot_dimension_numbers<[1], [0], [0], [1], [0, 0, 1, 1], [], []>} : vector<8x128xf32>, vector<128x512xf32>, vector<8x512xf32> -> vector<8x512xf32>
    %c0_44 = arith.constant 0 : index
    %c0_45 = arith.constant 0 : index
    %108 = vector.load %arg4[%c0_44, %c0_45] : memref<128x384xf32, #tpu.memory_space<vmem>>, vector<128x384xf32>
    %cst_46 = arith.constant dense<0.000000e+00> : vector<8x384xf32>
    %109 = tpu.matmul %97, %108, %cst_46 {dimension_numbers = #tpu.dot_dimension_numbers<[1], [0], [0], [1], [0, 0, 1, 1], [], []>} : vector<8x128xf32>, vector<128x384xf32>, vector<8x384xf32> -> vector<8x384xf32>
    %110 = vector.extract_strided_slice %105 {offsets = [0, 0], sizes = [8, 384], strides = [1, 1]} : vector<8x512xf32> to vector<8x384xf32>
    %111 = vector.extract_strided_slice %107 {offsets = [0, 0], sizes = [8, 384], strides = [1, 1]} : vector<8x512xf32> to vector<8x384xf32>
    %112 = arith.addf %110, %111 : vector<8x384xf32>
    %113 = arith.addf %112, %109 : vector<8x384xf32>
    %114 = arith.negf %113 : vector<8x384xf32>
    %115 = math.exp %114 : vector<8x384xf32>
    %cst_47 = arith.constant 1.000000e+00 : f32
    %116 = vector.broadcast %cst_47 : f32 to vector<8x384xf32>
    %117 = arith.addf %116, %115 : vector<8x384xf32>
    %118 = arith.divf %116, %117 : vector<8x384xf32>
    %119 = vector.extract_strided_slice %118 {offsets = [0, 0], sizes = [8, 128], strides = [1, 1]} : vector<8x384xf32> to vector<8x128xf32>
    %120 = vector.extract_strided_slice %118 {offsets = [0, 128], sizes = [8, 128], strides = [1, 1]} : vector<8x384xf32> to vector<8x128xf32>
    %121 = vector.extract_strided_slice %118 {offsets = [0, 256], sizes = [8, 128], strides = [1, 1]} : vector<8x384xf32> to vector<8x128xf32>
    %122 = vector.extract_strided_slice %107 {offsets = [0, 384], sizes = [8, 128], strides = [1, 1]} : vector<8x512xf32> to vector<8x128xf32>
    %123 = arith.addf %122, %12 : vector<8x128xf32>
    %124 = math.tanh %123 : vector<8x128xf32>
    %125 = arith.mulf %120, %97 : vector<8x128xf32>
    %126 = arith.mulf %119, %124 : vector<8x128xf32>
    %127 = arith.addf %125, %126 : vector<8x128xf32>
    %128 = math.tanh %127 : vector<8x128xf32>
    %129 = vector.extract_strided_slice %105 {offsets = [0, 384], sizes = [8, 128], strides = [1, 1]} : vector<8x512xf32> to vector<8x128xf32>
    %130 = arith.addf %128, %129 : vector<8x128xf32>
    %131 = arith.mulf %121, %130 : vector<8x128xf32>
    %c3 = arith.constant 3 : index
    %c0_48 = arith.constant 0 : index
    %c0_49 = arith.constant 0 : index
    %132 = vector.load %arg9[%c3, %c0_48, %c0_49] : memref<4x8x128xf32, #tpu.memory_space<vmem>>, vector<1x8x128xf32>
    %133 = vector.shape_cast %132 : vector<1x8x128xf32> to vector<8x128xf32>
    %134 = vector.shape_cast %131 : vector<8x128xf32> to vector<1x8x128xf32>
    tpu.vector_store %arg9[%c3, %c0_48, %c0_49], %134 {strides = array<i32>} : memref<4x8x128xf32, #tpu.memory_space<vmem>>, vector<1x8x128xf32>,
    %c0_50 = arith.constant 0 : index
    %c0_51 = arith.constant 0 : index
    %135 = vector.load %arg12[%c0_50, %c0_51] : memref<8x128xf32, #tpu.memory_space<vmem>>, vector<8x128xf32>
    tpu.vector_store %arg12[%c0_50, %c0_51], %131 {strides = array<i32>} : memref<8x128xf32, #tpu.memory_space<vmem>>, vector<8x128xf32>,
    %c0_52 = arith.constant 0 : index
    %c0_53 = arith.constant 0 : index
    %136 = vector.load %arg13[%c0_52, %c0_53] : memref<8x128xf32, #tpu.memory_space<vmem>>, vector<8x128xf32>
    tpu.vector_store %arg13[%c0_52, %c0_53], %127 {strides = array<i32>} : memref<8x128xf32, #tpu.memory_space<vmem>>, vector<8x128xf32>,
    %c1_i32 = arith.constant 1 : i32
    %137 = arith.cmpi eq, %arg0, %c1_i32 : i32
    %138 = arith.extui %137 : i1 to i32
    %c0_i32_54 = arith.constant 0 : i32
    %139 = arith.cmpi ne, %138, %c0_i32_54 : i32
    scf.if %139 {
      %c0_55 = arith.constant 0 : index
      %c0_56 = arith.constant 0 : index
      %140 = vector.load %arg10[%c0_55, %c0_56] : memref<8x128xf32, #tpu.memory_space<vmem>>, vector<8x128xf32>
      tpu.vector_store %arg10[%c0_55, %c0_56], %131 {strides = array<i32>} : memref<8x128xf32, #tpu.memory_space<vmem>>, vector<8x128xf32>,
      %c0_57 = arith.constant 0 : index
      %c0_58 = arith.constant 0 : index
      %141 = vector.load %arg11[%c0_57, %c0_58] : memref<8x128xf32, #tpu.memory_space<vmem>>, vector<8x128xf32>
      tpu.vector_store %arg11[%c0_57, %c0_58], %127 {strides = array<i32>} : memref<8x128xf32, #tpu.memory_space<vmem>>, vector<8x128xf32>,
    } else {
    }
    return
  }
  func.func @transform_0(%arg0: i32) -> (i32, i32, i32) {
    %c0_i32 = arith.constant 0 : i32
    %c0_i32_0 = arith.constant 0 : i32
    %c0_i32_1 = arith.constant 0 : i32
    return %arg0, %c0_i32, %c0_i32_0 : i32, i32, i32
  }
  func.func @transform_1(%arg0: i32) -> (i32, i32) {
    %c0_i32 = arith.constant 0 : i32
    %c0_i32_0 = arith.constant 0 : i32
    %c0_i32_1 = arith.constant 0 : i32
    return %c0_i32, %c0_i32_0 : i32, i32
  }
  func.func @transform_2(%arg0: i32) -> (i32, i32) {
    %c0_i32 = arith.constant 0 : i32
    %c0_i32_0 = arith.constant 0 : i32
    %c0_i32_1 = arith.constant 0 : i32
    return %c0_i32, %c0_i32_0 : i32, i32
  }
  func.func @transform_3(%arg0: i32) -> (i32, i32) {
    %c0_i32 = arith.constant 0 : i32
    %c0_i32_0 = arith.constant 0 : i32
    %c0_i32_1 = arith.constant 0 : i32
    return %c0_i32, %c0_i32_0 : i32, i32
  }
  func.func @transform_4(%arg0: i32) -> (i32, i32) {
    %c0_i32 = arith.constant 0 : i32
    %c0_i32_0 = arith.constant 0 : i32
    %c0_i32_1 = arith.constant 0 : i32
    return %c0_i32, %c0_i32_0 : i32, i32
  }
  func.func @transform_5(%arg0: i32) -> (i32, i32) {
    %c0_i32 = arith.constant 0 : i32
    %c0_i32_0 = arith.constant 0 : i32
    %c0_i32_1 = arith.constant 0 : i32
    return %c0_i32, %c0_i32_0 : i32, i32
  }
  func.func @transform_6(%arg0: i32) -> (i32, i32) {
    %c0_i32 = arith.constant 0 : i32
    %c0_i32_0 = arith.constant 0 : i32
    %c0_i32_1 = arith.constant 0 : i32
    return %c0_i32, %c0_i32_0 : i32, i32
  }
  func.func @transform_7(%arg0: i32) -> (i32, i32) {
    %c0_i32 = arith.constant 0 : i32
    %c0_i32_0 = arith.constant 0 : i32
    %c0_i32_1 = arith.constant 0 : i32
    return %c0_i32, %c0_i32_0 : i32, i32
  }
  func.func @transform_8(%arg0: i32) -> (i32, i32, i32) {
    %c0_i32 = arith.constant 0 : i32
    %c0_i32_0 = arith.constant 0 : i32
    %c0_i32_1 = arith.constant 0 : i32
    return %arg0, %c0_i32, %c0_i32_0 : i32, i32, i32
  }
  func.func @transform_9(%arg0: i32) -> (i32, i32) {
    %c0_i32 = arith.constant 0 : i32
    %c0_i32_0 = arith.constant 0 : i32
    %c0_i32_1 = arith.constant 0 : i32
    return %c0_i32, %c0_i32_0 : i32, i32
  }
  func.func @transform_10(%arg0: i32) -> (i32, i32) {
    %c0_i32 = arith.constant 0 : i32
    %c0_i32_0 = arith.constant 0 : i32
    %c0_i32_1 = arith.constant 0 : i32
    return %c0_i32, %c0_i32_0 : i32, i32
  }
}

module attributes {stable_mosaic.version = 11 : i64} {
  func.func @_res_lstm_kernel(%arg0: i32, %arg1: memref<1x32x16xf32, #tpu.memory_space<vmem>>, %arg2: memref<16x512xf32, #tpu.memory_space<vmem>>, %arg3: memref<128x512xf32, #tpu.memory_space<vmem>>, %arg4: memref<128x384xf32, #tpu.memory_space<vmem>>, %arg5: memref<1x512xf32, #tpu.memory_space<vmem>>, %arg6: memref<1x128xf32, #tpu.memory_space<vmem>>, %arg7: memref<8x128xf32, #tpu.memory_space<vmem>>, %arg8: memref<8x128xf32, #tpu.memory_space<vmem>>, %arg9: memref<4x8x128xf32, #tpu.memory_space<vmem>>, %arg10: memref<8x128xf32, #tpu.memory_space<vmem>>, %arg11: memref<8x128xf32, #tpu.memory_space<vmem>>, %arg12: memref<8x128xf32, #tpu.memory_space<vmem>>, %arg13: memref<8x128xf32, #tpu.memory_space<vmem>>) attributes {dimension_semantics = [#tpu.dimension_semantics<arbitrary>], iteration_bounds = array<i64: 2>, scalar_prefetch = 0 : i64, scratch_operands = 2 : i64, tpu.core_type = #tpu.core_type<tc>, window_params = [{transform_indices = @transform_0, window_bounds = array<i64: 1, 32, 16>}, {pipeline_mode = #tpu.pipeline_mode<synchronous>, transform_indices = @transform_1, window_bounds = array<i64: 16, 512>}, {pipeline_mode = #tpu.pipeline_mode<synchronous>, transform_indices = @transform_2, window_bounds = array<i64: 128, 512>}, {pipeline_mode = #tpu.pipeline_mode<synchronous>, transform_indices = @transform_3, window_bounds = array<i64: 128, 384>}, {pipeline_mode = #tpu.pipeline_mode<synchronous>, transform_indices = @transform_4, window_bounds = array<i64: 1, 512>}, {pipeline_mode = #tpu.pipeline_mode<synchronous>, transform_indices = @transform_5, window_bounds = array<i64: 1, 128>}, {pipeline_mode = #tpu.pipeline_mode<synchronous>, transform_indices = @transform_6, window_bounds = array<i64: 8, 128>}, {pipeline_mode = #tpu.pipeline_mode<synchronous>, transform_indices = @transform_7, window_bounds = array<i64: 8, 128>}, {transform_indices = @transform_8, window_bounds = array<i64: 4, 8, 128>}, {pipeline_mode = #tpu.pipeline_mode<synchronous>, transform_indices = @transform_9, window_bounds = array<i64: 8, 128>}, {pipeline_mode = #tpu.pipeline_mode<synchronous>, transform_indices = @transform_10, window_bounds = array<i64: 8, 128>}]} {
    %c0_i32 = arith.constant 0 : i32
    %0 = arith.cmpi eq, %arg0, %c0_i32 : i32
    %1 = arith.extui %0 : i1 to i32
    %c0_i32_0 = arith.constant 0 : i32
    %2 = arith.cmpi ne, %1, %c0_i32_0 : i32
    scf.if %2 {
      %c0_55 = arith.constant 0 : index
      %c0_56 = arith.constant 0 : index
      %140 = vector.load %arg7[%c0_55, %c0_56] : memref<8x128xf32, #tpu.memory_space<vmem>>, vector<8x128xf32>
      %c0_57 = arith.constant 0 : index
      %c0_58 = arith.constant 0 : index
      %141 = vector.load %arg12[%c0_57, %c0_58] : memref<8x128xf32, #tpu.memory_space<vmem>>, vector<8x128xf32>
      tpu.vector_store %arg12[%c0_57, %c0_58], %140 {strides = array<i32>} : memref<8x128xf32, #tpu.memory_space<vmem>>, vector<8x128xf32>,
      %c0_59 = arith.constant 0 : index
      %c0_60 = arith.constant 0 : index
      %142 = vector.load %arg8[%c0_59, %c0_60] : memref<8x128xf32, #tpu.memory_space<vmem>>, vector<8x128xf32>
      %c0_61 = arith.constant 0 : index
      %c0_62 = arith.constant 0 : index
      %143 = vector.load %arg13[%c0_61, %c0_62] : memref<8x128xf32, #tpu.memory_space<vmem>>, vector<8x128xf32>
      tpu.vector_store %arg13[%c0_61, %c0_62], %142 {strides = array<i32>} : memref<8x128xf32, #tpu.memory_space<vmem>>, vector<8x128xf32>,
    } else {
    }
    %c0 = arith.constant 0 : index
    %c0_1 = arith.constant 0 : index
    %c0_2 = arith.constant 0 : index
    %3 = vector.load %arg1[%c0, %c0_1, %c0_2] : memref<1x32x16xf32, #tpu.memory_space<vmem>>, vector<1x32x16xf32>
    %4 = vector.shape_cast %3 : vector<1x32x16xf32> to vector<32x16xf32>
    %c0_3 = arith.constant 0 : index
    %c0_4 = arith.constant 0 : index
    %5 = vector.load %arg2[%c0_3, %c0_4] : memref<16x512xf32, #tpu.memory_space<vmem>>, vector<16x512xf32>
    %cst = arith.constant dense<0.000000e+00> : vector<32x512xf32>
    %6 = tpu.matmul %4, %5, %cst {dimension_numbers = #tpu.dot_dimension_numbers<[1], [0], [0], [1], [0, 0, 1, 1], [], []>} : vector<32x16xf32>, vector<16x512xf32>, vector<32x512xf32> -> vector<32x512xf32>
    %c0_5 = arith.constant 0 : index
    %c0_6 = arith.constant 0 : index
    %7 = vector.load %arg5[%c0_5, %c0_6] : memref<1x512xf32, #tpu.memory_space<vmem>>, vector<1x512xf32>
    %8 = vector.broadcast %7 : vector<1x512xf32> to vector<32x512xf32>
    %9 = arith.addf %6, %8 : vector<32x512xf32>
    %c0_7 = arith.constant 0 : index
    %c0_8 = arith.constant 0 : index
    %10 = vector.load %arg6[%c0_7, %c0_8] : memref<1x128xf32, #tpu.memory_space<vmem>>, vector<1x128xf32>
    %11 = vector.shape_cast %10 : vector<1x128xf32> to vector<1x128xf32>
    %12 = vector.broadcast %11 : vector<1x128xf32> to vector<8x128xf32>
    %c0_9 = arith.constant 0 : index
    %c0_10 = arith.constant 0 : index
    %13 = vector.load %arg12[%c0_9, %c0_10] : memref<8x128xf32, #tpu.memory_space<vmem>>, vector<8x128xf32>
    %c0_11 = arith.constant 0 : index
    %c0_12 = arith.constant 0 : index
    %14 = vector.load %arg13[%c0_11, %c0_12] : memref<8x128xf32, #tpu.memory_space<vmem>>, vector<8x128xf32>
    %15 = vector.extract_strided_slice %9 {offsets = [0, 0], sizes = [8, 512], strides = [1, 1]} : vector<32x512xf32> to vector<8x512xf32>
    %c0_13 = arith.constant 0 : index
    %c0_14 = arith.constant 0 : index
    %16 = vector.load %arg3[%c0_13, %c0_14] : memref<128x512xf32, #tpu.memory_space<vmem>>, vector<128x512xf32>
    %cst_15 = arith.constant dense<0.000000e+00> : vector<8x512xf32>
    %17 = tpu.matmul %13, %16, %cst_15 {dimension_numbers = #tpu.dot_dimension_numbers<[1], [0], [0], [1], [0, 0, 1, 1], [], []>} : vector<8x128xf32>, vector<128x512xf32>, vector<8x512xf32> -> vector<8x512xf32>
    %c0_16 = arith.constant 0 : index
    %c0_17 = arith.constant 0 : index
    %18 = vector.load %arg4[%c0_16, %c0_17] : memref<128x384xf32, #tpu.memory_space<vmem>>, vector<128x384xf32>
    %cst_18 = arith.constant dense<0.000000e+00> : vector<8x384xf32>
    %19 = tpu.matmul %14, %18, %cst_18 {dimension_numbers = #tpu.dot_dimension_numbers<[1], [0], [0], [1], [0, 0, 1, 1], [], []>} : vector<8x128xf32>, vector<128x384xf32>, vector<8x384xf32> -> vector<8x384xf32>
    %20 = vector.extract_strided_slice %15 {offsets = [0, 0], sizes = [8, 384], strides = [1, 1]} : vector<8x512xf32> to vector<8x384xf32>
    %21 = vector.extract_strided_slice %17 {offsets = [0, 0], sizes = [8, 384], strides = [1, 1]} : vector<8x512xf32> to vector<8x384xf32>
    %22 = arith.addf %20, %21 : vector<8x384xf32>
    %23 = arith.addf %22, %19 : vector<8x384xf32>
    %24 = arith.negf %23 : vector<8x384xf32>
    %25 = math.exp %24 : vector<8x384xf32>
    %cst_19 = arith.constant 1.000000e+00 : f32
    %26 = vector.broadcast %cst_19 : f32 to vector<8x384xf32>
    %27 = arith.addf %26, %25 : vector<8x384xf32>
    %28 = arith.divf %26, %27 : vector<8x384xf32>
    %29 = vector.extract_strided_slice %28 {offsets = [0, 0], sizes = [8, 128], strides = [1, 1]} : vector<8x384xf32> to vector<8x128xf32>
    %30 = vector.extract_strided_slice %28 {offsets = [0, 128], sizes = [8, 128], strides = [1, 1]} : vector<8x384xf32> to vector<8x128xf32>
    %31 = vector.extract_strided_slice %28 {offsets = [0, 256], sizes = [8, 128], strides = [1, 1]} : vector<8x384xf32> to vector<8x128xf32>
    %32 = vector.extract_strided_slice %17 {offsets = [0, 384], sizes = [8, 128], strides = [1, 1]} : vector<8x512xf32> to vector<8x128xf32>
    %33 = arith.addf %32, %12 : vector<8x128xf32>
    %34 = math.tanh %33 : vector<8x128xf32>
    %35 = arith.mulf %30, %14 : vector<8x128xf32>
    %36 = arith.mulf %29, %34 : vector<8x128xf32>
    %37 = arith.addf %35, %36 : vector<8x128xf32>
    %38 = math.tanh %37 : vector<8x128xf32>
    %39 = vector.extract_strided_slice %15 {offsets = [0, 384], sizes = [8, 128], strides = [1, 1]} : vector<8x512xf32> to vector<8x128xf32>
    %40 = arith.addf %38, %39 : vector<8x128xf32>
    %41 = arith.mulf %31, %40 : vector<8x128xf32>
    %c0_20 = arith.constant 0 : index
    %c0_21 = arith.constant 0 : index
    %c0_22 = arith.constant 0 : index
    %42 = vector.load %arg9[%c0_20, %c0_21, %c0_22] : memref<4x8x128xf32, #tpu.memory_space<vmem>>, vector<1x8x128xf32>
    %43 = vector.shape_cast %42 : vector<1x8x128xf32> to vector<8x128xf32>
    %44 = vector.shape_cast %41 : vector<8x128xf32> to vector<1x8x128xf32>
    tpu.vector_store %arg9[%c0_20, %c0_21, %c0_22], %44 {strides = array<i32>} : memref<4x8x128xf32, #tpu.memory_space<vmem>>, vector<1x8x128xf32>,
    %45 = vector.extract_strided_slice %9 {offsets = [8, 0], sizes = [8, 512], strides = [1, 1]} : vector<32x512xf32> to vector<8x512xf32>
    %c0_23 = arith.constant 0 : index
    %c0_24 = arith.constant 0 : index
    %46 = vector.load %arg3[%c0_23, %c0_24] : memref<128x512xf32, #tpu.memory_space<vmem>>, vector<128x512xf32>
    %cst_25 = arith.constant dense<0.000000e+00> : vector<8x512xf32>
    %47 = tpu.matmul %41, %46, %cst_25 {dimension_numbers = #tpu.dot_dimension_numbers<[1], [0], [0], [1], [0, 0, 1, 1], [], []>} : vector<8x128xf32>, vector<128x512xf32>, vector<8x512xf32> -> vector<8x512xf32>
    %c0_26 = arith.constant 0 : index
    %c0_27 = arith.constant 0 : index
    %48 = vector.load %arg4[%c0_26, %c0_27] : memref<128x384xf32, #tpu.memory_space<vmem>>, vector<128x384xf32>
    %cst_28 = arith.constant dense<0.000000e+00> : vector<8x384xf32>
    %49 = tpu.matmul %37, %48, %cst_28 {dimension_numbers = #tpu.dot_dimension_numbers<[1], [0], [0], [1], [0, 0, 1, 1], [], []>} : vector<8x128xf32>, vector<128x384xf32>, vector<8x384xf32> -> vector<8x384xf32>
    %50 = vector.extract_strided_slice %45 {offsets = [0, 0], sizes = [8, 384], strides = [1, 1]} : vector<8x512xf32> to vector<8x384xf32>
    %51 = vector.extract_strided_slice %47 {offsets = [0, 0], sizes = [8, 384], strides = [1, 1]} : vector<8x512xf32> to vector<8x384xf32>
    %52 = arith.addf %50, %51 : vector<8x384xf32>
    %53 = arith.addf %52, %49 : vector<8x384xf32>
    %54 = arith.negf %53 : vector<8x384xf32>
    %55 = math.exp %54 : vector<8x384xf32>
    %cst_29 = arith.constant 1.000000e+00 : f32
    %56 = vector.broadcast %cst_29 : f32 to vector<8x384xf32>
    %57 = arith.addf %56, %55 : vector<8x384xf32>
    %58 = arith.divf %56, %57 : vector<8x384xf32>
    %59 = vector.extract_strided_slice %58 {offsets = [0, 0], sizes = [8, 128], strides = [1, 1]} : vector<8x384xf32> to vector<8x128xf32>
    %60 = vector.extract_strided_slice %58 {offsets = [0, 128], sizes = [8, 128], strides = [1, 1]} : vector<8x384xf32> to vector<8x128xf32>
    %61 = vector.extract_strided_slice %58 {offsets = [0, 256], sizes = [8, 128], strides = [1, 1]} : vector<8x384xf32> to vector<8x128xf32>
    %62 = vector.extract_strided_slice %47 {offsets = [0, 384], sizes = [8, 128], strides = [1, 1]} : vector<8x512xf32> to vector<8x128xf32>
    %63 = arith.addf %62, %12 : vector<8x128xf32>
    %64 = math.tanh %63 : vector<8x128xf32>
    %65 = arith.mulf %60, %37 : vector<8x128xf32>
    %66 = arith.mulf %59, %64 : vector<8x128xf32>
    %67 = arith.addf %65, %66 : vector<8x128xf32>
    %68 = math.tanh %67 : vector<8x128xf32>
    %69 = vector.extract_strided_slice %45 {offsets = [0, 384], sizes = [8, 128], strides = [1, 1]} : vector<8x512xf32> to vector<8x128xf32>
    %70 = arith.addf %68, %69 : vector<8x128xf32>
    %71 = arith.mulf %61, %70 : vector<8x128xf32>
    %c1 = arith.constant 1 : index
    %c0_30 = arith.constant 0 : index
    %c0_31 = arith.constant 0 : index
    %72 = vector.load %arg9[%c1, %c0_30, %c0_31] : memref<4x8x128xf32, #tpu.memory_space<vmem>>, vector<1x8x128xf32>
    %73 = vector.shape_cast %72 : vector<1x8x128xf32> to vector<8x128xf32>
    %74 = vector.shape_cast %71 : vector<8x128xf32> to vector<1x8x128xf32>
    tpu.vector_store %arg9[%c1, %c0_30, %c0_31], %74 {strides = array<i32>} : memref<4x8x128xf32, #tpu.memory_space<vmem>>, vector<1x8x128xf32>,
    %75 = vector.extract_strided_slice %9 {offsets = [16, 0], sizes = [8, 512], strides = [1, 1]} : vector<32x512xf32> to vector<8x512xf32>
    %c0_32 = arith.constant 0 : index
    %c0_33 = arith.constant 0 : index
    %76 = vector.load %arg3[%c0_32, %c0_33] : memref<128x512xf32, #tpu.memory_space<vmem>>, vector<128x512xf32>
    %cst_34 = arith.constant dense<0.000000e+00> : vector<8x512xf32>
    %77 = tpu.matmul %71, %76, %cst_34 {dimension_numbers = #tpu.dot_dimension_numbers<[1], [0], [0], [1], [0, 0, 1, 1], [], []>} : vector<8x128xf32>, vector<128x512xf32>, vector<8x512xf32> -> vector<8x512xf32>
    %c0_35 = arith.constant 0 : index
    %c0_36 = arith.constant 0 : index
    %78 = vector.load %arg4[%c0_35, %c0_36] : memref<128x384xf32, #tpu.memory_space<vmem>>, vector<128x384xf32>
    %cst_37 = arith.constant dense<0.000000e+00> : vector<8x384xf32>
    %79 = tpu.matmul %67, %78, %cst_37 {dimension_numbers = #tpu.dot_dimension_numbers<[1], [0], [0], [1], [0, 0, 1, 1], [], []>} : vector<8x128xf32>, vector<128x384xf32>, vector<8x384xf32> -> vector<8x384xf32>
    %80 = vector.extract_strided_slice %75 {offsets = [0, 0], sizes = [8, 384], strides = [1, 1]} : vector<8x512xf32> to vector<8x384xf32>
    %81 = vector.extract_strided_slice %77 {offsets = [0, 0], sizes = [8, 384], strides = [1, 1]} : vector<8x512xf32> to vector<8x384xf32>
    %82 = arith.addf %80, %81 : vector<8x384xf32>
    %83 = arith.addf %82, %79 : vector<8x384xf32>
    %84 = arith.negf %83 : vector<8x384xf32>
    %85 = math.exp %84 : vector<8x384xf32>
    %cst_38 = arith.constant 1.000000e+00 : f32
    %86 = vector.broadcast %cst_38 : f32 to vector<8x384xf32>
    %87 = arith.addf %86, %85 : vector<8x384xf32>
    %88 = arith.divf %86, %87 : vector<8x384xf32>
    %89 = vector.extract_strided_slice %88 {offsets = [0, 0], sizes = [8, 128], strides = [1, 1]} : vector<8x384xf32> to vector<8x128xf32>
    %90 = vector.extract_strided_slice %88 {offsets = [0, 128], sizes = [8, 128], strides = [1, 1]} : vector<8x384xf32> to vector<8x128xf32>
    %91 = vector.extract_strided_slice %88 {offsets = [0, 256], sizes = [8, 128], strides = [1, 1]} : vector<8x384xf32> to vector<8x128xf32>
    %92 = vector.extract_strided_slice %77 {offsets = [0, 384], sizes = [8, 128], strides = [1, 1]} : vector<8x512xf32> to vector<8x128xf32>
    %93 = arith.addf %92, %12 : vector<8x128xf32>
    %94 = math.tanh %93 : vector<8x128xf32>
    %95 = arith.mulf %90, %67 : vector<8x128xf32>
    %96 = arith.mulf %89, %94 : vector<8x128xf32>
    %97 = arith.addf %95, %96 : vector<8x128xf32>
    %98 = math.tanh %97 : vector<8x128xf32>
    %99 = vector.extract_strided_slice %75 {offsets = [0, 384], sizes = [8, 128], strides = [1, 1]} : vector<8x512xf32> to vector<8x128xf32>
    %100 = arith.addf %98, %99 : vector<8x128xf32>
    %101 = arith.mulf %91, %100 : vector<8x128xf32>
    %c2 = arith.constant 2 : index
    %c0_39 = arith.constant 0 : index
    %c0_40 = arith.constant 0 : index
    %102 = vector.load %arg9[%c2, %c0_39, %c0_40] : memref<4x8x128xf32, #tpu.memory_space<vmem>>, vector<1x8x128xf32>
    %103 = vector.shape_cast %102 : vector<1x8x128xf32> to vector<8x128xf32>
    %104 = vector.shape_cast %101 : vector<8x128xf32> to vector<1x8x128xf32>
    tpu.vector_store %arg9[%c2, %c0_39, %c0_40], %104 {strides = array<i32>} : memref<4x8x128xf32, #tpu.memory_space<vmem>>, vector<1x8x128xf32>,
    %105 = vector.extract_strided_slice %9 {offsets = [24, 0], sizes = [8, 512], strides = [1, 1]} : vector<32x512xf32> to vector<8x512xf32>
    %c0_41 = arith.constant 0 : index
    %c0_42 = arith.constant 0 : index
    %106 = vector.load %arg3[%c0_41, %c0_42] : memref<128x512xf32, #tpu.memory_space<vmem>>, vector<128x512xf32>
    %cst_43 = arith.constant dense<0.000000e+00> : vector<8x512xf32>
    %107 = tpu.matmul %101, %106, %cst_43 {dimension_numbers = #tpu.dot_dimension_numbers<[1], [0], [0], [1], [0, 0, 1, 1], [], []>} : vector<8x128xf32>, vector<128x512xf32>, vector<8x512xf32> -> vector<8x512xf32>
    %c0_44 = arith.constant 0 : index
    %c0_45 = arith.constant 0 : index
    %108 = vector.load %arg4[%c0_44, %c0_45] : memref<128x384xf32, #tpu.memory_space<vmem>>, vector<128x384xf32>
    %cst_46 = arith.constant dense<0.000000e+00> : vector<8x384xf32>
    %109 = tpu.matmul %97, %108, %cst_46 {dimension_numbers = #tpu.dot_dimension_numbers<[1], [0], [0], [1], [0, 0, 1, 1], [], []>} : vector<8x128xf32>, vector<128x384xf32>, vector<8x384xf32> -> vector<8x384xf32>
    %110 = vector.extract_strided_slice %105 {offsets = [0, 0], sizes = [8, 384], strides = [1, 1]} : vector<8x512xf32> to vector<8x384xf32>
    %111 = vector.extract_strided_slice %107 {offsets = [0, 0], sizes = [8, 384], strides = [1, 1]} : vector<8x512xf32> to vector<8x384xf32>
    %112 = arith.addf %110, %111 : vector<8x384xf32>
    %113 = arith.addf %112, %109 : vector<8x384xf32>
    %114 = arith.negf %113 : vector<8x384xf32>
    %115 = math.exp %114 : vector<8x384xf32>
    %cst_47 = arith.constant 1.000000e+00 : f32
    %116 = vector.broadcast %cst_47 : f32 to vector<8x384xf32>
    %117 = arith.addf %116, %115 : vector<8x384xf32>
    %118 = arith.divf %116, %117 : vector<8x384xf32>
    %119 = vector.extract_strided_slice %118 {offsets = [0, 0], sizes = [8, 128], strides = [1, 1]} : vector<8x384xf32> to vector<8x128xf32>
    %120 = vector.extract_strided_slice %118 {offsets = [0, 128], sizes = [8, 128], strides = [1, 1]} : vector<8x384xf32> to vector<8x128xf32>
    %121 = vector.extract_strided_slice %118 {offsets = [0, 256], sizes = [8, 128], strides = [1, 1]} : vector<8x384xf32> to vector<8x128xf32>
    %122 = vector.extract_strided_slice %107 {offsets = [0, 384], sizes = [8, 128], strides = [1, 1]} : vector<8x512xf32> to vector<8x128xf32>
    %123 = arith.addf %122, %12 : vector<8x128xf32>
    %124 = math.tanh %123 : vector<8x128xf32>
    %125 = arith.mulf %120, %97 : vector<8x128xf32>
    %126 = arith.mulf %119, %124 : vector<8x128xf32>
    %127 = arith.addf %125, %126 : vector<8x128xf32>
    %128 = math.tanh %127 : vector<8x128xf32>
    %129 = vector.extract_strided_slice %105 {offsets = [0, 384], sizes = [8, 128], strides = [1, 1]} : vector<8x512xf32> to vector<8x128xf32>
    %130 = arith.addf %128, %129 : vector<8x128xf32>
    %131 = arith.mulf %121, %130 : vector<8x128xf32>
    %c3 = arith.constant 3 : index
    %c0_48 = arith.constant 0 : index
    %c0_49 = arith.constant 0 : index
    %132 = vector.load %arg9[%c3, %c0_48, %c0_49] : memref<4x8x128xf32, #tpu.memory_space<vmem>>, vector<1x8x128xf32>
    %133 = vector.shape_cast %132 : vector<1x8x128xf32> to vector<8x128xf32>
    %134 = vector.shape_cast %131 : vector<8x128xf32> to vector<1x8x128xf32>
    tpu.vector_store %arg9[%c3, %c0_48, %c0_49], %134 {strides = array<i32>} : memref<4x8x128xf32, #tpu.memory_space<vmem>>, vector<1x8x128xf32>,
    %c0_50 = arith.constant 0 : index
    %c0_51 = arith.constant 0 : index
    %135 = vector.load %arg12[%c0_50, %c0_51] : memref<8x128xf32, #tpu.memory_space<vmem>>, vector<8x128xf32>
    tpu.vector_store %arg12[%c0_50, %c0_51], %131 {strides = array<i32>} : memref<8x128xf32, #tpu.memory_space<vmem>>, vector<8x128xf32>,
    %c0_52 = arith.constant 0 : index
    %c0_53 = arith.constant 0 : index
    %136 = vector.load %arg13[%c0_52, %c0_53] : memref<8x128xf32, #tpu.memory_space<vmem>>, vector<8x128xf32>
    tpu.vector_store %arg13[%c0_52, %c0_53], %127 {strides = array<i32>} : memref<8x128xf32, #tpu.memory_space<vmem>>, vector<8x128xf32>,
    %c1_i32 = arith.constant 1 : i32
    %137 = arith.cmpi eq, %arg0, %c1_i32 : i32
    %138 = arith.extui %137 : i1 to i32
    %c0_i32_54 = arith.constant 0 : i32
    %139 = arith.cmpi ne, %138, %c0_i32_54 : i32
    scf.if %139 {
      %c0_55 = arith.constant 0 : index
      %c0_56 = arith.constant 0 : index
      %140 = vector.load %arg10[%c0_55, %c0_56] : memref<8x128xf32, #tpu.memory_space<vmem>>, vector<8x128xf32>
      tpu.vector_store %arg10[%c0_55, %c0_56], %131 {strides = array<i32>} : memref<8x128xf32, #tpu.memory_space<vmem>>, vector<8x128xf32>,
      %c0_57 = arith.constant 0 : index
      %c0_58 = arith.constant 0 : index
      %141 = vector.load %arg11[%c0_57, %c0_58] : memref<8x128xf32, #tpu.memory_space<vmem>>, vector<8x128xf32>
      tpu.vector_store %arg11[%c0_57, %c0_58], %127 {strides = array<i32>} : memref<8x128xf32, #tpu.memory_space<vmem>>, vector<8x128xf32>,
    } else {
    }
    return
  }
  func.func @transform_0(%arg0: i32) -> (i32, i32, i32) {
    %c0_i32 = arith.constant 0 : i32
    %c0_i32_0 = arith.constant 0 : i32
    %c0_i32_1 = arith.constant 0 : i32
    return %arg0, %c0_i32, %c0_i32_0 : i32, i32, i32
  }
  func.func @transform_1(%arg0: i32) -> (i32, i32) {
    %c0_i32 = arith.constant 0 : i32
    %c0_i32_0 = arith.constant 0 : i32
    %c0_i32_1 = arith.constant 0 : i32
    return %c0_i32, %c0_i32_0 : i32, i32
  }
  func.func @transform_2(%arg0: i32) -> (i32, i32) {
    %c0_i32 = arith.constant 0 : i32
    %c0_i32_0 = arith.constant 0 : i32
    %c0_i32_1 = arith.constant 0 : i32
    return %c0_i32, %c0_i32_0 : i32, i32
  }
  func.func @transform_3(%arg0: i32) -> (i32, i32) {
    %c0_i32 = arith.constant 0 : i32
    %c0_i32_0 = arith.constant 0 : i32
    %c0_i32_1 = arith.constant 0 : i32
    return %c0_i32, %c0_i32_0 : i32, i32
  }
  func.func @transform_4(%arg0: i32) -> (i32, i32) {
    %c0_i32 = arith.constant 0 : i32
    %c0_i32_0 = arith.constant 0 : i32
    %c0_i32_1 = arith.constant 0 : i32
    return %c0_i32, %c0_i32_0 : i32, i32
  }
  func.func @transform_5(%arg0: i32) -> (i32, i32) {
    %c0_i32 = arith.constant 0 : i32
    %c0_i32_0 = arith.constant 0 : i32
    %c0_i32_1 = arith.constant 0 : i32
    return %c0_i32, %c0_i32_0 : i32, i32
  }
  func.func @transform_6(%arg0: i32) -> (i32, i32) {
    %c0_i32 = arith.constant 0 : i32
    %c0_i32_0 = arith.constant 0 : i32
    %c0_i32_1 = arith.constant 0 : i32
    return %c0_i32, %c0_i32_0 : i32, i32
  }
  func.func @transform_7(%arg0: i32) -> (i32, i32) {
    %c0_i32 = arith.constant 0 : i32
    %c0_i32_0 = arith.constant 0 : i32
    %c0_i32_1 = arith.constant 0 : i32
    return %c0_i32, %c0_i32_0 : i32, i32
  }
  func.func @transform_8(%arg0: i32) -> (i32, i32, i32) {
    %c0_i32 = arith.constant 0 : i32
    %c0_i32_0 = arith.constant 0 : i32
    %c0_i32_1 = arith.constant 0 : i32
    return %arg0, %c0_i32, %c0_i32_0 : i32, i32, i32
  }
  func.func @transform_9(%arg0: i32) -> (i32, i32) {
    %c0_i32 = arith.constant 0 : i32
    %c0_i32_0 = arith.constant 0 : i32
    %c0_i32_1 = arith.constant 0 : i32
    return %c0_i32, %c0_i32_0 : i32, i32
  }
  func.func @transform_10(%arg0: i32) -> (i32, i32) {
    %c0_i32 = arith.constant 0 : i32
    %c0_i32_0 = arith.constant 0 : i32
    %c0_i32_1 = arith.constant 0 : i32
    return %c0_i32, %c0_i32_0 : i32, i32
  }
}

</mosaic_0001>

<llo_original>
// kernel: tpu_custom_call.1
$region0: #{tpu_custom_call.1}
  #allocation0 [shape = 'u32[]', space=smem, size = 0x4, offset = 0x4, fixed_abs, tag = 'smem constant byte address 0x4 - core index']
  #allocation1 [shape = 'u32[72,128]{1,0:T(1,128)}', space=vmem, size = 0x9000, scoped, tag = 'internal scratch']
  #allocation2 [shape = 'f32[8,128]{1,0:T(8,128)}', space=vmem, size = 0x1000, scoped, tag = 'scratch operand']
  #allocation3 [shape = 'f32[8,128]{1,0:T(8,128)}', space=vmem, size = 0x1000, scoped, tag = 'scratch operand']
  %s0 = inlined_call_operand.vmem [shape: f32[2,32,16], index: 0, kind: input, shape index: {}]
  %s1 = inlined_call_operand.vmem [shape: f32[16,512], index: 1, kind: input, shape index: {}]
  %s2 = inlined_call_operand.hbm [shape: f32[128,512], index: 2, kind: input, shape index: {}]
  %s3 = inlined_call_operand.hbm [shape: f32[128,384], index: 3, kind: input, shape index: {}]
  %s4 = inlined_call_operand.vmem [shape: f32[1,512], index: 4, kind: input, shape index: {}]
  %s5 = inlined_call_operand.vmem [shape: f32[1,128], index: 5, kind: input, shape index: {}]
  %s6 = inlined_call_operand.vmem [shape: f32[8,128], index: 6, kind: input, shape index: {}]
  %s7 = inlined_call_operand.vmem [shape: f32[8,128], index: 7, kind: input, shape index: {}]
  %s8 = inlined_call_operand.hbm [shape: f32[8,8,128], index: 8, kind: output, shape index: {0}]
  %s9 = inlined_call_operand.hbm [shape: f32[8,128], index: 9, kind: output, shape index: {1}]
  %s10 = inlined_call_operand.hbm [shape: f32[8,128], index: 10, kind: output, shape index: {2}]
  %11 = xla_tuple %s8, %s9, %s10
  %s12 = sld [smem:[#allocation0]]
  $region97: #{tpu_custom_call.1} parent=0
    _
  %s14 = ssub.s32 1, %s12
  %s15 = scalar_select 0, %s14, %s12
  $region1: #{tpu_custom_call.1} parent=0
    #allocation4 [shape = 'u8[262144]{0}', space=vmem, size = 0x40000, scoped, tag = 'input window, operand 2, single buffered']
    #allocation5 [shape = 's32[2]{0}', space=sflag, size = 0x8, scoped, tag = 'scoped memory for tpu_custom_call.1']
    #allocation6 [shape = 's32[2]{0}', space=sflag, size = 0x8, scoped, tag = 'scoped memory for tpu_custom_call.1']
    #allocation7 [shape = 'u8[196608]{0}', space=vmem, size = 0x30000, scoped, tag = 'input window, operand 3, single buffered']
    #allocation8 [shape = 's32[1]{0}', space=sflag, size = 0x4, scoped, tag = 'scoped memory for tpu_custom_call.1']
    #allocation9 [shape = 'u8[32768]{0}', space=vmem, size = 0x8000, scoped, tag = 'output window, operand 0']
    #allocation10 [shape = 'u8[4096]{0}', space=vmem, size = 0x1000, scoped, tag = 'output window, operand 1, single buffered']
    #allocation11 [shape = 's32[1]{0}', space=sflag, size = 0x4, scoped, tag = 'scoped memory for tpu_custom_call.1']
    #allocation12 [shape = 'u8[4096]{0}', space=vmem, size = 0x1000, scoped, tag = 'output window, operand 2, single buffered']
    %16 = vsyncpa [#allocation5], 0
    %17 = vsyncpa [#allocation8], 0
    %18 = vsyncpa [#allocation6], 0
    %s19 = scalar_lea.sflag [#allocation6], 1
    %20 = vsyncpa %s19, 0
    %21 = vsyncpa [#allocation11], 0
    loop: start=0, step=1, limit=4
    $region2: #{tpu_custom_call.1} parent=1 // loop_pre_header
      _
    $region3: #{tpu_custom_call.1} parent=1 // loop_header
      %s23 = sphi 0, %s27
      %p24 = scmp.ge.s32.totalorder %s23, 4
      %s33 = sphi 0, %s35
      %s36 = sphi 0, %s33
      %s37 = sphi 0, %s36
      %s53 = sphi 0, %s37
      %s57 = sphi 0, %s57
      %s59 = sphi 0, %s57
      %s60 = sphi 0, %s59
      %s74 = sphi 0, %s60
      %s78 = sphi 0, %s78
      %s80 = sphi 0, %s78
      %s81 = sphi 0, %s80
      %s95 = sphi 0, %s81
      %s99 = sphi 0, %s99
      %s101 = sphi 0, %s99
      %s102 = sphi 0, %s101
      %s116 = sphi 0, %s102
      %s120 = sphi 0, %s120
      %s122 = sphi 0, %s120
      %s123 = sphi 0, %s122
      %s137 = sphi 0, %s123
      %s141 = sphi 0, %s141
      %s143 = sphi 0, %s141
      %s144 = sphi 0, %s143
      %s158 = sphi 0, %s144
      %s162 = sphi 0, %s162
      %s164 = sphi 0, %s162
      %s165 = sphi 0, %s164
      %s179 = sphi 0, %s165
      %s183 = sphi 0, %s183
      %s185 = sphi 0, %s183
      %s186 = sphi 0, %s185
      %s200 = sphi 0, %s186
      %s206 = sphi 0, %s208
      %s209 = sphi 0, %s206
      %s210 = sphi 0, %s209
      %s226 = sphi 0, %s210
      %s230 = sphi 0, %s230
      %s232 = sphi 0, %s230
      %s233 = sphi 0, %s232
      %s247 = sphi 0, %s233
      %s251 = sphi 0, %s251
      %s253 = sphi 0, %s251
      %s254 = sphi 0, %s253
      %s268 = sphi 0, %s254
    $region4: #{tpu_custom_call.1} parent=1 // loop_header_branch
      %26 = sbr.rel (%p24) target = $region8
    $region5: #{tpu_custom_call.1} parent=1 // loop_body
      %s28 = ssub.s32 %s23, 1
      %s29 = ssub.s32 %s23, 2
      %s30 = sadd.s32 %s23, 1
      %s31 = ssub.s32 %s23, %s30
      %p32 = scmp.eq.s32.totalorder %s31, 0
      %s34 = sadd.s32 %s33, 1
      %s35 = scalar_select %p32, %s33, %s34
      %p38 = pneg %p32
      %p39 = scmp.eq.s32.totalorder %s23, 1
      %p40 = por %p38, %p39
      %p41 = scmp.ne.s32.totalorder %s33, %s36
      %p42 = scmp.eq.s32.totalorder %s23, 0
      %p43 = por %p41, %p42
      %p44 = scmp.ne.s32.totalorder %s33, %s36
      %p45 = scmp.eq.s32.totalorder %s28, 1
      %p46 = por %p44, %p45
      %p47 = scmp.ne.s32.totalorder %s36, %s37
      %p48 = scmp.eq.s32.totalorder %s28, 0
      %p49 = por %p47, %p48
      %p50 = scmp.ne.s32.totalorder %s36, %s37
      %p51 = scmp.eq.s32.totalorder %s29, 1
      %p52 = por %p50, %p51
      %p54 = scmp.ne.s32.totalorder %s37, %s53
      %p55 = scmp.eq.s32.totalorder %s29, 0
      %p56 = por %p54, %p55
      %s58 = sadd.s32 %s57, 1
      %p61 = scmp.eq.s32.totalorder %s23, 1
      %p62 = scmp.ne.s32.totalorder %s57, %s59
      %p63 = scmp.eq.s32.totalorder %s23, 0
      %p64 = por %p62, %p63
      %p65 = scmp.ne.s32.totalorder %s57, %s59
      %p66 = scmp.eq.s32.totalorder %s28, 1
      %p67 = por %p65, %p66
      %p68 = scmp.ne.s32.totalorder %s59, %s60
      %p69 = scmp.eq.s32.totalorder %s28, 0
      %p70 = por %p68, %p69
      %p71 = scmp.ne.s32.totalorder %s59, %s60
      %p72 = scmp.eq.s32.totalorder %s29, 1
      %p73 = por %p71, %p72
      %p75 = scmp.ne.s32.totalorder %s60, %s74
      %p76 = scmp.eq.s32.totalorder %s29, 0
      %p77 = por %p75, %p76
      %s79 = sadd.s32 %s78, 1
      %p82 = scmp.eq.s32.totalorder %s23, 1
      %p83 = scmp.ne.s32.totalorder %s78, %s80
      %p84 = scmp.eq.s32.totalorder %s23, 0
      %p85 = por %p83, %p84
      %p86 = scmp.ne.s32.totalorder %s78, %s80
      %p87 = scmp.eq.s32.totalorder %s28, 1
      %p88 = por %p86, %p87
      %p89 = scmp.ne.s32.totalorder %s80, %s81
      %p90 = scmp.eq.s32.totalorder %s28, 0
      %p91 = por %p89, %p90
      %p92 = scmp.ne.s32.totalorder %s80, %s81
      %p93 = scmp.eq.s32.totalorder %s29, 1
      %p94 = por %p92, %p93
      %p96 = scmp.ne.s32.totalorder %s81, %s95
      %p97 = scmp.eq.s32.totalorder %s29, 0
      %p98 = por %p96, %p97
      %s100 = sadd.s32 %s99, 1
      %p103 = scmp.eq.s32.totalorder %s23, 1
      %p104 = scmp.ne.s32.totalorder %s99, %s101
      %p105 = scmp.eq.s32.totalorder %s23, 0
      %p106 = por %p104, %p105
      %p107 = scmp.ne.s32.totalorder %s99, %s101
      %p108 = scmp.eq.s32.totalorder %s28, 1
      %p109 = por %p107, %p108
      %p110 = scmp.ne.s32.totalorder %s101, %s102
      %p111 = scmp.eq.s32.totalorder %s28, 0
      %p112 = por %p110, %p111
      %p113 = scmp.ne.s32.totalorder %s101, %s102
      %p114 = scmp.eq.s32.totalorder %s29, 1
      %p115 = por %p113, %p114
      %p117 = scmp.ne.s32.totalorder %s102, %s116
      %p118 = scmp.eq.s32.totalorder %s29, 0
      %p119 = por %p117, %p118
      %s121 = sadd.s32 %s120, 1
      %p124 = scmp.eq.s32.totalorder %s23, 1
      %p125 = scmp.ne.s32.totalorder %s120, %s122
      %p126 = scmp.eq.s32.totalorder %s23, 0
      %p127 = por %p125, %p126
      %p128 = scmp.ne.s32.totalorder %s120, %s122
      %p129 = scmp.eq.s32.totalorder %s28, 1
      %p130 = por %p128, %p129
      %p131 = scmp.ne.s32.totalorder %s122, %s123
      %p132 = scmp.eq.s32.totalorder %s28, 0
      %p133 = por %p131, %p132
      %p134 = scmp.ne.s32.totalorder %s122, %s123
      %p135 = scmp.eq.s32.totalorder %s29, 1
      %p136 = por %p134, %p135
      %p138 = scmp.ne.s32.totalorder %s123, %s137
      %p139 = scmp.eq.s32.totalorder %s29, 0
      %p140 = por %p138, %p139
      %s142 = sadd.s32 %s141, 1
      %p145 = scmp.eq.s32.totalorder %s23, 1
      %p146 = scmp.ne.s32.totalorder %s141, %s143
      %p147 = scmp.eq.s32.totalorder %s23, 0
      %p148 = por %p146, %p147
      %p149 = scmp.ne.s32.totalorder %s141, %s143
      %p150 = scmp.eq.s32.totalorder %s28, 1
      %p151 = por %p149, %p150
      %p152 = scmp.ne.s32.totalorder %s143, %s144
      %p153 = scmp.eq.s32.totalorder %s28, 0
      %p154 = por %p152, %p153
      %p155 = scmp.ne.s32.totalorder %s143, %s144
      %p156 = scmp.eq.s32.totalorder %s29, 1
      %p157 = por %p155, %p156
      %p159 = scmp.ne.s32.totalorder %s144, %s158
      %p160 = scmp.eq.s32.totalorder %s29, 0
      %p161 = por %p159, %p160
      %s163 = sadd.s32 %s162, 1
      %p166 = scmp.eq.s32.totalorder %s23, 1
      %p167 = scmp.ne.s32.totalorder %s162, %s164
      %p168 = scmp.eq.s32.totalorder %s23, 0
      %p169 = por %p167, %p168
      %p170 = scmp.ne.s32.totalorder %s162, %s164
      %p171 = scmp.eq.s32.totalorder %s28, 1
      %p172 = por %p170, %p171
      %p173 = scmp.ne.s32.totalorder %s164, %s165
      %p174 = scmp.eq.s32.totalorder %s28, 0
      %p175 = por %p173, %p174
      %p176 = scmp.ne.s32.totalorder %s164, %s165
      %p177 = scmp.eq.s32.totalorder %s29, 1
      %p178 = por %p176, %p177
      %p180 = scmp.ne.s32.totalorder %s165, %s179
      %p181 = scmp.eq.s32.totalorder %s29, 0
      %p182 = por %p180, %p181
      %s184 = sadd.s32 %s183, 1
      %p187 = scmp.eq.s32.totalorder %s23, 1
      %p188 = scmp.ne.s32.totalorder %s183, %s185
      %p189 = scmp.eq.s32.totalorder %s23, 0
      %p190 = por %p188, %p189
      %p191 = scmp.ne.s32.totalorder %s183, %s185
      %p192 = scmp.eq.s32.totalorder %s28, 1
      %p193 = por %p191, %p192
      %p194 = scmp.ne.s32.totalorder %s185, %s186
      %p195 = scmp.eq.s32.totalorder %s28, 0
      %p196 = por %p194, %p195
      %p197 = scmp.ne.s32.totalorder %s185, %s186
      %p198 = scmp.eq.s32.totalorder %s29, 1
      %p199 = por %p197, %p198
      %p201 = scmp.ne.s32.totalorder %s186, %s200
      %p202 = scmp.eq.s32.totalorder %s29, 0
      %p203 = por %p201, %p202
      %s204 = ssub.s32 %s23, %s30
      %p205 = scmp.eq.s32.totalorder %s204, 0
      %s207 = sadd.s32 %s206, 1
      %s208 = scalar_select %p205, %s206, %s207
      %p211 = pneg %p205
      %p212 = scmp.eq.s32.totalorder %s23, 1
      %p213 = por %p211, %p212
      %p214 = scmp.ne.s32.totalorder %s206, %s209
      %p215 = scmp.eq.s32.totalorder %s23, 0
      %p216 = por %p214, %p215
      %p217 = scmp.ne.s32.totalorder %s206, %s209
      %p218 = scmp.eq.s32.totalorder %s28, 1
      %p219 = por %p217, %p218
      %p220 = scmp.ne.s32.totalorder %s209, %s210
      %p221 = scmp.eq.s32.totalorder %s28, 0
      %p222 = por %p220, %p221
      %p223 = scmp.ne.s32.totalorder %s209, %s210
      %p224 = scmp.eq.s32.totalorder %s29, 1
      %p225 = por %p223, %p224
      %p227 = scmp.ne.s32.totalorder %s210, %s226
      %p228 = scmp.eq.s32.totalorder %s29, 0
      %p229 = por %p227, %p228
      %s231 = sadd.s32 %s230, 1
      %p234 = scmp.eq.s32.totalorder %s23, 1
      %p235 = scmp.ne.s32.totalorder %s230, %s232
      %p236 = scmp.eq.s32.totalorder %s23, 0
      %p237 = por %p235, %p236
      %p238 = scmp.ne.s32.totalorder %s230, %s232
      %p239 = scmp.eq.s32.totalorder %s28, 1
      %p240 = por %p238, %p239
      %p241 = scmp.ne.s32.totalorder %s232, %s233
      %p242 = scmp.eq.s32.totalorder %s28, 0
      %p243 = por %p241, %p242
      %p244 = scmp.ne.s32.totalorder %s232, %s233
      %p245 = scmp.eq.s32.totalorder %s29, 1
      %p246 = por %p244, %p245
      %p248 = scmp.ne.s32.totalorder %s233, %s247
      %p249 = scmp.eq.s32.totalorder %s29, 0
      %p250 = por %p248, %p249
      %s252 = sadd.s32 %s251, 1
      %p255 = scmp.eq.s32.totalorder %s23, 1
      %p256 = scmp.ne.s32.totalorder %s251, %s253
      %p257 = scmp.eq.s32.totalorder %s23, 0
      %p258 = por %p256, %p257
      %p259 = scmp.ne.s32.totalorder %s251, %s253
      %p260 = scmp.eq.s32.totalorder %s28, 1
      %p261 = por %p259, %p260
      %p262 = scmp.ne.s32.totalorder %s253, %s254
      %p263 = scmp.eq.s32.totalorder %s28, 0
      %p264 = por %p262, %p263
      %p265 = scmp.ne.s32.totalorder %s253, %s254
      %p266 = scmp.eq.s32.totalorder %s29, 1
      %p267 = por %p265, %p266
      %p269 = scmp.ne.s32.totalorder %s254, %s268
      %p270 = scmp.eq.s32.totalorder %s29, 0
      %p271 = por %p269, %p270
      %p272 = scmp.le.s32.totalorder 1, %s23
      %p273 = scmp.lt.s32.totalorder %s23, 3
      %p274 = pnand %p272, %p273
      %p275 = pneg %p274
      // Predicated region
      $region9: #{tpu_custom_call.1} parent=5 // pred_check
        _
      $region10: #{tpu_custom_call.1} parent=5 // pred_check_branch
        %277 = sbr.rel (%p274) target = $region12
      $region11: #{tpu_custom_call.1} parent=5 // pred_region
        %s278 = ssub.s32 %s23, 1
        // Predicated region
        $region13: #{tpu_custom_call.1} parent=11 // pred_check
          %p279 = pneg %p70
        $region14: #{tpu_custom_call.1} parent=11 // pred_check_branch
          %281 = sbr.rel (%p279) target = $region16
        $region15: #{tpu_custom_call.1} parent=11 // pred_region
          _
        $region16: #{tpu_custom_call.1} parent=11 // pred_fallthru
          _
        // Predicated region
        $region17: #{tpu_custom_call.1} parent=11 // pred_check
          %p282 = pneg %p91
        $region18: #{tpu_custom_call.1} parent=11 // pred_check_branch
          %284 = sbr.rel (%p282) target = $region20
        $region19: #{tpu_custom_call.1} parent=11 // pred_region
          %286 = vsyncadd [#allocation5], 0
          %s287 = sshll.u32 %s2, 4
          %s288 = int_to_ptr.hbm [resolvable:$true] %s287
          %s289 = sshll.u32 [#allocation4], 4
          %s290 = int_to_ptr.vmem [resolvable:$true] %s289
          %295 = dma.hbm_to_vmem [thread:$0]  %s288, 8192, %s290, [#allocation5], 512, 512, 32
        $region20: #{tpu_custom_call.1} parent=11 // pred_fallthru
          _
        // Predicated region
        $region21: #{tpu_custom_call.1} parent=11 // pred_check
          %p296 = pneg %p112
        $region22: #{tpu_custom_call.1} parent=11 // pred_check_branch
          %298 = sbr.rel (%p296) target = $region24
        $region23: #{tpu_custom_call.1} parent=11 // pred_region
          %300 = vsyncadd [#allocation8], 0
          %s301 = sshll.u32 %s3, 4
          %s302 = int_to_ptr.hbm [resolvable:$true] %s301
          %s303 = sshll.u32 [#allocation7], 4
          %s304 = int_to_ptr.vmem [resolvable:$true] %s303
          %309 = dma.hbm_to_vmem [thread:$0]  %s302, 6144, %s304, [#allocation8], 384, 384, 24
        $region24: #{tpu_custom_call.1} parent=11 // pred_fallthru
          _
        // Predicated region
        $region25: #{tpu_custom_call.1} parent=11 // pred_check
          %p310 = pneg %p133
        $region26: #{tpu_custom_call.1} parent=11 // pred_check_branch
          %312 = sbr.rel (%p310) target = $region28
        $region27: #{tpu_custom_call.1} parent=11 // pred_region
          _
        $region28: #{tpu_custom_call.1} parent=11 // pred_fallthru
          _
        // Predicated region
        $region29: #{tpu_custom_call.1} parent=11 // pred_check
          %p313 = pneg %p154
        $region30: #{tpu_custom_call.1} parent=11 // pred_check_branch
          %315 = sbr.rel (%p313) target = $region32
        $region31: #{tpu_custom_call.1} parent=11 // pred_region
          _
        $region32: #{tpu_custom_call.1} parent=11 // pred_fallthru
          _
        // Predicated region
        $region33: #{tpu_custom_call.1} parent=11 // pred_check
          %p316 = pneg %p175
        $region34: #{tpu_custom_call.1} parent=11 // pred_check_branch
          %318 = sbr.rel (%p316) target = $region36
        $region35: #{tpu_custom_call.1} parent=11 // pred_region
          _
        $region36: #{tpu_custom_call.1} parent=11 // pred_fallthru
          _
        // Predicated region
        $region37: #{tpu_custom_call.1} parent=11 // pred_check
          %p319 = pneg %p196
        $region38: #{tpu_custom_call.1} parent=11 // pred_check_branch
          %321 = sbr.rel (%p319) target = $region40
        $region39: #{tpu_custom_call.1} parent=11 // pred_region
          _
        $region40: #{tpu_custom_call.1} parent=11 // pred_fallthru
          _
      $region12: #{tpu_custom_call.1} parent=5 // pred_fallthru
        _
      %p322 = scmp.lt.s32.totalorder %s23, 2
      // Predicated region
      $region41: #{tpu_custom_call.1} parent=5 // pred_check
        %p323 = pneg %p322
      $region42: #{tpu_custom_call.1} parent=5 // pred_check_branch
        %325 = sbr.rel (%p323) target = $region44
      $region43: #{tpu_custom_call.1} parent=5 // pred_region
        // Predicated region
        $region45: #{tpu_custom_call.1} parent=43 // pred_check
          %p326 = pneg %p43
        $region46: #{tpu_custom_call.1} parent=43 // pred_check_branch
          %328 = sbr.rel (%p326) target = $region48
        $region47: #{tpu_custom_call.1} parent=43 // pred_region
          %p329 = scmp.lt.s32.totalorder %s23, 1
          %s330 = scalar_select %p329, %s23, 1
          %s331 = smul.addr %s330, 4
          %s332 = smul.addr %s331, 8
          %s333 = scalar_lea.vmem %s0, %s332
        $region48: #{tpu_custom_call.1} parent=43 // pred_fallthru
          _
      $region44: #{tpu_custom_call.1} parent=5 // pred_fallthru
        _
      %p334 = scmp.le.s32.totalorder 1, %s23
      %p335 = scmp.lt.s32.totalorder %s23, 3
      %p336 = pnand %p334, %p335
      %p337 = pneg %p336
      // Predicated region
      $region49: #{tpu_custom_call.1} parent=5 // pred_check
        _
      $region50: #{tpu_custom_call.1} parent=5 // pred_check_branch
        %339 = sbr.rel (%p336) target = $region52
      $region51: #{tpu_custom_call.1} parent=5 // pred_region
        %s340 = ssub.s32 %s23, 1
        // Predicated region
        $region53: #{tpu_custom_call.1} parent=51 // pred_check
          %p341 = pneg %p91
        $region54: #{tpu_custom_call.1} parent=51 // pred_check_branch
          %343 = sbr.rel (%p341) target = $region56
        $region55: #{tpu_custom_call.1} parent=51 // pred_region
          %345 = dma.done [#allocation5], 8192
        $region56: #{tpu_custom_call.1} parent=51 // pred_fallthru
          _
        // Predicated region
        $region57: #{tpu_custom_call.1} parent=51 // pred_check
          %p346 = pneg %p112
        $region58: #{tpu_custom_call.1} parent=51 // pred_check_branch
          %348 = sbr.rel (%p346) target = $region60
        $region59: #{tpu_custom_call.1} parent=51 // pred_region
          %350 = dma.done [#allocation8], 6144
        $region60: #{tpu_custom_call.1} parent=51 // pred_fallthru
          _
        %p351 = scmp.lt.s32.totalorder %s28, 1
        %s352 = scalar_select %p351, %s28, 1
        %s353 = smul.addr %s352, 4
        %s354 = smul.addr %s353, 8
        %s355 = scalar_lea.vmem %s0, %s354
        %p356 = pneg %p49
        %p357 = pneg %p46
        %p358 = pneg %p70
        %p359 = pneg %p67
        %p360 = pneg %p91
        %p361 = pneg %p88
        %p362 = pneg %p112
        %p363 = pneg %p109
        %p364 = pneg %p133
        %p365 = pneg %p130
        %p366 = pneg %p154
        %p367 = pneg %p151
        %p368 = pneg %p175
        %p369 = pneg %p172
        %p370 = pneg %p196
        %p371 = pneg %p193
        %p372 = pneg %p222
        %p373 = pneg %p219
        %s374 = sand.u32 %s209, 1
        %s375 = scalar_lea.sflag [#allocation6], %s374
        %s376 = sand.u32 %s209, 1
        %s377 = smul.addr %s376, 32
        %s378 = scalar_lea.vmem [#allocation9], %s377
        %p379 = pneg %p243
        %p380 = pneg %p240
        %p381 = pneg %p264
        %p382 = pneg %p261
        %p383 = scmp.lt.s32.totalorder %s28, 1
        %s384 = scalar_select %p383, %s28, 1
        %s385 = smul.addr %s384, 4
        %s386 = smul.addr %s385, 8
        %s387 = scalar_lea.vmem %s0, %s386
        %s388 = smul.u32 4, %s28
        %p389 = scmp.eq.s32.totalorder %s28, 0
        // Predicated region
        $region61: #{tpu_custom_call.1} parent=51 // pred_check
          %p390 = pneg %p389
        $region62: #{tpu_custom_call.1} parent=51 // pred_check_branch
          %392 = sbr.rel (%p390) target = $region64
        $region63: #{tpu_custom_call.1} parent=51 // pred_region
          %v393 = vld [vmem:[%s6] sm:$0xff]
          %394 = vst [vmem:[#allocation2] sm:$0xff] %v393
          %v395 = vld [vmem:[%s7] sm:$0xff]
          %396 = vst [vmem:[#allocation3] sm:$0xff] %v395
        $region64: #{tpu_custom_call.1} parent=51 // pred_fallthru
          _
        %v397 = vld [vmem:[%s387] sm:$0xff]
        %v398 = vld [vmem:[%s387 + $0x8] sm:$0xff]
        %v399 = vld [vmem:[%s387 + $0x10] sm:$0xff]
        %v400 = vld [vmem:[%s387 + $0x18] sm:$0xff]
        %v401 = vld [vmem:[%s1] sm:$0xff]
        %v402 = vld [vmem:[%s1 + $0x8] sm:$0xff]
        %v403 = vld [vmem:[%s1 + $0x10] sm:$0xff]
        %v404 = vld [vmem:[%s1 + $0x18] sm:$0xff]
        %v405 = vld [vmem:[%s1 + $0x20] sm:$0xff]
        %v406 = vld [vmem:[%s1 + $0x28] sm:$0xff]
        %v407 = vld [vmem:[%s1 + $0x30] sm:$0xff]
        %v408 = vld [vmem:[%s1 + $0x38] sm:$0xff]
        %v409 = vld [vmem:[%s4] sm:$0xf]
        %v411 = vperm.slane %v409, 0
        %v412 = vperm.slane %v409, 1
        %v413 = vperm.slane %v409, 2
        %v414 = vperm.slane %v409, 3
        %vm419 = vcmask 130048
        %v421 = vsel %vm419, %v397, 0
        %v424 = vsel %vm419, %v398, 0
        %v427 = vsel %vm419, %v399, 0
        %v430 = vsel %vm419, %v400, 0
        %432 = vmatpush.msra.mxu0 0.0
        %433 = vmatpush.msra.mxu0 0.0
        %434 = vmatpush.msra.mxu0 0.0
        %435 = vmatpush.msra.mxu0 0.0
        %436 = vmatpush.msra.mxu0 0.0
        %437 = vmatpush.msra.mxu0 0.0
        %438 = vmatpush.msra.mxu0 0.0
        %439 = vmatpush.msra.mxu0 0.0
        %440 = vmatpush.msra.mxu0 0.0
        %441 = vmatpush.msra.mxu0 0.0
        %442 = vmatpush.msra.mxu0 0.0
        %443 = vmatpush.msra.mxu0 0.0
        %444 = vmatpush.msra.mxu0 0.0
        %445 = vmatpush.msra.mxu0 0.0
        %446 = vmatpush.msra.mxu0 %v405
        %447 = vmatpush.msra.mxu0 %v401
        %448 = vmatmul.f32.gmra.mxu0 %v421
        %v449 = vpop.f32.mrf.mxu0
        %v450 = vadd.f32 %v411, %v449
        %451 = vmatmul.f32.gmra.mxu0 %v424
        %v452 = vpop.f32.mrf.mxu0
        %v453 = vadd.f32 %v411, %v452
        %454 = vmatmul.f32.gmra.mxu0 %v427
        %v455 = vpop.f32.mrf.mxu0
        %v456 = vadd.f32 %v411, %v455
        %457 = vmatmul.f32.gmra.mxu0 %v430
        %v458 = vpop.f32.mrf.mxu0
        %v459 = vadd.f32 %v411, %v458
        %460 = vdwg.mxu0
        %461 = vmatpush.msra.mxu0 0.0
        %462 = vmatpush.msra.mxu0 0.0
        %463 = vmatpush.msra.mxu0 0.0
        %464 = vmatpush.msra.mxu0 0.0
        %465 = vmatpush.msra.mxu0 0.0
        %466 = vmatpush.msra.mxu0 0.0
        %467 = vmatpush.msra.mxu0 0.0
        %468 = vmatpush.msra.mxu0 0.0
        %469 = vmatpush.msra.mxu0 0.0
        %470 = vmatpush.msra.mxu0 0.0
        %471 = vmatpush.msra.mxu0 0.0
        %472 = vmatpush.msra.mxu0 0.0
        %473 = vmatpush.msra.mxu0 0.0
        %474 = vmatpush.msra.mxu0 0.0
        %475 = vmatpush.msra.mxu0 %v406
        %476 = vmatpush.msra.mxu0 %v402
        %477 = vmatmul.f32.gmra.mxu0 %v421
        %v478 = vpop.f32.mrf.mxu0
        %v479 = vadd.f32 %v412, %v478
        %480 = vmatmul.f32.gmra.mxu0 %v424
        %v481 = vpop.f32.mrf.mxu0
        %v482 = vadd.f32 %v412, %v481
        %483 = vmatmul.f32.gmra.mxu0 %v427
        %v484 = vpop.f32.mrf.mxu0
        %v485 = vadd.f32 %v412, %v484
        %486 = vmatmul.f32.gmra.mxu0 %v430
        %v487 = vpop.f32.mrf.mxu0
        %v488 = vadd.f32 %v412, %v487
        %489 = vdwg.mxu0
        %490 = vmatpush.msra.mxu0 0.0
        %491 = vmatpush.msra.mxu0 0.0
        %492 = vmatpush.msra.mxu0 0.0
        %493 = vmatpush.msra.mxu0 0.0
        %494 = vmatpush.msra.mxu0 0.0
        %495 = vmatpush.msra.mxu0 0.0
        %496 = vmatpush.msra.mxu0 0.0
        %497 = vmatpush.msra.mxu0 0.0
        %498 = vmatpush.msra.mxu0 0.0
        %499 = vmatpush.msra.mxu0 0.0
        %500 = vmatpush.msra.mxu0 0.0
        %501 = vmatpush.msra.mxu0 0.0
        %502 = vmatpush.msra.mxu0 0.0
        %503 = vmatpush.msra.mxu0 0.0
        %504 = vmatpush.msra.mxu0 %v407
        %505 = vmatpush.msra.mxu0 %v403
        %506 = vmatmul.f32.gmra.mxu0 %v421
        %v507 = vpop.f32.mrf.mxu0
        %v508 = vadd.f32 %v413, %v507
        %509 = vmatmul.f32.gmra.mxu0 %v424
        %v510 = vpop.f32.mrf.mxu0
        %v511 = vadd.f32 %v413, %v510
        %512 = vmatmul.f32.gmra.mxu0 %v427
        %v513 = vpop.f32.mrf.mxu0
        %v514 = vadd.f32 %v413, %v513
        %515 = vmatmul.f32.gmra.mxu0 %v430
        %v516 = vpop.f32.mrf.mxu0
        %v517 = vadd.f32 %v413, %v516
        %518 = vdwg.mxu0
        %519 = vmatpush.msra.mxu0 0.0
        %520 = vmatpush.msra.mxu0 0.0
        %521 = vmatpush.msra.mxu0 0.0
        %522 = vmatpush.msra.mxu0 0.0
        %523 = vmatpush.msra.mxu0 0.0
        %524 = vmatpush.msra.mxu0 0.0
        %525 = vmatpush.msra.mxu0 0.0
        %526 = vmatpush.msra.mxu0 0.0
        %527 = vmatpush.msra.mxu0 0.0
        %528 = vmatpush.msra.mxu0 0.0
        %529 = vmatpush.msra.mxu0 0.0
        %530 = vmatpush.msra.mxu0 0.0
        %531 = vmatpush.msra.mxu0 0.0
        %532 = vmatpush.msra.mxu0 0.0
        %533 = vmatpush.msra.mxu0 %v408
        %534 = vmatpush.msra.mxu0 %v404
        %535 = vmatmul.f32.gmra.mxu0 %v421
        %v536 = vpop.f32.mrf.mxu0
        %v537 = vadd.f32 %v414, %v536
        %538 = vmatmul.f32.gmra.mxu0 %v424
        %v539 = vpop.f32.mrf.mxu0
        %v540 = vadd.f32 %v414, %v539
        %541 = vmatmul.f32.gmra.mxu0 %v427
        %v542 = vpop.f32.mrf.mxu0
        %v543 = vadd.f32 %v414, %v542
        %544 = vmatmul.f32.gmra.mxu0 %v430
        %v545 = vpop.f32.mrf.mxu0
        %v546 = vadd.f32 %v414, %v545
        %547 = vdwg.mxu0
        %v548 = vld [vmem:[%s5] sm:$0x1]
        %v550 = vperm.slane %v548, 0
        %v552 = vld [vmem:[#allocation2] sm:$0xff]
        %v553 = vld [vmem:[#allocation3] sm:$0xff]
        %v554 = vld [vmem:[#allocation4] sm:$0xff]
        %v555 = vld [vmem:[#allocation4 + $0x8] sm:$0xff]
        %v556 = vld [vmem:[#allocation4 + $0x10] sm:$0xff]
        %v557 = vld [vmem:[#allocation4 + $0x18] sm:$0xff]
        %v558 = vld [vmem:[#allocation4 + $0x20] sm:$0xff]
        %v559 = vld [vmem:[#allocation4 + $0x28] sm:$0xff]
        %v560 = vld [vmem:[#allocation4 + $0x30] sm:$0xff]
        %v561 = vld [vmem:[#allocation4 + $0x38] sm:$0xff]
        %v562 = vld [vmem:[#allocation4 + $0x40] sm:$0xff]
        %v563 = vld [vmem:[#allocation4 + $0x48] sm:$0xff]
        %v564 = vld [vmem:[#allocation4 + $0x50] sm:$0xff]
        %v565 = vld [vmem:[#allocation4 + $0x58] sm:$0xff]
        %v566 = vld [vmem:[#allocation4 + $0x60] sm:$0xff]
        %v567 = vld [vmem:[#allocation4 + $0x68] sm:$0xff]
        %v568 = vld [vmem:[#allocation4 + $0x70] sm:$0xff]
        %v569 = vld [vmem:[#allocation4 + $0x78] sm:$0xff]
        %v570 = vld [vmem:[#allocation4 + $0x80] sm:$0xff]
        %v571 = vld [vmem:[#allocation4 + $0x88] sm:$0xff]
        %v572 = vld [vmem:[#allocation4 + $0x90] sm:$0xff]
        %v573 = vld [vmem:[#allocation4 + $0x98] sm:$0xff]
        %v574 = vld [vmem:[#allocation4 + $0xa0] sm:$0xff]
        %v575 = vld [vmem:[#allocation4 + $0xa8] sm:$0xff]
        %v576 = vld [vmem:[#allocation4 + $0xb0] sm:$0xff]
        %v577 = vld [vmem:[#allocation4 + $0xb8] sm:$0xff]
        %v578 = vld [vmem:[#allocation4 + $0xc0] sm:$0xff]
        %v579 = vld [vmem:[#allocation4 + $0xc8] sm:$0xff]
        %v580 = vld [vmem:[#allocation4 + $0xd0] sm:$0xff]
        %v581 = vld [vmem:[#allocation4 + $0xd8] sm:$0xff]
        %v582 = vld [vmem:[#allocation4 + $0xe0] sm:$0xff]
        %v583 = vld [vmem:[#allocation4 + $0xe8] sm:$0xff]
        %v584 = vld [vmem:[#allocation4 + $0xf0] sm:$0xff]
        %v585 = vld [vmem:[#allocation4 + $0xf8] sm:$0xff]
        %v586 = vld [vmem:[#allocation4 + $0x100] sm:$0xff]
        %v587 = vld [vmem:[#allocation4 + $0x108] sm:$0xff]
        %v588 = vld [vmem:[#allocation4 + $0x110] sm:$0xff]
        %v589 = vld [vmem:[#allocation4 + $0x118] sm:$0xff]
        %v590 = vld [vmem:[#allocation4 + $0x120] sm:$0xff]
        %v591 = vld [vmem:[#allocation4 + $0x128] sm:$0xff]
        %v592 = vld [vmem:[#allocation4 + $0x130] sm:$0xff]
        %v593 = vld [vmem:[#allocation4 + $0x138] sm:$0xff]
        %v594 = vld [vmem:[#allocation4 + $0x140] sm:$0xff]
        %v595 = vld [vmem:[#allocation4 + $0x148] sm:$0xff]
        %v596 = vld [vmem:[#allocation4 + $0x150] sm:$0xff]
        %v597 = vld [vmem:[#allocation4 + $0x158] sm:$0xff]
        %v598 = vld [vmem:[#allocation4 + $0x160] sm:$0xff]
        %v599 = vld [vmem:[#allocation4 + $0x168] sm:$0xff]
        %v600 = vld [vmem:[#allocation4 + $0x170] sm:$0xff]
        %v601 = vld [vmem:[#allocation4 + $0x178] sm:$0xff]
        %v602 = vld [vmem:[#allocation4 + $0x180] sm:$0xff]
        %v603 = vld [vmem:[#allocation4 + $0x188] sm:$0xff]
        %v604 = vld [vmem:[#allocation4 + $0x190] sm:$0xff]
        %v605 = vld [vmem:[#allocation4 + $0x198] sm:$0xff]
        %v606 = vld [vmem:[#allocation4 + $0x1a0] sm:$0xff]
        %v607 = vld [vmem:[#allocation4 + $0x1a8] sm:$0xff]
        %v608 = vld [vmem:[#allocation4 + $0x1b0] sm:$0xff]
        %v609 = vld [vmem:[#allocation4 + $0x1b8] sm:$0xff]
        %v610 = vld [vmem:[#allocation4 + $0x1c0] sm:$0xff]
        %v611 = vld [vmem:[#allocation4 + $0x1c8] sm:$0xff]
        %v612 = vld [vmem:[#allocation4 + $0x1d0] sm:$0xff]
        %v613 = vld [vmem:[#allocation4 + $0x1d8] sm:$0xff]
        %v614 = vld [vmem:[#allocation4 + $0x1e0] sm:$0xff]
        %v615 = vld [vmem:[#allocation4 + $0x1e8] sm:$0xff]
        %v616 = vld [vmem:[#allocation4 + $0x1f0] sm:$0xff]
        %v617 = vld [vmem:[#allocation4 + $0x1f8] sm:$0xff]
        %618 = vmatpush.msra.mxu0 %v614
        %619 = vmatpush.msra.mxu0 %v610
        %620 = vmatpush.msra.mxu0 %v606
        %621 = vmatpush.msra.mxu0 %v602
        %622 = vmatpush.msra.mxu0 %v598
        %623 = vmatpush.msra.mxu0 %v594
        %624 = vmatpush.msra.mxu0 %v590
        %625 = vmatpush.msra.mxu0 %v586
        %626 = vmatpush.msra.mxu0 %v582
        %627 = vmatpush.msra.mxu0 %v578
        %628 = vmatpush.msra.mxu0 %v574
        %629 = vmatpush.msra.mxu0 %v570
        %630 = vmatpush.msra.mxu0 %v566
        %631 = vmatpush.msra.mxu0 %v562
        %632 = vmatpush.msra.mxu0 %v558
        %633 = vmatpush.msra.mxu0 %v554
        %634 = vmatmul.f32.gmra.mxu0 %v552
        %v635 = vpop.f32.mrf.mxu0
        %v636 = vadd.f32 0.0, %v635
        %637 = vdwg.mxu0
        %638 = vmatpush.msra.mxu0 %v615
        %639 = vmatpush.msra.mxu0 %v611
        %640 = vmatpush.msra.mxu0 %v607
        %641 = vmatpush.msra.mxu0 %v603
        %642 = vmatpush.msra.mxu0 %v599
        %643 = vmatpush.msra.mxu0 %v595
        %644 = vmatpush.msra.mxu0 %v591
        %645 = vmatpush.msra.mxu0 %v587
        %646 = vmatpush.msra.mxu0 %v583
        %647 = vmatpush.msra.mxu0 %v579
        %648 = vmatpush.msra.mxu0 %v575
        %649 = vmatpush.msra.mxu0 %v571
        %650 = vmatpush.msra.mxu0 %v567
        %651 = vmatpush.msra.mxu0 %v563
        %652 = vmatpush.msra.mxu0 %v559
        %653 = vmatpush.msra.mxu0 %v555
        %654 = vmatmul.f32.gmra.mxu0 %v552
        %v655 = vpop.f32.mrf.mxu0
        %v656 = vadd.f32 0.0, %v655
        %657 = vdwg.mxu0
        %658 = vmatpush.msra.mxu0 %v616
        %659 = vmatpush.msra.mxu0 %v612
        %660 = vmatpush.msra.mxu0 %v608
        %661 = vmatpush.msra.mxu0 %v604
        %662 = vmatpush.msra.mxu0 %v600
        %663 = vmatpush.msra.mxu0 %v596
        %664 = vmatpush.msra.mxu0 %v592
        %665 = vmatpush.msra.mxu0 %v588
        %666 = vmatpush.msra.mxu0 %v584
        %667 = vmatpush.msra.mxu0 %v580
        %668 = vmatpush.msra.mxu0 %v576
        %669 = vmatpush.msra.mxu0 %v572
        %670 = vmatpush.msra.mxu0 %v568
        %671 = vmatpush.msra.mxu0 %v564
        %672 = vmatpush.msra.mxu0 %v560
        %673 = vmatpush.msra.mxu0 %v556
        %674 = vmatmul.f32.gmra.mxu0 %v552
        %v675 = vpop.f32.mrf.mxu0
        %v676 = vadd.f32 0.0, %v675
        %677 = vdwg.mxu0
        %678 = vmatpush.msra.mxu0 %v617
        %679 = vmatpush.msra.mxu0 %v613
        %680 = vmatpush.msra.mxu0 %v609
        %681 = vmatpush.msra.mxu0 %v605
        %682 = vmatpush.msra.mxu0 %v601
        %683 = vmatpush.msra.mxu0 %v597
        %684 = vmatpush.msra.mxu0 %v593
        %685 = vmatpush.msra.mxu0 %v589
        %686 = vmatpush.msra.mxu0 %v585
        %687 = vmatpush.msra.mxu0 %v581
        %688 = vmatpush.msra.mxu0 %v577
        %689 = vmatpush.msra.mxu0 %v573
        %690 = vmatpush.msra.mxu0 %v569
        %691 = vmatpush.msra.mxu0 %v565
        %692 = vmatpush.msra.mxu0 %v561
        %693 = vmatpush.msra.mxu0 %v557
        %694 = vmatmul.f32.gmra.mxu0 %v552
        %v695 = vpop.f32.mrf.mxu0
        %v696 = vadd.f32 0.0, %v695
        %697 = vdwg.mxu0
        %v698 = vld [vmem:[#allocation7] sm:$0xff]
        %v699 = vld [vmem:[#allocation7 + $0x8] sm:$0xff]
        %v700 = vld [vmem:[#allocation7 + $0x10] sm:$0xff]
        %v701 = vld [vmem:[#allocation7 + $0x18] sm:$0xff]
        %v702 = vld [vmem:[#allocation7 + $0x20] sm:$0xff]
        %v703 = vld [vmem:[#allocation7 + $0x28] sm:$0xff]
        %v704 = vld [vmem:[#allocation7 + $0x30] sm:$0xff]
        %v705 = vld [vmem:[#allocation7 + $0x38] sm:$0xff]
        %v706 = vld [vmem:[#allocation7 + $0x40] sm:$0xff]
        %v707 = vld [vmem:[#allocation7 + $0x48] sm:$0xff]
        %v708 = vld [vmem:[#allocation7 + $0x50] sm:$0xff]
        %v709 = vld [vmem:[#allocation7 + $0x58] sm:$0xff]
        %v710 = vld [vmem:[#allocation7 + $0x60] sm:$0xff]
        %v711 = vld [vmem:[#allocation7 + $0x68] sm:$0xff]
        %v712 = vld [vmem:[#allocation7 + $0x70] sm:$0xff]
        %v713 = vld [vmem:[#allocation7 + $0x78] sm:$0xff]
        %v714 = vld [vmem:[#allocation7 + $0x80] sm:$0xff]
        %v715 = vld [vmem:[#allocation7 + $0x88] sm:$0xff]
        %v716 = vld [vmem:[#allocation7 + $0x90] sm:$0xff]
        %v717 = vld [vmem:[#allocation7 + $0x98] sm:$0xff]
        %v718 = vld [vmem:[#allocation7 + $0xa0] sm:$0xff]
        %v719 = vld [vmem:[#allocation7 + $0xa8] sm:$0xff]
        %v720 = vld [vmem:[#allocation7 + $0xb0] sm:$0xff]
        %v721 = vld [vmem:[#allocation7 + $0xb8] sm:$0xff]
        %v722 = vld [vmem:[#allocation7 + $0xc0] sm:$0xff]
        %v723 = vld [vmem:[#allocation7 + $0xc8] sm:$0xff]
        %v724 = vld [vmem:[#allocation7 + $0xd0] sm:$0xff]
        %v725 = vld [vmem:[#allocation7 + $0xd8] sm:$0xff]
        %v726 = vld [vmem:[#allocation7 + $0xe0] sm:$0xff]
        %v727 = vld [vmem:[#allocation7 + $0xe8] sm:$0xff]
        %v728 = vld [vmem:[#allocation7 + $0xf0] sm:$0xff]
        %v729 = vld [vmem:[#allocation7 + $0xf8] sm:$0xff]
        %v730 = vld [vmem:[#allocation7 + $0x100] sm:$0xff]
        %v731 = vld [vmem:[#allocation7 + $0x108] sm:$0xff]
        %v732 = vld [vmem:[#allocation7 + $0x110] sm:$0xff]
        %v733 = vld [vmem:[#allocation7 + $0x118] sm:$0xff]
        %v734 = vld [vmem:[#allocation7 + $0x120] sm:$0xff]
        %v735 = vld [vmem:[#allocation7 + $0x128] sm:$0xff]
        %v736 = vld [vmem:[#allocation7 + $0x130] sm:$0xff]
        %v737 = vld [vmem:[#allocation7 + $0x138] sm:$0xff]
        %v738 = vld [vmem:[#allocation7 + $0x140] sm:$0xff]
        %v739 = vld [vmem:[#allocation7 + $0x148] sm:$0xff]
        %v740 = vld [vmem:[#allocation7 + $0x150] sm:$0xff]
        %v741 = vld [vmem:[#allocation7 + $0x158] sm:$0xff]
        %v742 = vld [vmem:[#allocation7 + $0x160] sm:$0xff]
        %v743 = vld [vmem:[#allocation7 + $0x168] sm:$0xff]
        %v744 = vld [vmem:[#allocation7 + $0x170] sm:$0xff]
        %v745 = vld [vmem:[#allocation7 + $0x178] sm:$0xff]
        %746 = vmatpush.msra.mxu0 %v743
        %747 = vmatpush.msra.mxu0 %v740
        %748 = vmatpush.msra.mxu0 %v737
        %749 = vmatpush.msra.mxu0 %v734
        %750 = vmatpush.msra.mxu0 %v731
        %751 = vmatpush.msra.mxu0 %v728
        %752 = vmatpush.msra.mxu0 %v725
        %753 = vmatpush.msra.mxu0 %v722
        %754 = vmatpush.msra.mxu0 %v719
        %755 = vmatpush.msra.mxu0 %v716
        %756 = vmatpush.msra.mxu0 %v713
        %757 = vmatpush.msra.mxu0 %v710
        %758 = vmatpush.msra.mxu0 %v707
        %759 = vmatpush.msra.mxu0 %v704
        %760 = vmatpush.msra.mxu0 %v701
        %761 = vmatpush.msra.mxu0 %v698
        %762 = vmatmul.f32.gmra.mxu0 %v553
        %v763 = vpop.f32.mrf.mxu0
        %v764 = vadd.f32 0.0, %v763
        %765 = vdwg.mxu0
        %766 = vmatpush.msra.mxu0 %v744
        %767 = vmatpush.msra.mxu0 %v741
        %768 = vmatpush.msra.mxu0 %v738
        %769 = vmatpush.msra.mxu0 %v735
        %770 = vmatpush.msra.mxu0 %v732
        %771 = vmatpush.msra.mxu0 %v729
        %772 = vmatpush.msra.mxu0 %v726
        %773 = vmatpush.msra.mxu0 %v723
        %774 = vmatpush.msra.mxu0 %v720
        %775 = vmatpush.msra.mxu0 %v717
        %776 = vmatpush.msra.mxu0 %v714
        %777 = vmatpush.msra.mxu0 %v711
        %778 = vmatpush.msra.mxu0 %v708
        %779 = vmatpush.msra.mxu0 %v705
        %780 = vmatpush.msra.mxu0 %v702
        %781 = vmatpush.msra.mxu0 %v699
        %782 = vmatmul.f32.gmra.mxu0 %v553
        %v783 = vpop.f32.mrf.mxu0
        %v784 = vadd.f32 0.0, %v783
        %785 = vdwg.mxu0
        %786 = vmatpush.msra.mxu0 %v745
        %787 = vmatpush.msra.mxu0 %v742
        %788 = vmatpush.msra.mxu0 %v739
        %789 = vmatpush.msra.mxu0 %v736
        %790 = vmatpush.msra.mxu0 %v733
        %791 = vmatpush.msra.mxu0 %v730
        %792 = vmatpush.msra.mxu0 %v727
        %793 = vmatpush.msra.mxu0 %v724
        %794 = vmatpush.msra.mxu0 %v721
        %795 = vmatpush.msra.mxu0 %v718
        %796 = vmatpush.msra.mxu0 %v715
        %797 = vmatpush.msra.mxu0 %v712
        %798 = vmatpush.msra.mxu0 %v709
        %799 = vmatpush.msra.mxu0 %v706
        %800 = vmatpush.msra.mxu0 %v703
        %801 = vmatpush.msra.mxu0 %v700
        %802 = vmatmul.f32.gmra.mxu0 %v553
        %v803 = vpop.f32.mrf.mxu0
        %v804 = vadd.f32 0.0, %v803
        %805 = vdwg.mxu0
        %v806 = vadd.f32 %v450, %v636
        %v807 = vadd.f32 %v479, %v656
        %v808 = vadd.f32 %v508, %v676
        %v809 = vadd.f32 %v806, %v764
        %v810 = vadd.f32 %v807, %v784
        %v811 = vadd.f32 %v808, %v804
        %v812 = vxor.u32 %v809, 2147483648
        %v813 = vxor.u32 %v810, 2147483648
        %v814 = vxor.u32 %v811, 2147483648
        %v815 = vmul.f32 %v812, 1.442695
        %v816 = vpow.pop %v815
        %v817 = vmul.f32 %v813, 1.442695
        %v818 = vpow.pop %v817
        %v819 = vmul.f32 %v814, 1.442695
        %v820 = vpow.pop %v819
        %v821 = vadd.f32 %v816, 1.0
        %v822 = vadd.f32 %v818, 1.0
        %v823 = vadd.f32 %v820, 1.0
        %v824 = vrcp.pop %v821
        %v825 = vmul.f32 %v821, %v824
        %v826 = vsub.f32 1.0, %v825
        %v827 = vmul.f32 %v824, %v826
        %v828 = vadd.f32 %v824, %v827
        %vm829 = vweird.f32 %v821
        %vm830 = vweird.f32 %v824
        %vm831 = vmor %vm829, %vm830
        %v832 = vsel %vm831, %v824, %v828
        %v833 = vand.u32 2147483647, %v821
        %vm834 = vcmp.eq.f32.partialorder %v833, 8.507059e+37
        %v835 = vand.u32 %v821, 2147483648
        %v836 = vor.u32 1.1754944e-38, %v835
        %v837 = vsel %vm834, %v836, %v832
        %v838 = vmul.f32 1.0, %v837
        %v839 = vrcp.pop %v822
        %v840 = vmul.f32 %v822, %v839
        %v841 = vsub.f32 1.0, %v840
        %v842 = vmul.f32 %v839, %v841
        %v843 = vadd.f32 %v839, %v842
        %vm844 = vweird.f32 %v822
        %vm845 = vweird.f32 %v839
        %vm846 = vmor %vm844, %vm845
        %v847 = vsel %vm846, %v839, %v843
        %v848 = vand.u32 2147483647, %v822
        %vm849 = vcmp.eq.f32.partialorder %v848, 8.507059e+37
        %v850 = vand.u32 %v822, 2147483648
        %v851 = vor.u32 1.1754944e-38, %v850
        %v852 = vsel %vm849, %v851, %v847
        %v853 = vmul.f32 1.0, %v852
        %v854 = vrcp.pop %v823
        %v855 = vmul.f32 %v823, %v854
        %v856 = vsub.f32 1.0, %v855
        %v857 = vmul.f32 %v854, %v856
        %v858 = vadd.f32 %v854, %v857
        %vm859 = vweird.f32 %v823
        %vm860 = vweird.f32 %v854
        %vm861 = vmor %vm859, %vm860
        %v862 = vsel %vm861, %v854, %v858
        %v863 = vand.u32 2147483647, %v823
        %vm864 = vcmp.eq.f32.partialorder %v863, 8.507059e+37
        %v865 = vand.u32 %v823, 2147483648
        %v866 = vor.u32 1.1754944e-38, %v865
        %v867 = vsel %vm864, %v866, %v862
        %v868 = vmul.f32 1.0, %v867
        %v869 = vadd.f32 %v696, %v550
        %v870 = vtanh.pop %v869
        %v871 = vmul.f32 %v853, %v553
        %v872 = vmul.f32 %v838, %v870
        %v873 = vadd.f32 %v871, %v872
        %v874 = vtanh.pop %v873
        %v875 = vadd.f32 %v874, %v537
        %v876 = vmul.f32 %v868, %v875
        %877 = vst [vmem:[%s378] sm:$0xff] %v876
        %v878 = vld [vmem:[#allocation4] sm:$0xff]
        %v879 = vld [vmem:[#allocation4 + $0x8] sm:$0xff]
        %v880 = vld [vmem:[#allocation4 + $0x10] sm:$0xff]
        %v881 = vld [vmem:[#allocation4 + $0x18] sm:$0xff]
        %v882 = vld [vmem:[#allocation4 + $0x20] sm:$0xff]
        %v883 = vld [vmem:[#allocation4 + $0x28] sm:$0xff]
        %v884 = vld [vmem:[#allocation4 + $0x30] sm:$0xff]
        %v885 = vld [vmem:[#allocation4 + $0x38] sm:$0xff]
        %v886 = vld [vmem:[#allocation4 + $0x40] sm:$0xff]
        %v887 = vld [vmem:[#allocation4 + $0x48] sm:$0xff]
        %v888 = vld [vmem:[#allocation4 + $0x50] sm:$0xff]
        %v889 = vld [vmem:[#allocation4 + $0x58] sm:$0xff]
        %v890 = vld [vmem:[#allocation4 + $0x60] sm:$0xff]
        %v891 = vld [vmem:[#allocation4 + $0x68] sm:$0xff]
        %v892 = vld [vmem:[#allocation4 + $0x70] sm:$0xff]
        %v893 = vld [vmem:[#allocation4 + $0x78] sm:$0xff]
        %v894 = vld [vmem:[#allocation4 + $0x80] sm:$0xff]
        %v895 = vld [vmem:[#allocation4 + $0x88] sm:$0xff]
        %v896 = vld [vmem:[#allocation4 + $0x90] sm:$0xff]
        %v897 = vld [vmem:[#allocation4 + $0x98] sm:$0xff]
        %v898 = vld [vmem:[#allocation4 + $0xa0] sm:$0xff]
        %v899 = vld [vmem:[#allocation4 + $0xa8] sm:$0xff]
        %v900 = vld [vmem:[#allocation4 + $0xb0] sm:$0xff]
        %v901 = vld [vmem:[#allocation4 + $0xb8] sm:$0xff]
        %v902 = vld [vmem:[#allocation4 + $0xc0] sm:$0xff]
        %v903 = vld [vmem:[#allocation4 + $0xc8] sm:$0xff]
        %v904 = vld [vmem:[#allocation4 + $0xd0] sm:$0xff]
        %v905 = vld [vmem:[#allocation4 + $0xd8] sm:$0xff]
        %v906 = vld [vmem:[#allocation4 + $0xe0] sm:$0xff]
        %v907 = vld [vmem:[#allocation4 + $0xe8] sm:$0xff]
        %v908 = vld [vmem:[#allocation4 + $0xf0] sm:$0xff]
        %v909 = vld [vmem:[#allocation4 + $0xf8] sm:$0xff]
        %v910 = vld [vmem:[#allocation4 + $0x100] sm:$0xff]
        %v911 = vld [vmem:[#allocation4 + $0x108] sm:$0xff]
        %v912 = vld [vmem:[#allocation4 + $0x110] sm:$0xff]
        %v913 = vld [vmem:[#allocation4 + $0x118] sm:$0xff]
        %v914 = vld [vmem:[#allocation4 + $0x120] sm:$0xff]
        %v915 = vld [vmem:[#allocation4 + $0x128] sm:$0xff]
        %v916 = vld [vmem:[#allocation4 + $0x130] sm:$0xff]
        %v917 = vld [vmem:[#allocation4 + $0x138] sm:$0xff]
        %v918 = vld [vmem:[#allocation4 + $0x140] sm:$0xff]
        %v919 = vld [vmem:[#allocation4 + $0x148] sm:$0xff]
        %v920 = vld [vmem:[#allocation4 + $0x150] sm:$0xff]
        %v921 = vld [vmem:[#allocation4 + $0x158] sm:$0xff]
        %v922 = vld [vmem:[#allocation4 + $0x160] sm:$0xff]
        %v923 = vld [vmem:[#allocation4 + $0x168] sm:$0xff]
        %v924 = vld [vmem:[#allocation4 + $0x170] sm:$0xff]
        %v925 = vld [vmem:[#allocation4 + $0x178] sm:$0xff]
        %v926 = vld [vmem:[#allocation4 + $0x180] sm:$0xff]
        %v927 = vld [vmem:[#allocation4 + $0x188] sm:$0xff]
        %v928 = vld [vmem:[#allocation4 + $0x190] sm:$0xff]
        %v929 = vld [vmem:[#allocation4 + $0x198] sm:$0xff]
        %v930 = vld [vmem:[#allocation4 + $0x1a0] sm:$0xff]
        %v931 = vld [vmem:[#allocation4 + $0x1a8] sm:$0xff]
        %v932 = vld [vmem:[#allocation4 + $0x1b0] sm:$0xff]
        %v933 = vld [vmem:[#allocation4 + $0x1b8] sm:$0xff]
        %v934 = vld [vmem:[#allocation4 + $0x1c0] sm:$0xff]
        %v935 = vld [vmem:[#allocation4 + $0x1c8] sm:$0xff]
        %v936 = vld [vmem:[#allocation4 + $0x1d0] sm:$0xff]
        %v937 = vld [vmem:[#allocation4 + $0x1d8] sm:$0xff]
        %v938 = vld [vmem:[#allocation4 + $0x1e0] sm:$0xff]
        %v939 = vld [vmem:[#allocation4 + $0x1e8] sm:$0xff]
        %v940 = vld [vmem:[#allocation4 + $0x1f0] sm:$0xff]
        %v941 = vld [vmem:[#allocation4 + $0x1f8] sm:$0xff]
        %942 = vmatpush.msra.mxu0 %v938
        %943 = vmatpush.msra.mxu0 %v934
        %944 = vmatpush.msra.mxu0 %v930
        %945 = vmatpush.msra.mxu0 %v926
        %946 = vmatpush.msra.mxu0 %v922
        %947 = vmatpush.msra.mxu0 %v918
        %948 = vmatpush.msra.mxu0 %v914
        %949 = vmatpush.msra.mxu0 %v910
        %950 = vmatpush.msra.mxu0 %v906
        %951 = vmatpush.msra.mxu0 %v902
        %952 = vmatpush.msra.mxu0 %v898
        %953 = vmatpush.msra.mxu0 %v894
        %954 = vmatpush.msra.mxu0 %v890
        %955 = vmatpush.msra.mxu0 %v886
        %956 = vmatpush.msra.mxu0 %v882
        %957 = vmatpush.msra.mxu0 %v878
        %958 = vmatmul.f32.gmra.mxu0 %v876
        %v959 = vpop.f32.mrf.mxu0
        %v960 = vadd.f32 0.0, %v959
        %961 = vdwg.mxu0
        %962 = vmatpush.msra.mxu0 %v939
        %963 = vmatpush.msra.mxu0 %v935
        %964 = vmatpush.msra.mxu0 %v931
        %965 = vmatpush.msra.mxu0 %v927
        %966 = vmatpush.msra.mxu0 %v923
        %967 = vmatpush.msra.mxu0 %v919
        %968 = vmatpush.msra.mxu0 %v915
        %969 = vmatpush.msra.mxu0 %v911
        %970 = vmatpush.msra.mxu0 %v907
        %971 = vmatpush.msra.mxu0 %v903
        %972 = vmatpush.msra.mxu0 %v899
        %973 = vmatpush.msra.mxu0 %v895
        %974 = vmatpush.msra.mxu0 %v891
        %975 = vmatpush.msra.mxu0 %v887
        %976 = vmatpush.msra.mxu0 %v883
        %977 = vmatpush.msra.mxu0 %v879
        %978 = vmatmul.f32.gmra.mxu0 %v876
        %v979 = vpop.f32.mrf.mxu0
        %v980 = vadd.f32 0.0, %v979
        %981 = vdwg.mxu0
        %982 = vmatpush.msra.mxu0 %v940
        %983 = vmatpush.msra.mxu0 %v936
        %984 = vmatpush.msra.mxu0 %v932
        %985 = vmatpush.msra.mxu0 %v928
        %986 = vmatpush.msra.mxu0 %v924
        %987 = vmatpush.msra.mxu0 %v920
        %988 = vmatpush.msra.mxu0 %v916
        %989 = vmatpush.msra.mxu0 %v912
        %990 = vmatpush.msra.mxu0 %v908
        %991 = vmatpush.msra.mxu0 %v904
        %992 = vmatpush.msra.mxu0 %v900
        %993 = vmatpush.msra.mxu0 %v896
        %994 = vmatpush.msra.mxu0 %v892
        %995 = vmatpush.msra.mxu0 %v888
        %996 = vmatpush.msra.mxu0 %v884
        %997 = vmatpush.msra.mxu0 %v880
        %998 = vmatmul.f32.gmra.mxu0 %v876
        %v999 = vpop.f32.mrf.mxu0
        %v1000 = vadd.f32 0.0, %v999
        %1001 = vdwg.mxu0
        %1002 = vmatpush.msra.mxu0 %v941
        %1003 = vmatpush.msra.mxu0 %v937
        %1004 = vmatpush.msra.mxu0 %v933
        %1005 = vmatpush.msra.mxu0 %v929
        %1006 = vmatpush.msra.mxu0 %v925
        %1007 = vmatpush.msra.mxu0 %v921
        %1008 = vmatpush.msra.mxu0 %v917
        %1009 = vmatpush.msra.mxu0 %v913
        %1010 = vmatpush.msra.mxu0 %v909
        %1011 = vmatpush.msra.mxu0 %v905
        %1012 = vmatpush.msra.mxu0 %v901
        %1013 = vmatpush.msra.mxu0 %v897
        %1014 = vmatpush.msra.mxu0 %v893
        %1015 = vmatpush.msra.mxu0 %v889
        %1016 = vmatpush.msra.mxu0 %v885
        %1017 = vmatpush.msra.mxu0 %v881
        %1018 = vmatmul.f32.gmra.mxu0 %v876
        %v1019 = vpop.f32.mrf.mxu0
        %v1020 = vadd.f32 0.0, %v1019
        %1021 = vdwg.mxu0
        %v1022 = vld [vmem:[#allocation7] sm:$0xff]
        %v1023 = vld [vmem:[#allocation7 + $0x8] sm:$0xff]
        %v1024 = vld [vmem:[#allocation7 + $0x10] sm:$0xff]
        %v1025 = vld [vmem:[#allocation7 + $0x18] sm:$0xff]
        %v1026 = vld [vmem:[#allocation7 + $0x20] sm:$0xff]
        %v1027 = vld [vmem:[#allocation7 + $0x28] sm:$0xff]
        %v1028 = vld [vmem:[#allocation7 + $0x30] sm:$0xff]
        %v1029 = vld [vmem:[#allocation7 + $0x38] sm:$0xff]
        %v1030 = vld [vmem:[#allocation7 + $0x40] sm:$0xff]
        %v1031 = vld [vmem:[#allocation7 + $0x48] sm:$0xff]
        %v1032 = vld [vmem:[#allocation7 + $0x50] sm:$0xff]
        %v1033 = vld [vmem:[#allocation7 + $0x58] sm:$0xff]
        %v1034 = vld [vmem:[#allocation7 + $0x60] sm:$0xff]
        %v1035 = vld [vmem:[#allocation7 + $0x68] sm:$0xff]
        %v1036 = vld [vmem:[#allocation7 + $0x70] sm:$0xff]
        %v1037 = vld [vmem:[#allocation7 + $0x78] sm:$0xff]
        %v1038 = vld [vmem:[#allocation7 + $0x80] sm:$0xff]
        %v1039 = vld [vmem:[#allocation7 + $0x88] sm:$0xff]
        %v1040 = vld [vmem:[#allocation7 + $0x90] sm:$0xff]
        %v1041 = vld [vmem:[#allocation7 + $0x98] sm:$0xff]
        %v1042 = vld [vmem:[#allocation7 + $0xa0] sm:$0xff]
        %v1043 = vld [vmem:[#allocation7 + $0xa8] sm:$0xff]
        %v1044 = vld [vmem:[#allocation7 + $0xb0] sm:$0xff]
        %v1045 = vld [vmem:[#allocation7 + $0xb8] sm:$0xff]
        %v1046 = vld [vmem:[#allocation7 + $0xc0] sm:$0xff]
        %v1047 = vld [vmem:[#allocation7 + $0xc8] sm:$0xff]
        %v1048 = vld [vmem:[#allocation7 + $0xd0] sm:$0xff]
        %v1049 = vld [vmem:[#allocation7 + $0xd8] sm:$0xff]
        %v1050 = vld [vmem:[#allocation7 + $0xe0] sm:$0xff]
        %v1051 = vld [vmem:[#allocation7 + $0xe8] sm:$0xff]
        %v1052 = vld [vmem:[#allocation7 + $0xf0] sm:$0xff]
        %v1053 = vld [vmem:[#allocation7 + $0xf8] sm:$0xff]
        %v1054 = vld [vmem:[#allocation7 + $0x100] sm:$0xff]
        %v1055 = vld [vmem:[#allocation7 + $0x108] sm:$0xff]
        %v1056 = vld [vmem:[#allocation7 + $0x110] sm:$0xff]
        %v1057 = vld [vmem:[#allocation7 + $0x118] sm:$0xff]
        %v1058 = vld [vmem:[#allocation7 + $0x120] sm:$0xff]
        %v1059 = vld [vmem:[#allocation7 + $0x128] sm:$0xff]
        %v1060 = vld [vmem:[#allocation7 + $0x130] sm:$0xff]
        %v1061 = vld [vmem:[#allocation7 + $0x138] sm:$0xff]
        %v1062 = vld [vmem:[#allocation7 + $0x140] sm:$0xff]
        %v1063 = vld [vmem:[#allocation7 + $0x148] sm:$0xff]
        %v1064 = vld [vmem:[#allocation7 + $0x150] sm:$0xff]
        %v1065 = vld [vmem:[#allocation7 + $0x158] sm:$0xff]
        %v1066 = vld [vmem:[#allocation7 + $0x160] sm:$0xff]
        %v1067 = vld [vmem:[#allocation7 + $0x168] sm:$0xff]
        %v1068 = vld [vmem:[#allocation7 + $0x170] sm:$0xff]
        %v1069 = vld [vmem:[#allocation7 + $0x178] sm:$0xff]
        %1070 = vmatpush.msra.mxu0 %v1067
        %1071 = vmatpush.msra.mxu0 %v1064
        %1072 = vmatpush.msra.mxu0 %v1061
        %1073 = vmatpush.msra.mxu0 %v1058
        %1074 = vmatpush.msra.mxu0 %v1055
        %1075 = vmatpush.msra.mxu0 %v1052
        %1076 = vmatpush.msra.mxu0 %v1049
        %1077 = vmatpush.msra.mxu0 %v1046
        %1078 = vmatpush.msra.mxu0 %v1043
        %1079 = vmatpush.msra.mxu0 %v1040
        %1080 = vmatpush.msra.mxu0 %v1037
        %1081 = vmatpush.msra.mxu0 %v1034
        %1082 = vmatpush.msra.mxu0 %v1031
        %1083 = vmatpush.msra.mxu0 %v1028
        %1084 = vmatpush.msra.mxu0 %v1025
        %1085 = vmatpush.msra.mxu0 %v1022
        %1086 = vmatmul.f32.gmra.mxu0 %v873
        %v1087 = vpop.f32.mrf.mxu0
        %v1088 = vadd.f32 0.0, %v1087
        %1089 = vdwg.mxu0
        %1090 = vmatpush.msra.mxu0 %v1068
        %1091 = vmatpush.msra.mxu0 %v1065
        %1092 = vmatpush.msra.mxu0 %v1062
        %1093 = vmatpush.msra.mxu0 %v1059
        %1094 = vmatpush.msra.mxu0 %v1056
        %1095 = vmatpush.msra.mxu0 %v1053
        %1096 = vmatpush.msra.mxu0 %v1050
        %1097 = vmatpush.msra.mxu0 %v1047
        %1098 = vmatpush.msra.mxu0 %v1044
        %1099 = vmatpush.msra.mxu0 %v1041
        %1100 = vmatpush.msra.mxu0 %v1038
        %1101 = vmatpush.msra.mxu0 %v1035
        %1102 = vmatpush.msra.mxu0 %v1032
        %1103 = vmatpush.msra.mxu0 %v1029
        %1104 = vmatpush.msra.mxu0 %v1026
        %1105 = vmatpush.msra.mxu0 %v1023
        %1106 = vmatmul.f32.gmra.mxu0 %v873
        %v1107 = vpop.f32.mrf.mxu0
        %v1108 = vadd.f32 0.0, %v1107
        %1109 = vdwg.mxu0
        %1110 = vmatpush.msra.mxu0 %v1069
        %1111 = vmatpush.msra.mxu0 %v1066
        %1112 = vmatpush.msra.mxu0 %v1063
        %1113 = vmatpush.msra.mxu0 %v1060
        %1114 = vmatpush.msra.mxu0 %v1057
        %1115 = vmatpush.msra.mxu0 %v1054
        %1116 = vmatpush.msra.mxu0 %v1051
        %1117 = vmatpush.msra.mxu0 %v1048
        %1118 = vmatpush.msra.mxu0 %v1045
        %1119 = vmatpush.msra.mxu0 %v1042
        %1120 = vmatpush.msra.mxu0 %v1039
        %1121 = vmatpush.msra.mxu0 %v1036
        %1122 = vmatpush.msra.mxu0 %v1033
        %1123 = vmatpush.msra.mxu0 %v1030
        %1124 = vmatpush.msra.mxu0 %v1027
        %1125 = vmatpush.msra.mxu0 %v1024
        %1126 = vmatmul.f32.gmra.mxu0 %v873
        %v1127 = vpop.f32.mrf.mxu0
        %v1128 = vadd.f32 0.0, %v1127
        %1129 = vdwg.mxu0
        %v1130 = vadd.f32 %v453, %v960
        %v1131 = vadd.f32 %v482, %v980
        %v1132 = vadd.f32 %v511, %v1000
        %v1133 = vadd.f32 %v1130, %v1088
        %v1134 = vadd.f32 %v1131, %v1108
        %v1135 = vadd.f32 %v1132, %v1128
        %v1136 = vxor.u32 %v1133, 2147483648
        %v1137 = vxor.u32 %v1134, 2147483648
        %v1138 = vxor.u32 %v1135, 2147483648
        %v1139 = vmul.f32 %v1136, 1.442695
        %v1140 = vpow.pop %v1139
        %v1141 = vmul.f32 %v1137, 1.442695
        %v1142 = vpow.pop %v1141
        %v1143 = vmul.f32 %v1138, 1.442695
        %v1144 = vpow.pop %v1143
        %v1145 = vadd.f32 %v1140, 1.0
        %v1146 = vadd.f32 %v1142, 1.0
        %v1147 = vadd.f32 %v1144, 1.0
        %v1148 = vrcp.pop %v1145
        %v1149 = vmul.f32 %v1145, %v1148
        %v1150 = vsub.f32 1.0, %v1149
        %v1151 = vmul.f32 %v1148, %v1150
        %v1152 = vadd.f32 %v1148, %v1151
        %vm1153 = vweird.f32 %v1145
        %vm1154 = vweird.f32 %v1148
        %vm1155 = vmor %vm1153, %vm1154
        %v1156 = vsel %vm1155, %v1148, %v1152
        %v1157 = vand.u32 2147483647, %v1145
        %vm1158 = vcmp.eq.f32.partialorder %v1157, 8.507059e+37
        %v1159 = vand.u32 %v1145, 2147483648
        %v1160 = vor.u32 1.1754944e-38, %v1159
        %v1161 = vsel %vm1158, %v1160, %v1156
        %v1162 = vmul.f32 1.0, %v1161
        %v1163 = vrcp.pop %v1146
        %v1164 = vmul.f32 %v1146, %v1163
        %v1165 = vsub.f32 1.0, %v1164
        %v1166 = vmul.f32 %v1163, %v1165
        %v1167 = vadd.f32 %v1163, %v1166
        %vm1168 = vweird.f32 %v1146
        %vm1169 = vweird.f32 %v1163
        %vm1170 = vmor %vm1168, %vm1169
        %v1171 = vsel %vm1170, %v1163, %v1167
        %v1172 = vand.u32 2147483647, %v1146
        %vm1173 = vcmp.eq.f32.partialorder %v1172, 8.507059e+37
        %v1174 = vand.u32 %v1146, 2147483648
        %v1175 = vor.u32 1.1754944e-38, %v1174
        %v1176 = vsel %vm1173, %v1175, %v1171
        %v1177 = vmul.f32 1.0, %v1176
        %v1178 = vrcp.pop %v1147
        %v1179 = vmul.f32 %v1147, %v1178
        %v1180 = vsub.f32 1.0, %v1179
        %v1181 = vmul.f32 %v1178, %v1180
        %v1182 = vadd.f32 %v1178, %v1181
        %vm1183 = vweird.f32 %v1147
        %vm1184 = vweird.f32 %v1178
        %vm1185 = vmor %vm1183, %vm1184
        %v1186 = vsel %vm1185, %v1178, %v1182
        %v1187 = vand.u32 2147483647, %v1147
        %vm1188 = vcmp.eq.f32.partialorder %v1187, 8.507059e+37
        %v1189 = vand.u32 %v1147, 2147483648
        %v1190 = vor.u32 1.1754944e-38, %v1189
        %v1191 = vsel %vm1188, %v1190, %v1186
        %v1192 = vmul.f32 1.0, %v1191
        %v1193 = vadd.f32 %v1020, %v550
        %v1194 = vtanh.pop %v1193
        %v1195 = vmul.f32 %v1177, %v873
        %v1196 = vmul.f32 %v1162, %v1194
        %v1197 = vadd.f32 %v1195, %v1196
        %v1198 = vtanh.pop %v1197
        %v1199 = vadd.f32 %v1198, %v540
        %v1200 = vmul.f32 %v1192, %v1199
        %s1201 = scalar_lea.vmem %s378, 8 [#allocation9]
        %1202 = vst [vmem:[%s1201] sm:$0xff] %v1200
        %v1203 = vld [vmem:[#allocation4] sm:$0xff]
        %v1204 = vld [vmem:[#allocation4 + $0x8] sm:$0xff]
        %v1205 = vld [vmem:[#allocation4 + $0x10] sm:$0xff]
        %v1206 = vld [vmem:[#allocation4 + $0x18] sm:$0xff]
        %v1207 = vld [vmem:[#allocation4 + $0x20] sm:$0xff]
        %v1208 = vld [vmem:[#allocation4 + $0x28] sm:$0xff]
        %v1209 = vld [vmem:[#allocation4 + $0x30] sm:$0xff]
        %v1210 = vld [vmem:[#allocation4 + $0x38] sm:$0xff]
        %v1211 = vld [vmem:[#allocation4 + $0x40] sm:$0xff]
        %v1212 = vld [vmem:[#allocation4 + $0x48] sm:$0xff]
        %v1213 = vld [vmem:[#allocation4 + $0x50] sm:$0xff]
        %v1214 = vld [vmem:[#allocation4 + $0x58] sm:$0xff]
        %v1215 = vld [vmem:[#allocation4 + $0x60] sm:$0xff]
        %v1216 = vld [vmem:[#allocation4 + $0x68] sm:$0xff]
        %v1217 = vld [vmem:[#allocation4 + $0x70] sm:$0xff]
        %v1218 = vld [vmem:[#allocation4 + $0x78] sm:$0xff]
        %v1219 = vld [vmem:[#allocation4 + $0x80] sm:$0xff]
        %v1220 = vld [vmem:[#allocation4 + $0x88] sm:$0xff]
        %v1221 = vld [vmem:[#allocation4 + $0x90] sm:$0xff]
        %v1222 = vld [vmem:[#allocation4 + $0x98] sm:$0xff]
        %v1223 = vld [vmem:[#allocation4 + $0xa0] sm:$0xff]
        %v1224 = vld [vmem:[#allocation4 + $0xa8] sm:$0xff]
        %v1225 = vld [vmem:[#allocation4 + $0xb0] sm:$0xff]
        %v1226 = vld [vmem:[#allocation4 + $0xb8] sm:$0xff]
        %v1227 = vld [vmem:[#allocation4 + $0xc0] sm:$0xff]
        %v1228 = vld [vmem:[#allocation4 + $0xc8] sm:$0xff]
        %v1229 = vld [vmem:[#allocation4 + $0xd0] sm:$0xff]
        %v1230 = vld [vmem:[#allocation4 + $0xd8] sm:$0xff]
        %v1231 = vld [vmem:[#allocation4 + $0xe0] sm:$0xff]
        %v1232 = vld [vmem:[#allocation4 + $0xe8] sm:$0xff]
        %v1233 = vld [vmem:[#allocation4 + $0xf0] sm:$0xff]
        %v1234 = vld [vmem:[#allocation4 + $0xf8] sm:$0xff]
        %v1235 = vld [vmem:[#allocation4 + $0x100] sm:$0xff]
        %v1236 = vld [vmem:[#allocation4 + $0x108] sm:$0xff]
        %v1237 = vld [vmem:[#allocation4 + $0x110] sm:$0xff]
        %v1238 = vld [vmem:[#allocation4 + $0x118] sm:$0xff]
        %v1239 = vld [vmem:[#allocation4 + $0x120] sm:$0xff]
        %v1240 = vld [vmem:[#allocation4 + $0x128] sm:$0xff]
        %v1241 = vld [vmem:[#allocation4 + $0x130] sm:$0xff]
        %v1242 = vld [vmem:[#allocation4 + $0x138] sm:$0xff]
        %v1243 = vld [vmem:[#allocation4 + $0x140] sm:$0xff]
        %v1244 = vld [vmem:[#allocation4 + $0x148] sm:$0xff]
        %v1245 = vld [vmem:[#allocation4 + $0x150] sm:$0xff]
        %v1246 = vld [vmem:[#allocation4 + $0x158] sm:$0xff]
        %v1247 = vld [vmem:[#allocation4 + $0x160] sm:$0xff]
        %v1248 = vld [vmem:[#allocation4 + $0x168] sm:$0xff]
        %v1249 = vld [vmem:[#allocation4 + $0x170] sm:$0xff]
        %v1250 = vld [vmem:[#allocation4 + $0x178] sm:$0xff]
        %v1251 = vld [vmem:[#allocation4 + $0x180] sm:$0xff]
        %v1252 = vld [vmem:[#allocation4 + $0x188] sm:$0xff]
        %v1253 = vld [vmem:[#allocation4 + $0x190] sm:$0xff]
        %v1254 = vld [vmem:[#allocation4 + $0x198] sm:$0xff]
        %v1255 = vld [vmem:[#allocation4 + $0x1a0] sm:$0xff]
        %v1256 = vld [vmem:[#allocation4 + $0x1a8] sm:$0xff]
        %v1257 = vld [vmem:[#allocation4 + $0x1b0] sm:$0xff]
        %v1258 = vld [vmem:[#allocation4 + $0x1b8] sm:$0xff]
        %v1259 = vld [vmem:[#allocation4 + $0x1c0] sm:$0xff]
        %v1260 = vld [vmem:[#allocation4 + $0x1c8] sm:$0xff]
        %v1261 = vld [vmem:[#allocation4 + $0x1d0] sm:$0xff]
        %v1262 = vld [vmem:[#allocation4 + $0x1d8] sm:$0xff]
        %v1263 = vld [vmem:[#allocation4 + $0x1e0] sm:$0xff]
        %v1264 = vld [vmem:[#allocation4 + $0x1e8] sm:$0xff]
        %v1265 = vld [vmem:[#allocation4 + $0x1f0] sm:$0xff]
        %v1266 = vld [vmem:[#allocation4 + $0x1f8] sm:$0xff]
        %1267 = vmatpush.msra.mxu0 %v1263
        %1268 = vmatpush.msra.mxu0 %v1259
        %1269 = vmatpush.msra.mxu0 %v1255
        %1270 = vmatpush.msra.mxu0 %v1251
        %1271 = vmatpush.msra.mxu0 %v1247
        %1272 = vmatpush.msra.mxu0 %v1243
        %1273 = vmatpush.msra.mxu0 %v1239
        %1274 = vmatpush.msra.mxu0 %v1235
        %1275 = vmatpush.msra.mxu0 %v1231
        %1276 = vmatpush.msra.mxu0 %v1227
        %1277 = vmatpush.msra.mxu0 %v1223
        %1278 = vmatpush.msra.mxu0 %v1219
        %1279 = vmatpush.msra.mxu0 %v1215
        %1280 = vmatpush.msra.mxu0 %v1211
        %1281 = vmatpush.msra.mxu0 %v1207
        %1282 = vmatpush.msra.mxu0 %v1203
        %1283 = vmatmul.f32.gmra.mxu0 %v1200
        %v1284 = vpop.f32.mrf.mxu0
        %v1285 = vadd.f32 0.0, %v1284
        %1286 = vdwg.mxu0
        %1287 = vmatpush.msra.mxu0 %v1264
        %1288 = vmatpush.msra.mxu0 %v1260
        %1289 = vmatpush.msra.mxu0 %v1256
        %1290 = vmatpush.msra.mxu0 %v1252
        %1291 = vmatpush.msra.mxu0 %v1248
        %1292 = vmatpush.msra.mxu0 %v1244
        %1293 = vmatpush.msra.mxu0 %v1240
        %1294 = vmatpush.msra.mxu0 %v1236
        %1295 = vmatpush.msra.mxu0 %v1232
        %1296 = vmatpush.msra.mxu0 %v1228
        %1297 = vmatpush.msra.mxu0 %v1224
        %1298 = vmatpush.msra.mxu0 %v1220
        %1299 = vmatpush.msra.mxu0 %v1216
        %1300 = vmatpush.msra.mxu0 %v1212
        %1301 = vmatpush.msra.mxu0 %v1208
        %1302 = vmatpush.msra.mxu0 %v1204
        %1303 = vmatmul.f32.gmra.mxu0 %v1200
        %v1304 = vpop.f32.mrf.mxu0
        %v1305 = vadd.f32 0.0, %v1304
        %1306 = vdwg.mxu0
        %1307 = vmatpush.msra.mxu0 %v1265
        %1308 = vmatpush.msra.mxu0 %v1261
        %1309 = vmatpush.msra.mxu0 %v1257
        %1310 = vmatpush.msra.mxu0 %v1253
        %1311 = vmatpush.msra.mxu0 %v1249
        %1312 = vmatpush.msra.mxu0 %v1245
        %1313 = vmatpush.msra.mxu0 %v1241
        %1314 = vmatpush.msra.mxu0 %v1237
        %1315 = vmatpush.msra.mxu0 %v1233
        %1316 = vmatpush.msra.mxu0 %v1229
        %1317 = vmatpush.msra.mxu0 %v1225
        %1318 = vmatpush.msra.mxu0 %v1221
        %1319 = vmatpush.msra.mxu0 %v1217
        %1320 = vmatpush.msra.mxu0 %v1213
        %1321 = vmatpush.msra.mxu0 %v1209
        %1322 = vmatpush.msra.mxu0 %v1205
        %1323 = vmatmul.f32.gmra.mxu0 %v1200
        %v1324 = vpop.f32.mrf.mxu0
        %v1325 = vadd.f32 0.0, %v1324
        %1326 = vdwg.mxu0
        %1327 = vmatpush.msra.mxu0 %v1266
        %1328 = vmatpush.msra.mxu0 %v1262
        %1329 = vmatpush.msra.mxu0 %v1258
        %1330 = vmatpush.msra.mxu0 %v1254
        %1331 = vmatpush.msra.mxu0 %v1250
        %1332 = vmatpush.msra.mxu0 %v1246
        %1333 = vmatpush.msra.mxu0 %v1242
        %1334 = vmatpush.msra.mxu0 %v1238
        %1335 = vmatpush.msra.mxu0 %v1234
        %1336 = vmatpush.msra.mxu0 %v1230
        %1337 = vmatpush.msra.mxu0 %v1226
        %1338 = vmatpush.msra.mxu0 %v1222
        %1339 = vmatpush.msra.mxu0 %v1218
        %1340 = vmatpush.msra.mxu0 %v1214
        %1341 = vmatpush.msra.mxu0 %v1210
        %1342 = vmatpush.msra.mxu0 %v1206
        %1343 = vmatmul.f32.gmra.mxu0 %v1200
        %v1344 = vpop.f32.mrf.mxu0
        %v1345 = vadd.f32 0.0, %v1344
        %1346 = vdwg.mxu0
        %v1347 = vld [vmem:[#allocation7] sm:$0xff]
        %v1348 = vld [vmem:[#allocation7 + $0x8] sm:$0xff]
        %v1349 = vld [vmem:[#allocation7 + $0x10] sm:$0xff]
        %v1350 = vld [vmem:[#allocation7 + $0x18] sm:$0xff]
        %v1351 = vld [vmem:[#allocation7 + $0x20] sm:$0xff]
        %v1352 = vld [vmem:[#allocation7 + $0x28] sm:$0xff]
        %v1353 = vld [vmem:[#allocation7 + $0x30] sm:$0xff]
        %v1354 = vld [vmem:[#allocation7 + $0x38] sm:$0xff]
        %v1355 = vld [vmem:[#allocation7 + $0x40] sm:$0xff]
        %v1356 = vld [vmem:[#allocation7 + $0x48] sm:$0xff]
        %v1357 = vld [vmem:[#allocation7 + $0x50] sm:$0xff]
        %v1358 = vld [vmem:[#allocation7 + $0x58] sm:$0xff]
        %v1359 = vld [vmem:[#allocation7 + $0x60] sm:$0xff]
        %v1360 = vld [vmem:[#allocation7 + $0x68] sm:$0xff]
        %v1361 = vld [vmem:[#allocation7 + $0x70] sm:$0xff]
        %v1362 = vld [vmem:[#allocation7 + $0x78] sm:$0xff]
        %v1363 = vld [vmem:[#allocation7 + $0x80] sm:$0xff]
        %v1364 = vld [vmem:[#allocation7 + $0x88] sm:$0xff]
        %v1365 = vld [vmem:[#allocation7 + $0x90] sm:$0xff]
        %v1366 = vld [vmem:[#allocation7 + $0x98] sm:$0xff]
        %v1367 = vld [vmem:[#allocation7 + $0xa0] sm:$0xff]
        %v1368 = vld [vmem:[#allocation7 + $0xa8] sm:$0xff]
        %v1369 = vld [vmem:[#allocation7 + $0xb0] sm:$0xff]
        %v1370 = vld [vmem:[#allocation7 + $0xb8] sm:$0xff]
        %v1371 = vld [vmem:[#allocation7 + $0xc0] sm:$0xff]
        %v1372 = vld [vmem:[#allocation7 + $0xc8] sm:$0xff]
        %v1373 = vld [vmem:[#allocation7 + $0xd0] sm:$0xff]
        %v1374 = vld [vmem:[#allocation7 + $0xd8] sm:$0xff]
        %v1375 = vld [vmem:[#allocation7 + $0xe0] sm:$0xff]
        %v1376 = vld [vmem:[#allocation7 + $0xe8] sm:$0xff]
        %v1377 = vld [vmem:[#allocation7 + $0xf0] sm:$0xff]
        %v1378 = vld [vmem:[#allocation7 + $0xf8] sm:$0xff]
        %v1379 = vld [vmem:[#allocation7 + $0x100] sm:$0xff]
        %v1380 = vld [vmem:[#allocation7 + $0x108] sm:$0xff]
        %v1381 = vld [vmem:[#allocation7 + $0x110] sm:$0xff]
        %v1382 = vld [vmem:[#allocation7 + $0x118] sm:$0xff]
        %v1383 = vld [vmem:[#allocation7 + $0x120] sm:$0xff]
        %v1384 = vld [vmem:[#allocation7 + $0x128] sm:$0xff]
        %v1385 = vld [vmem:[#allocation7 + $0x130] sm:$0xff]
        %v1386 = vld [vmem:[#allocation7 + $0x138] sm:$0xff]
        %v1387 = vld [vmem:[#allocation7 + $0x140] sm:$0xff]
        %v1388 = vld [vmem:[#allocation7 + $0x148] sm:$0xff]
        %v1389 = vld [vmem:[#allocation7 + $0x150] sm:$0xff]
        %v1390 = vld [vmem:[#allocation7 + $0x158] sm:$0xff]
        %v1391 = vld [vmem:[#allocation7 + $0x160] sm:$0xff]
        %v1392 = vld [vmem:[#allocation7 + $0x168] sm:$0xff]
        %v1393 = vld [vmem:[#allocation7 + $0x170] sm:$0xff]
        %v1394 = vld [vmem:[#allocation7 + $0x178] sm:$0xff]
        %1395 = vmatpush.msra.mxu0 %v1392
        %1396 = vmatpush.msra.mxu0 %v1389
        %1397 = vmatpush.msra.mxu0 %v1386
        %1398 = vmatpush.msra.mxu0 %v1383
        %1399 = vmatpush.msra.mxu0 %v1380
        %1400 = vmatpush.msra.mxu0 %v1377
        %1401 = vmatpush.msra.mxu0 %v1374
        %1402 = vmatpush.msra.mxu0 %v1371
        %1403 = vmatpush.msra.mxu0 %v1368
        %1404 = vmatpush.msra.mxu0 %v1365
        %1405 = vmatpush.msra.mxu0 %v1362
        %1406 = vmatpush.msra.mxu0 %v1359
        %1407 = vmatpush.msra.mxu0 %v1356
        %1408 = vmatpush.msra.mxu0 %v1353
        %1409 = vmatpush.msra.mxu0 %v1350
        %1410 = vmatpush.msra.mxu0 %v1347
        %1411 = vmatmul.f32.gmra.mxu0 %v1197
        %v1412 = vpop.f32.mrf.mxu0
        %v1413 = vadd.f32 0.0, %v1412
        %1414 = vdwg.mxu0
        %1415 = vmatpush.msra.mxu0 %v1393
        %1416 = vmatpush.msra.mxu0 %v1390
        %1417 = vmatpush.msra.mxu0 %v1387
        %1418 = vmatpush.msra.mxu0 %v1384
        %1419 = vmatpush.msra.mxu0 %v1381
        %1420 = vmatpush.msra.mxu0 %v1378
        %1421 = vmatpush.msra.mxu0 %v1375
        %1422 = vmatpush.msra.mxu0 %v1372
        %1423 = vmatpush.msra.mxu0 %v1369
        %1424 = vmatpush.msra.mxu0 %v1366
        %1425 = vmatpush.msra.mxu0 %v1363
        %1426 = vmatpush.msra.mxu0 %v1360
        %1427 = vmatpush.msra.mxu0 %v1357
        %1428 = vmatpush.msra.mxu0 %v1354
        %1429 = vmatpush.msra.mxu0 %v1351
        %1430 = vmatpush.msra.mxu0 %v1348
        %1431 = vmatmul.f32.gmra.mxu0 %v1197
        %v1432 = vpop.f32.mrf.mxu0
        %v1433 = vadd.f32 0.0, %v1432
        %1434 = vdwg.mxu0
        %1435 = vmatpush.msra.mxu0 %v1394
        %1436 = vmatpush.msra.mxu0 %v1391
        %1437 = vmatpush.msra.mxu0 %v1388
        %1438 = vmatpush.msra.mxu0 %v1385
        %1439 = vmatpush.msra.mxu0 %v1382
        %1440 = vmatpush.msra.mxu0 %v1379
        %1441 = vmatpush.msra.mxu0 %v1376
        %1442 = vmatpush.msra.mxu0 %v1373
        %1443 = vmatpush.msra.mxu0 %v1370
        %1444 = vmatpush.msra.mxu0 %v1367
        %1445 = vmatpush.msra.mxu0 %v1364
        %1446 = vmatpush.msra.mxu0 %v1361
        %1447 = vmatpush.msra.mxu0 %v1358
        %1448 = vmatpush.msra.mxu0 %v1355
        %1449 = vmatpush.msra.mxu0 %v1352
        %1450 = vmatpush.msra.mxu0 %v1349
        %1451 = vmatmul.f32.gmra.mxu0 %v1197
        %v1452 = vpop.f32.mrf.mxu0
        %v1453 = vadd.f32 0.0, %v1452
        %1454 = vdwg.mxu0
        %v1455 = vadd.f32 %v456, %v1285
        %v1456 = vadd.f32 %v485, %v1305
        %v1457 = vadd.f32 %v514, %v1325
        %v1458 = vadd.f32 %v1455, %v1413
        %v1459 = vadd.f32 %v1456, %v1433
        %v1460 = vadd.f32 %v1457, %v1453
        %v1461 = vxor.u32 %v1458, 2147483648
        %v1462 = vxor.u32 %v1459, 2147483648
        %v1463 = vxor.u32 %v1460, 2147483648
        %v1464 = vmul.f32 %v1461, 1.442695
        %v1465 = vpow.pop %v1464
        %v1466 = vmul.f32 %v1462, 1.442695
        %v1467 = vpow.pop %v1466
        %v1468 = vmul.f32 %v1463, 1.442695
        %v1469 = vpow.pop %v1468
        %v1470 = vadd.f32 %v1465, 1.0
        %v1471 = vadd.f32 %v1467, 1.0
        %v1472 = vadd.f32 %v1469, 1.0
        %v1473 = vrcp.pop %v1470
        %v1474 = vmul.f32 %v1470, %v1473
        %v1475 = vsub.f32 1.0, %v1474
        %v1476 = vmul.f32 %v1473, %v1475
        %v1477 = vadd.f32 %v1473, %v1476
        %vm1478 = vweird.f32 %v1470
        %vm1479 = vweird.f32 %v1473
        %vm1480 = vmor %vm1478, %vm1479
        %v1481 = vsel %vm1480, %v1473, %v1477
        %v1482 = vand.u32 2147483647, %v1470
        %vm1483 = vcmp.eq.f32.partialorder %v1482, 8.507059e+37
        %v1484 = vand.u32 %v1470, 2147483648
        %v1485 = vor.u32 1.1754944e-38, %v1484
        %v1486 = vsel %vm1483, %v1485, %v1481
        %v1487 = vmul.f32 1.0, %v1486
        %v1488 = vrcp.pop %v1471
        %v1489 = vmul.f32 %v1471, %v1488
        %v1490 = vsub.f32 1.0, %v1489
        %v1491 = vmul.f32 %v1488, %v1490
        %v1492 = vadd.f32 %v1488, %v1491
        %vm1493 = vweird.f32 %v1471
        %vm1494 = vweird.f32 %v1488
        %vm1495 = vmor %vm1493, %vm1494
        %v1496 = vsel %vm1495, %v1488, %v1492
        %v1497 = vand.u32 2147483647, %v1471
        %vm1498 = vcmp.eq.f32.partialorder %v1497, 8.507059e+37
        %v1499 = vand.u32 %v1471, 2147483648
        %v1500 = vor.u32 1.1754944e-38, %v1499
        %v1501 = vsel %vm1498, %v1500, %v1496
        %v1502 = vmul.f32 1.0, %v1501
        %v1503 = vrcp.pop %v1472
        %v1504 = vmul.f32 %v1472, %v1503
        %v1505 = vsub.f32 1.0, %v1504
        %v1506 = vmul.f32 %v1503, %v1505
        %v1507 = vadd.f32 %v1503, %v1506
        %vm1508 = vweird.f32 %v1472
        %vm1509 = vweird.f32 %v1503
        %vm1510 = vmor %vm1508, %vm1509
        %v1511 = vsel %vm1510, %v1503, %v1507
        %v1512 = vand.u32 2147483647, %v1472
        %vm1513 = vcmp.eq.f32.partialorder %v1512, 8.507059e+37
        %v1514 = vand.u32 %v1472, 2147483648
        %v1515 = vor.u32 1.1754944e-38, %v1514
        %v1516 = vsel %vm1513, %v1515, %v1511
        %v1517 = vmul.f32 1.0, %v1516
        %v1518 = vadd.f32 %v1345, %v550
        %v1519 = vtanh.pop %v1518
        %v1520 = vmul.f32 %v1502, %v1197
        %v1521 = vmul.f32 %v1487, %v1519
        %v1522 = vadd.f32 %v1520, %v1521
        %v1523 = vtanh.pop %v1522
        %v1524 = vadd.f32 %v1523, %v543
        %v1525 = vmul.f32 %v1517, %v1524
        %s1526 = scalar_lea.vmem %s378, 16 [#allocation9]
        %1527 = vst [vmem:[%s1526] sm:$0xff] %v1525
        %v1528 = vld [vmem:[#allocation4] sm:$0xff]
        %v1529 = vld [vmem:[#allocation4 + $0x8] sm:$0xff]
        %v1530 = vld [vmem:[#allocation4 + $0x10] sm:$0xff]
        %v1531 = vld [vmem:[#allocation4 + $0x18] sm:$0xff]
        %v1532 = vld [vmem:[#allocation4 + $0x20] sm:$0xff]
        %v1533 = vld [vmem:[#allocation4 + $0x28] sm:$0xff]
        %v1534 = vld [vmem:[#allocation4 + $0x30] sm:$0xff]
        %v1535 = vld [vmem:[#allocation4 + $0x38] sm:$0xff]
        %v1536 = vld [vmem:[#allocation4 + $0x40] sm:$0xff]
        %v1537 = vld [vmem:[#allocation4 + $0x48] sm:$0xff]
        %v1538 = vld [vmem:[#allocation4 + $0x50] sm:$0xff]
        %v1539 = vld [vmem:[#allocation4 + $0x58] sm:$0xff]
        %v1540 = vld [vmem:[#allocation4 + $0x60] sm:$0xff]
        %v1541 = vld [vmem:[#allocation4 + $0x68] sm:$0xff]
        %v1542 = vld [vmem:[#allocation4 + $0x70] sm:$0xff]
        %v1543 = vld [vmem:[#allocation4 + $0x78] sm:$0xff]
        %v1544 = vld [vmem:[#allocation4 + $0x80] sm:$0xff]
        %v1545 = vld [vmem:[#allocation4 + $0x88] sm:$0xff]
        %v1546 = vld [vmem:[#allocation4 + $0x90] sm:$0xff]
        %v1547 = vld [vmem:[#allocation4 + $0x98] sm:$0xff]
        %v1548 = vld [vmem:[#allocation4 + $0xa0] sm:$0xff]
        %v1549 = vld [vmem:[#allocation4 + $0xa8] sm:$0xff]
        %v1550 = vld [vmem:[#allocation4 + $0xb0] sm:$0xff]
        %v1551 = vld [vmem:[#allocation4 + $0xb8] sm:$0xff]
        %v1552 = vld [vmem:[#allocation4 + $0xc0] sm:$0xff]
        %v1553 = vld [vmem:[#allocation4 + $0xc8] sm:$0xff]
        %v1554 = vld [vmem:[#allocation4 + $0xd0] sm:$0xff]
        %v1555 = vld [vmem:[#allocation4 + $0xd8] sm:$0xff]
        %v1556 = vld [vmem:[#allocation4 + $0xe0] sm:$0xff]
        %v1557 = vld [vmem:[#allocation4 + $0xe8] sm:$0xff]
        %v1558 = vld [vmem:[#allocation4 + $0xf0] sm:$0xff]
        %v1559 = vld [vmem:[#allocation4 + $0xf8] sm:$0xff]
        %v1560 = vld [vmem:[#allocation4 + $0x100] sm:$0xff]
        %v1561 = vld [vmem:[#allocation4 + $0x108] sm:$0xff]
        %v1562 = vld [vmem:[#allocation4 + $0x110] sm:$0xff]
        %v1563 = vld [vmem:[#allocation4 + $0x118] sm:$0xff]
        %v1564 = vld [vmem:[#allocation4 + $0x120] sm:$0xff]
        %v1565 = vld [vmem:[#allocation4 + $0x128] sm:$0xff]
        %v1566 = vld [vmem:[#allocation4 + $0x130] sm:$0xff]
        %v1567 = vld [vmem:[#allocation4 + $0x138] sm:$0xff]
        %v1568 = vld [vmem:[#allocation4 + $0x140] sm:$0xff]
        %v1569 = vld [vmem:[#allocation4 + $0x148] sm:$0xff]
        %v1570 = vld [vmem:[#allocation4 + $0x150] sm:$0xff]
        %v1571 = vld [vmem:[#allocation4 + $0x158] sm:$0xff]
        %v1572 = vld [vmem:[#allocation4 + $0x160] sm:$0xff]
        %v1573 = vld [vmem:[#allocation4 + $0x168] sm:$0xff]
        %v1574 = vld [vmem:[#allocation4 + $0x170] sm:$0xff]
        %v1575 = vld [vmem:[#allocation4 + $0x178] sm:$0xff]
        %v1576 = vld [vmem:[#allocation4 + $0x180] sm:$0xff]
        %v1577 = vld [vmem:[#allocation4 + $0x188] sm:$0xff]
        %v1578 = vld [vmem:[#allocation4 + $0x190] sm:$0xff]
        %v1579 = vld [vmem:[#allocation4 + $0x198] sm:$0xff]
        %v1580 = vld [vmem:[#allocation4 + $0x1a0] sm:$0xff]
        %v1581 = vld [vmem:[#allocation4 + $0x1a8] sm:$0xff]
        %v1582 = vld [vmem:[#allocation4 + $0x1b0] sm:$0xff]
        %v1583 = vld [vmem:[#allocation4 + $0x1b8] sm:$0xff]
        %v1584 = vld [vmem:[#allocation4 + $0x1c0] sm:$0xff]
        %v1585 = vld [vmem:[#allocation4 + $0x1c8] sm:$0xff]
        %v1586 = vld [vmem:[#allocation4 + $0x1d0] sm:$0xff]
        %v1587 = vld [vmem:[#allocation4 + $0x1d8] sm:$0xff]
        %v1588 = vld [vmem:[#allocation4 + $0x1e0] sm:$0xff]
        %v1589 = vld [vmem:[#allocation4 + $0x1e8] sm:$0xff]
        %v1590 = vld [vmem:[#allocation4 + $0x1f0] sm:$0xff]
        %v1591 = vld [vmem:[#allocation4 + $0x1f8] sm:$0xff]
        %1592 = vmatpush.msra.mxu0 %v1588
        %1593 = vmatpush.msra.mxu0 %v1584
        %1594 = vmatpush.msra.mxu0 %v1580
        %1595 = vmatpush.msra.mxu0 %v1576
        %1596 = vmatpush.msra.mxu0 %v1572
        %1597 = vmatpush.msra.mxu0 %v1568
        %1598 = vmatpush.msra.mxu0 %v1564
        %1599 = vmatpush.msra.mxu0 %v1560
        %1600 = vmatpush.msra.mxu0 %v1556
        %1601 = vmatpush.msra.mxu0 %v1552
        %1602 = vmatpush.msra.mxu0 %v1548
        %1603 = vmatpush.msra.mxu0 %v1544
        %1604 = vmatpush.msra.mxu0 %v1540
        %1605 = vmatpush.msra.mxu0 %v1536
        %1606 = vmatpush.msra.mxu0 %v1532
        %1607 = vmatpush.msra.mxu0 %v1528
        %1608 = vmatmul.f32.gmra.mxu0 %v1525
        %v1609 = vpop.f32.mrf.mxu0
        %v1610 = vadd.f32 0.0, %v1609
        %1611 = vdwg.mxu0
        %1612 = vmatpush.msra.mxu0 %v1589
        %1613 = vmatpush.msra.mxu0 %v1585
        %1614 = vmatpush.msra.mxu0 %v1581
        %1615 = vmatpush.msra.mxu0 %v1577
        %1616 = vmatpush.msra.mxu0 %v1573
        %1617 = vmatpush.msra.mxu0 %v1569
        %1618 = vmatpush.msra.mxu0 %v1565
        %1619 = vmatpush.msra.mxu0 %v1561
        %1620 = vmatpush.msra.mxu0 %v1557
        %1621 = vmatpush.msra.mxu0 %v1553
        %1622 = vmatpush.msra.mxu0 %v1549
        %1623 = vmatpush.msra.mxu0 %v1545
        %1624 = vmatpush.msra.mxu0 %v1541
        %1625 = vmatpush.msra.mxu0 %v1537
        %1626 = vmatpush.msra.mxu0 %v1533
        %1627 = vmatpush.msra.mxu0 %v1529
        %1628 = vmatmul.f32.gmra.mxu0 %v1525
        %v1629 = vpop.f32.mrf.mxu0
        %v1630 = vadd.f32 0.0, %v1629
        %1631 = vdwg.mxu0
        %1632 = vmatpush.msra.mxu0 %v1590
        %1633 = vmatpush.msra.mxu0 %v1586
        %1634 = vmatpush.msra.mxu0 %v1582
        %1635 = vmatpush.msra.mxu0 %v1578
        %1636 = vmatpush.msra.mxu0 %v1574
        %1637 = vmatpush.msra.mxu0 %v1570
        %1638 = vmatpush.msra.mxu0 %v1566
        %1639 = vmatpush.msra.mxu0 %v1562
        %1640 = vmatpush.msra.mxu0 %v1558
        %1641 = vmatpush.msra.mxu0 %v1554
        %1642 = vmatpush.msra.mxu0 %v1550
        %1643 = vmatpush.msra.mxu0 %v1546
        %1644 = vmatpush.msra.mxu0 %v1542
        %1645 = vmatpush.msra.mxu0 %v1538
        %1646 = vmatpush.msra.mxu0 %v1534
        %1647 = vmatpush.msra.mxu0 %v1530
        %1648 = vmatmul.f32.gmra.mxu0 %v1525
        %v1649 = vpop.f32.mrf.mxu0
        %v1650 = vadd.f32 0.0, %v1649
        %1651 = vdwg.mxu0
        %1652 = vmatpush.msra.mxu0 %v1591
        %1653 = vmatpush.msra.mxu0 %v1587
        %1654 = vmatpush.msra.mxu0 %v1583
        %1655 = vmatpush.msra.mxu0 %v1579
        %1656 = vmatpush.msra.mxu0 %v1575
        %1657 = vmatpush.msra.mxu0 %v1571
        %1658 = vmatpush.msra.mxu0 %v1567
        %1659 = vmatpush.msra.mxu0 %v1563
        %1660 = vmatpush.msra.mxu0 %v1559
        %1661 = vmatpush.msra.mxu0 %v1555
        %1662 = vmatpush.msra.mxu0 %v1551
        %1663 = vmatpush.msra.mxu0 %v1547
        %1664 = vmatpush.msra.mxu0 %v1543
        %1665 = vmatpush.msra.mxu0 %v1539
        %1666 = vmatpush.msra.mxu0 %v1535
        %1667 = vmatpush.msra.mxu0 %v1531
        %1668 = vmatmul.f32.gmra.mxu0 %v1525
        %v1669 = vpop.f32.mrf.mxu0
        %v1670 = vadd.f32 0.0, %v1669
        %1671 = vdwg.mxu0
        %v1672 = vld [vmem:[#allocation7] sm:$0xff]
        %v1673 = vld [vmem:[#allocation7 + $0x8] sm:$0xff]
        %v1674 = vld [vmem:[#allocation7 + $0x10] sm:$0xff]
        %v1675 = vld [vmem:[#allocation7 + $0x18] sm:$0xff]
        %v1676 = vld [vmem:[#allocation7 + $0x20] sm:$0xff]
        %v1677 = vld [vmem:[#allocation7 + $0x28] sm:$0xff]
        %v1678 = vld [vmem:[#allocation7 + $0x30] sm:$0xff]
        %v1679 = vld [vmem:[#allocation7 + $0x38] sm:$0xff]
        %v1680 = vld [vmem:[#allocation7 + $0x40] sm:$0xff]
        %v1681 = vld [vmem:[#allocation7 + $0x48] sm:$0xff]
        %v1682 = vld [vmem:[#allocation7 + $0x50] sm:$0xff]
        %v1683 = vld [vmem:[#allocation7 + $0x58] sm:$0xff]
        %v1684 = vld [vmem:[#allocation7 + $0x60] sm:$0xff]
        %v1685 = vld [vmem:[#allocation7 + $0x68] sm:$0xff]
        %v1686 = vld [vmem:[#allocation7 + $0x70] sm:$0xff]
        %v1687 = vld [vmem:[#allocation7 + $0x78] sm:$0xff]
        %v1688 = vld [vmem:[#allocation7 + $0x80] sm:$0xff]
        %v1689 = vld [vmem:[#allocation7 + $0x88] sm:$0xff]
        %v1690 = vld [vmem:[#allocation7 + $0x90] sm:$0xff]
        %v1691 = vld [vmem:[#allocation7 + $0x98] sm:$0xff]
        %v1692 = vld [vmem:[#allocation7 + $0xa0] sm:$0xff]
        %v1693 = vld [vmem:[#allocation7 + $0xa8] sm:$0xff]
        %v1694 = vld [vmem:[#allocation7 + $0xb0] sm:$0xff]
        %v1695 = vld [vmem:[#allocation7 + $0xb8] sm:$0xff]
        %v1696 = vld [vmem:[#allocation7 + $0xc0] sm:$0xff]
        %v1697 = vld [vmem:[#allocation7 + $0xc8] sm:$0xff]
        %v1698 = vld [vmem:[#allocation7 + $0xd0] sm:$0xff]
        %v1699 = vld [vmem:[#allocation7 + $0xd8] sm:$0xff]
        %v1700 = vld [vmem:[#allocation7 + $0xe0] sm:$0xff]
        %v1701 = vld [vmem:[#allocation7 + $0xe8] sm:$0xff]
        %v1702 = vld [vmem:[#allocation7 + $0xf0] sm:$0xff]
        %v1703 = vld [vmem:[#allocation7 + $0xf8] sm:$0xff]
        %v1704 = vld [vmem:[#allocation7 + $0x100] sm:$0xff]
        %v1705 = vld [vmem:[#allocation7 + $0x108] sm:$0xff]
        %v1706 = vld [vmem:[#allocation7 + $0x110] sm:$0xff]
        %v1707 = vld [vmem:[#allocation7 + $0x118] sm:$0xff]
        %v1708 = vld [vmem:[#allocation7 + $0x120] sm:$0xff]
        %v1709 = vld [vmem:[#allocation7 + $0x128] sm:$0xff]
        %v1710 = vld [vmem:[#allocation7 + $0x130] sm:$0xff]
        %v1711 = vld [vmem:[#allocation7 + $0x138] sm:$0xff]
        %v1712 = vld [vmem:[#allocation7 + $0x140] sm:$0xff]
        %v1713 = vld [vmem:[#allocation7 + $0x148] sm:$0xff]
        %v1714 = vld [vmem:[#allocation7 + $0x150] sm:$0xff]
        %v1715 = vld [vmem:[#allocation7 + $0x158] sm:$0xff]
        %v1716 = vld [vmem:[#allocation7 + $0x160] sm:$0xff]
        %v1717 = vld [vmem:[#allocation7 + $0x168] sm:$0xff]
        %v1718 = vld [vmem:[#allocation7 + $0x170] sm:$0xff]
        %v1719 = vld [vmem:[#allocation7 + $0x178] sm:$0xff]
        %1720 = vmatpush.msra.mxu0 %v1717
        %1721 = vmatpush.msra.mxu0 %v1714
        %1722 = vmatpush.msra.mxu0 %v1711
        %1723 = vmatpush.msra.mxu0 %v1708
        %1724 = vmatpush.msra.mxu0 %v1705
        %1725 = vmatpush.msra.mxu0 %v1702
        %1726 = vmatpush.msra.mxu0 %v1699
        %1727 = vmatpush.msra.mxu0 %v1696
        %1728 = vmatpush.msra.mxu0 %v1693
        %1729 = vmatpush.msra.mxu0 %v1690
        %1730 = vmatpush.msra.mxu0 %v1687
        %1731 = vmatpush.msra.mxu0 %v1684
        %1732 = vmatpush.msra.mxu0 %v1681
        %1733 = vmatpush.msra.mxu0 %v1678
        %1734 = vmatpush.msra.mxu0 %v1675
        %1735 = vmatpush.msra.mxu0 %v1672
        %1736 = vmatmul.f32.gmra.mxu0 %v1522
        %v1737 = vpop.f32.mrf.mxu0
        %v1738 = vadd.f32 0.0, %v1737
        %1739 = vdwg.mxu0
        %1740 = vmatpush.msra.mxu0 %v1718
        %1741 = vmatpush.msra.mxu0 %v1715
        %1742 = vmatpush.msra.mxu0 %v1712
        %1743 = vmatpush.msra.mxu0 %v1709
        %1744 = vmatpush.msra.mxu0 %v1706
        %1745 = vmatpush.msra.mxu0 %v1703
        %1746 = vmatpush.msra.mxu0 %v1700
        %1747 = vmatpush.msra.mxu0 %v1697
        %1748 = vmatpush.msra.mxu0 %v1694
        %1749 = vmatpush.msra.mxu0 %v1691
        %1750 = vmatpush.msra.mxu0 %v1688
        %1751 = vmatpush.msra.mxu0 %v1685
        %1752 = vmatpush.msra.mxu0 %v1682
        %1753 = vmatpush.msra.mxu0 %v1679
        %1754 = vmatpush.msra.mxu0 %v1676
        %1755 = vmatpush.msra.mxu0 %v1673
        %1756 = vmatmul.f32.gmra.mxu0 %v1522
        %v1757 = vpop.f32.mrf.mxu0
        %v1758 = vadd.f32 0.0, %v1757
        %1759 = vdwg.mxu0
        %1760 = vmatpush.msra.mxu0 %v1719
        %1761 = vmatpush.msra.mxu0 %v1716
        %1762 = vmatpush.msra.mxu0 %v1713
        %1763 = vmatpush.msra.mxu0 %v1710
        %1764 = vmatpush.msra.mxu0 %v1707
        %1765 = vmatpush.msra.mxu0 %v1704
        %1766 = vmatpush.msra.mxu0 %v1701
        %1767 = vmatpush.msra.mxu0 %v1698
        %1768 = vmatpush.msra.mxu0 %v1695
        %1769 = vmatpush.msra.mxu0 %v1692
        %1770 = vmatpush.msra.mxu0 %v1689
        %1771 = vmatpush.msra.mxu0 %v1686
        %1772 = vmatpush.msra.mxu0 %v1683
        %1773 = vmatpush.msra.mxu0 %v1680
        %1774 = vmatpush.msra.mxu0 %v1677
        %1775 = vmatpush.msra.mxu0 %v1674
        %1776 = vmatmul.f32.gmra.mxu0 %v1522
        %v1777 = vpop.f32.mrf.mxu0
        %v1778 = vadd.f32 0.0, %v1777
        %1779 = vdwg.mxu0
        %v1780 = vadd.f32 %v459, %v1610
        %v1781 = vadd.f32 %v488, %v1630
        %v1782 = vadd.f32 %v517, %v1650
        %v1783 = vadd.f32 %v1780, %v1738
        %v1784 = vadd.f32 %v1781, %v1758
        %v1785 = vadd.f32 %v1782, %v1778
        %v1786 = vxor.u32 %v1783, 2147483648
        %v1787 = vxor.u32 %v1784, 2147483648
        %v1788 = vxor.u32 %v1785, 2147483648
        %v1789 = vmul.f32 %v1786, 1.442695
        %v1790 = vpow.pop %v1789
        %v1791 = vmul.f32 %v1787, 1.442695
        %v1792 = vpow.pop %v1791
        %v1793 = vmul.f32 %v1788, 1.442695
        %v1794 = vpow.pop %v1793
        %v1795 = vadd.f32 %v1790, 1.0
        %v1796 = vadd.f32 %v1792, 1.0
        %v1797 = vadd.f32 %v1794, 1.0
        %v1798 = vrcp.pop %v1795
        %v1799 = vmul.f32 %v1795, %v1798
        %v1800 = vsub.f32 1.0, %v1799
        %v1801 = vmul.f32 %v1798, %v1800
        %v1802 = vadd.f32 %v1798, %v1801
        %vm1803 = vweird.f32 %v1795
        %vm1804 = vweird.f32 %v1798
        %vm1805 = vmor %vm1803, %vm1804
        %v1806 = vsel %vm1805, %v1798, %v1802
        %v1807 = vand.u32 2147483647, %v1795
        %vm1808 = vcmp.eq.f32.partialorder %v1807, 8.507059e+37
        %v1809 = vand.u32 %v1795, 2147483648
        %v1810 = vor.u32 1.1754944e-38, %v1809
        %v1811 = vsel %vm1808, %v1810, %v1806
        %v1812 = vmul.f32 1.0, %v1811
        %v1813 = vrcp.pop %v1796
        %v1814 = vmul.f32 %v1796, %v1813
        %v1815 = vsub.f32 1.0, %v1814
        %v1816 = vmul.f32 %v1813, %v1815
        %v1817 = vadd.f32 %v1813, %v1816
        %vm1818 = vweird.f32 %v1796
        %vm1819 = vweird.f32 %v1813
        %vm1820 = vmor %vm1818, %vm1819
        %v1821 = vsel %vm1820, %v1813, %v1817
        %v1822 = vand.u32 2147483647, %v1796
        %vm1823 = vcmp.eq.f32.partialorder %v1822, 8.507059e+37
        %v1824 = vand.u32 %v1796, 2147483648
        %v1825 = vor.u32 1.1754944e-38, %v1824
        %v1826 = vsel %vm1823, %v1825, %v1821
        %v1827 = vmul.f32 1.0, %v1826
        %v1828 = vrcp.pop %v1797
        %v1829 = vmul.f32 %v1797, %v1828
        %v1830 = vsub.f32 1.0, %v1829
        %v1831 = vmul.f32 %v1828, %v1830
        %v1832 = vadd.f32 %v1828, %v1831
        %vm1833 = vweird.f32 %v1797
        %vm1834 = vweird.f32 %v1828
        %vm1835 = vmor %vm1833, %vm1834
        %v1836 = vsel %vm1835, %v1828, %v1832
        %v1837 = vand.u32 2147483647, %v1797
        %vm1838 = vcmp.eq.f32.partialorder %v1837, 8.507059e+37
        %v1839 = vand.u32 %v1797, 2147483648
        %v1840 = vor.u32 1.1754944e-38, %v1839
        %v1841 = vsel %vm1838, %v1840, %v1836
        %v1842 = vmul.f32 1.0, %v1841
        %v1843 = vadd.f32 %v1670, %v550
        %v1844 = vtanh.pop %v1843
        %v1845 = vmul.f32 %v1827, %v1522
        %v1846 = vmul.f32 %v1812, %v1844
        %v1847 = vadd.f32 %v1845, %v1846
        %v1848 = vtanh.pop %v1847
        %v1849 = vadd.f32 %v1848, %v546
        %v1850 = vmul.f32 %v1842, %v1849
        %s1851 = scalar_lea.vmem %s378, 24 [#allocation9]
        %1852 = vst [vmem:[%s1851] sm:$0xff] %v1850
        %1853 = vst [vmem:[#allocation2] sm:$0xff] %v1850
        %1854 = vst [vmem:[#allocation3] sm:$0xff] %v1847
        %p1855 = scmp.eq.s32.totalorder %s28, 1
        // Predicated region
        $region65: #{tpu_custom_call.1} parent=51 // pred_check
          %p1856 = pneg %p1855
        $region66: #{tpu_custom_call.1} parent=51 // pred_check_branch
          %1858 = sbr.rel (%p1856) target = $region68
        $region67: #{tpu_custom_call.1} parent=51 // pred_region
          %1859 = vst [vmem:[#allocation10] sm:$0xff] %v1850
          %1860 = vst [vmem:[#allocation12] sm:$0xff] %v1847
        $region68: #{tpu_custom_call.1} parent=51 // pred_fallthru
          _
        %s1861 = sand.u32 %s209, 1
        %s1862 = scalar_lea.sflag [#allocation6], %s1861
        %s1863 = sand.u32 %s209, 1
        %s1864 = smul.addr %s1863, 32
        %s1865 = scalar_lea.vmem [#allocation9], %s1864
        // Predicated region
        $region69: #{tpu_custom_call.1} parent=51 // pred_check
          %p1866 = pneg %p219
        $region70: #{tpu_custom_call.1} parent=51 // pred_check_branch
          %1868 = sbr.rel (%p1866) target = $region72
        $region71: #{tpu_custom_call.1} parent=51 // pred_region
          %s1869 = smul.u32 4, %s28
          %1871 = vsyncadd %s1862, 0
          %s1872 = smul.addr %s1869, 8
          %s1873 = scalar_lea.hbm %s8, %s1872
          %s1874 = sshll.u32 %s1865, 4
          %s1875 = int_to_ptr.vmem [resolvable:$true] %s1874
          %s1876 = sshll.u32 %s1873, 4
          %s1877 = int_to_ptr.hbm [resolvable:$true] %s1876
          %1882 = dma.vmem_to_hbm [thread:$0]  %s1875, 512, %s1877, %s1862, 128, 128, 8
        $region72: #{tpu_custom_call.1} parent=51 // pred_fallthru
          _
        // Predicated region
        $region73: #{tpu_custom_call.1} parent=51 // pred_check
          %p1883 = pneg %p240
        $region74: #{tpu_custom_call.1} parent=51 // pred_check_branch
          %1885 = sbr.rel (%p1883) target = $region76
        $region75: #{tpu_custom_call.1} parent=51 // pred_region
          %1887 = vsyncadd [#allocation11], 0
          %s1889 = sshll.u32 [#allocation10], 4
          %s1890 = int_to_ptr.vmem [resolvable:$true] %s1889
          %s1891 = sshll.u32 %s9, 4
          %s1892 = int_to_ptr.hbm [resolvable:$true] %s1891
          %1894 = dma.vmem_to_hbm [thread:$0]  %s1890, 128, %s1892, [#allocation11]
        $region76: #{tpu_custom_call.1} parent=51 // pred_fallthru
          _
        // Predicated region
        $region77: #{tpu_custom_call.1} parent=51 // pred_check
          %p1895 = pneg %p261
        $region78: #{tpu_custom_call.1} parent=51 // pred_check_branch
          %1897 = sbr.rel (%p1895) target = $region80
        $region79: #{tpu_custom_call.1} parent=51 // pred_region
          %1899 = vsyncadd [#allocation11], 0
          %s1901 = sshll.u32 [#allocation12], 4
          %s1902 = int_to_ptr.vmem [resolvable:$true] %s1901
          %s1903 = sshll.u32 %s10, 4
          %s1904 = int_to_ptr.hbm [resolvable:$true] %s1903
          %1906 = dma.vmem_to_hbm [thread:$0]  %s1902, 128, %s1904, [#allocation11]
        $region80: #{tpu_custom_call.1} parent=51 // pred_fallthru
          _
        // Predicated region
        $region81: #{tpu_custom_call.1} parent=51 // pred_check
          %p1907 = pneg %p240
        $region82: #{tpu_custom_call.1} parent=51 // pred_check_branch
          %1909 = sbr.rel (%p1907) target = $region84
        $region83: #{tpu_custom_call.1} parent=51 // pred_region
          %1911 = dma.done [#allocation11], 128
        $region84: #{tpu_custom_call.1} parent=51 // pred_fallthru
          _
        // Predicated region
        $region85: #{tpu_custom_call.1} parent=51 // pred_check
          %p1912 = pneg %p261
        $region86: #{tpu_custom_call.1} parent=51 // pred_check_branch
          %1914 = sbr.rel (%p1912) target = $region88
        $region87: #{tpu_custom_call.1} parent=51 // pred_region
          %1916 = dma.done [#allocation11], 128
        $region88: #{tpu_custom_call.1} parent=51 // pred_fallthru
          _
      $region52: #{tpu_custom_call.1} parent=5 // pred_fallthru
        _
      %p1917 = scmp.le.s32.totalorder 2, %s23
      // Predicated region
      $region89: #{tpu_custom_call.1} parent=5 // pred_check
        %p1918 = pneg %p1917
      $region90: #{tpu_custom_call.1} parent=5 // pred_check_branch
        %1920 = sbr.rel (%p1918) target = $region92
      $region91: #{tpu_custom_call.1} parent=5 // pred_region
        %s1921 = ssub.s32 %s23, 2
        // Predicated region
        $region93: #{tpu_custom_call.1} parent=91 // pred_check
          %p1922 = pneg %p225
        $region94: #{tpu_custom_call.1} parent=91 // pred_check_branch
          %1924 = sbr.rel (%p1922) target = $region96
        $region95: #{tpu_custom_call.1} parent=91 // pred_region
          %s1925 = sand.u32 %s210, 1
          %s1926 = scalar_lea.sflag [#allocation6], %s1925
          %s1927 = sand.u32 %s210, 1
          %s1928 = smul.addr %s1927, 32
          %s1929 = scalar_lea.vmem [#allocation9], %s1928
          %1931 = dma.done %s1926, 512
        $region96: #{tpu_custom_call.1} parent=91 // pred_fallthru
          _
      $region92: #{tpu_custom_call.1} parent=5 // pred_fallthru
        _
    $region6: #{tpu_custom_call.1} parent=1 // loop_footer
      %s27 = sadd.s32 1, %s23
    $region7: #{tpu_custom_call.1} parent=1 // loop_footer_branch
      %22 = sbr.rel target = $region3
    $region8: #{tpu_custom_call.1} parent=1 // loop_exit
      _
    %1932 = vsyncpa [#allocation5], 1
    %s1933 = scalar_lea.sflag [#allocation5], 1
    %1934 = vsyncpa %s1933, 1
    %1935 = vsyncpa [#allocation8], 1
    %1936 = vsyncpa [#allocation6], 1
    %s1937 = scalar_lea.sflag [#allocation6], 1
    %1938 = vsyncpa %s1937, 1
    %1939 = vsyncpa [#allocation11], 1

// kernel: tpu_custom_call.1
$region0: #{tpu_custom_call.1}
  #allocation0 [shape = 'u32[]', space=smem, size = 0x4, offset = 0x4, fixed_abs, tag = 'smem constant byte address 0x4 - core index']
  #allocation1 [shape = 'u32[72,128]{1,0:T(1,128)}', space=vmem, size = 0x9000, scoped, tag = 'internal scratch']
  #allocation2 [shape = 'f32[8,128]{1,0:T(8,128)}', space=vmem, size = 0x1000, scoped, tag = 'scratch operand']
  #allocation3 [shape = 'f32[8,128]{1,0:T(8,128)}', space=vmem, size = 0x1000, scoped, tag = 'scratch operand']
  %s0 = inlined_call_operand.vmem [shape: f32[2,32,16], index: 0, kind: input, shape index: {}]
  %s1 = inlined_call_operand.vmem [shape: f32[16,512], index: 1, kind: input, shape index: {}]
  %s2 = inlined_call_operand.hbm [shape: f32[128,512], index: 2, kind: input, shape index: {}]
  %s3 = inlined_call_operand.hbm [shape: f32[128,384], index: 3, kind: input, shape index: {}]
  %s4 = inlined_call_operand.vmem [shape: f32[1,512], index: 4, kind: input, shape index: {}]
  %s5 = inlined_call_operand.vmem [shape: f32[1,128], index: 5, kind: input, shape index: {}]
  %s6 = inlined_call_operand.vmem [shape: f32[8,128], index: 6, kind: input, shape index: {}]
  %s7 = inlined_call_operand.vmem [shape: f32[8,128], index: 7, kind: input, shape index: {}]
  %s8 = inlined_call_operand.hbm [shape: f32[8,8,128], index: 8, kind: output, shape index: {0}]
  %s9 = inlined_call_operand.hbm [shape: f32[8,128], index: 9, kind: output, shape index: {1}]
  %s10 = inlined_call_operand.hbm [shape: f32[8,128], index: 10, kind: output, shape index: {2}]
  %11 = xla_tuple %s8, %s9, %s10
  %s12 = sld [smem:[#allocation0]]
  $region97: #{tpu_custom_call.1} parent=0
    _
  %s14 = ssub.s32 1, %s12
  %s15 = scalar_select 0, %s14, %s12
  $region1: #{tpu_custom_call.1} parent=0
    #allocation4 [shape = 'u8[262144]{0}', space=vmem, size = 0x40000, scoped, tag = 'input window, operand 2, single buffered']
    #allocation5 [shape = 's32[2]{0}', space=sflag, size = 0x8, scoped, tag = 'scoped memory for tpu_custom_call.1']
    #allocation6 [shape = 's32[2]{0}', space=sflag, size = 0x8, scoped, tag = 'scoped memory for tpu_custom_call.1']
    #allocation7 [shape = 'u8[196608]{0}', space=vmem, size = 0x30000, scoped, tag = 'input window, operand 3, single buffered']
    #allocation8 [shape = 's32[1]{0}', space=sflag, size = 0x4, scoped, tag = 'scoped memory for tpu_custom_call.1']
    #allocation9 [shape = 'u8[32768]{0}', space=vmem, size = 0x8000, scoped, tag = 'output window, operand 0']
    #allocation10 [shape = 'u8[4096]{0}', space=vmem, size = 0x1000, scoped, tag = 'output window, operand 1, single buffered']
    #allocation11 [shape = 's32[1]{0}', space=sflag, size = 0x4, scoped, tag = 'scoped memory for tpu_custom_call.1']
    #allocation12 [shape = 'u8[4096]{0}', space=vmem, size = 0x1000, scoped, tag = 'output window, operand 2, single buffered']
    %16 = vsyncpa [#allocation5], 0
    %17 = vsyncpa [#allocation8], 0
    %18 = vsyncpa [#allocation6], 0
    %s19 = scalar_lea.sflag [#allocation6], 1
    %20 = vsyncpa %s19, 0
    %21 = vsyncpa [#allocation11], 0
    loop: start=0, step=1, limit=4
    $region2: #{tpu_custom_call.1} parent=1 // loop_pre_header
      _
    $region3: #{tpu_custom_call.1} parent=1 // loop_header
      %s23 = sphi 0, %s27
      %p24 = scmp.ge.s32.totalorder %s23, 4
      %s33 = sphi 0, %s35
      %s36 = sphi 0, %s33
      %s37 = sphi 0, %s36
      %s53 = sphi 0, %s37
      %s57 = sphi 0, %s57
      %s59 = sphi 0, %s57
      %s60 = sphi 0, %s59
      %s74 = sphi 0, %s60
      %s78 = sphi 0, %s78
      %s80 = sphi 0, %s78
      %s81 = sphi 0, %s80
      %s95 = sphi 0, %s81
      %s99 = sphi 0, %s99
      %s101 = sphi 0, %s99
      %s102 = sphi 0, %s101
      %s116 = sphi 0, %s102
      %s120 = sphi 0, %s120
      %s122 = sphi 0, %s120
      %s123 = sphi 0, %s122
      %s137 = sphi 0, %s123
      %s141 = sphi 0, %s141
      %s143 = sphi 0, %s141
      %s144 = sphi 0, %s143
      %s158 = sphi 0, %s144
      %s162 = sphi 0, %s162
      %s164 = sphi 0, %s162
      %s165 = sphi 0, %s164
      %s179 = sphi 0, %s165
      %s183 = sphi 0, %s183
      %s185 = sphi 0, %s183
      %s186 = sphi 0, %s185
      %s200 = sphi 0, %s186
      %s206 = sphi 0, %s208
      %s209 = sphi 0, %s206
      %s210 = sphi 0, %s209
      %s226 = sphi 0, %s210
      %s230 = sphi 0, %s230
      %s232 = sphi 0, %s230
      %s233 = sphi 0, %s232
      %s247 = sphi 0, %s233
      %s251 = sphi 0, %s251
      %s253 = sphi 0, %s251
      %s254 = sphi 0, %s253
      %s268 = sphi 0, %s254
    $region4: #{tpu_custom_call.1} parent=1 // loop_header_branch
      %26 = sbr.rel (%p24) target = $region8
    $region5: #{tpu_custom_call.1} parent=1 // loop_body
      %s28 = ssub.s32 %s23, 1
      %s29 = ssub.s32 %s23, 2
      %s30 = sadd.s32 %s23, 1
      %s31 = ssub.s32 %s23, %s30
      %p32 = scmp.eq.s32.totalorder %s31, 0
      %s34 = sadd.s32 %s33, 1
      %s35 = scalar_select %p32, %s33, %s34
      %p38 = pneg %p32
      %p39 = scmp.eq.s32.totalorder %s23, 1
      %p40 = por %p38, %p39
      %p41 = scmp.ne.s32.totalorder %s33, %s36
      %p42 = scmp.eq.s32.totalorder %s23, 0
      %p43 = por %p41, %p42
      %p44 = scmp.ne.s32.totalorder %s33, %s36
      %p45 = scmp.eq.s32.totalorder %s28, 1
      %p46 = por %p44, %p45
      %p47 = scmp.ne.s32.totalorder %s36, %s37
      %p48 = scmp.eq.s32.totalorder %s28, 0
      %p49 = por %p47, %p48
      %p50 = scmp.ne.s32.totalorder %s36, %s37
      %p51 = scmp.eq.s32.totalorder %s29, 1
      %p52 = por %p50, %p51
      %p54 = scmp.ne.s32.totalorder %s37, %s53
      %p55 = scmp.eq.s32.totalorder %s29, 0
      %p56 = por %p54, %p55
      %s58 = sadd.s32 %s57, 1
      %p61 = scmp.eq.s32.totalorder %s23, 1
      %p62 = scmp.ne.s32.totalorder %s57, %s59
      %p63 = scmp.eq.s32.totalorder %s23, 0
      %p64 = por %p62, %p63
      %p65 = scmp.ne.s32.totalorder %s57, %s59
      %p66 = scmp.eq.s32.totalorder %s28, 1
      %p67 = por %p65, %p66
      %p68 = scmp.ne.s32.totalorder %s59, %s60
      %p69 = scmp.eq.s32.totalorder %s28, 0
      %p70 = por %p68, %p69
      %p71 = scmp.ne.s32.totalorder %s59, %s60
      %p72 = scmp.eq.s32.totalorder %s29, 1
      %p73 = por %p71, %p72
      %p75 = scmp.ne.s32.totalorder %s60, %s74
      %p76 = scmp.eq.s32.totalorder %s29, 0
      %p77 = por %p75, %p76
      %s79 = sadd.s32 %s78, 1
      %p82 = scmp.eq.s32.totalorder %s23, 1
      %p83 = scmp.ne.s32.totalorder %s78, %s80
      %p84 = scmp.eq.s32.totalorder %s23, 0
      %p85 = por %p83, %p84
      %p86 = scmp.ne.s32.totalorder %s78, %s80
      %p87 = scmp.eq.s32.totalorder %s28, 1
      %p88 = por %p86, %p87
      %p89 = scmp.ne.s32.totalorder %s80, %s81
      %p90 = scmp.eq.s32.totalorder %s28, 0
      %p91 = por %p89, %p90
      %p92 = scmp.ne.s32.totalorder %s80, %s81
      %p93 = scmp.eq.s32.totalorder %s29, 1
      %p94 = por %p92, %p93
      %p96 = scmp.ne.s32.totalorder %s81, %s95
      %p97 = scmp.eq.s32.totalorder %s29, 0
      %p98 = por %p96, %p97
      %s100 = sadd.s32 %s99, 1
      %p103 = scmp.eq.s32.totalorder %s23, 1
      %p104 = scmp.ne.s32.totalorder %s99, %s101
      %p105 = scmp.eq.s32.totalorder %s23, 0
      %p106 = por %p104, %p105
      %p107 = scmp.ne.s32.totalorder %s99, %s101
      %p108 = scmp.eq.s32.totalorder %s28, 1
      %p109 = por %p107, %p108
      %p110 = scmp.ne.s32.totalorder %s101, %s102
      %p111 = scmp.eq.s32.totalorder %s28, 0
      %p112 = por %p110, %p111
      %p113 = scmp.ne.s32.totalorder %s101, %s102
      %p114 = scmp.eq.s32.totalorder %s29, 1
      %p115 = por %p113, %p114
      %p117 = scmp.ne.s32.totalorder %s102, %s116
      %p118 = scmp.eq.s32.totalorder %s29, 0
      %p119 = por %p117, %p118
      %s121 = sadd.s32 %s120, 1
      %p124 = scmp.eq.s32.totalorder %s23, 1
      %p125 = scmp.ne.s32.totalorder %s120, %s122
      %p126 = scmp.eq.s32.totalorder %s23, 0
      %p127 = por %p125, %p126
      %p128 = scmp.ne.s32.totalorder %s120, %s122
      %p129 = scmp.eq.s32.totalorder %s28, 1
      %p130 = por %p128, %p129
      %p131 = scmp.ne.s32.totalorder %s122, %s123
      %p132 = scmp.eq.s32.totalorder %s28, 0
      %p133 = por %p131, %p132
      %p134 = scmp.ne.s32.totalorder %s122, %s123
      %p135 = scmp.eq.s32.totalorder %s29, 1
      %p136 = por %p134, %p135
      %p138 = scmp.ne.s32.totalorder %s123, %s137
      %p139 = scmp.eq.s32.totalorder %s29, 0
      %p140 = por %p138, %p139
      %s142 = sadd.s32 %s141, 1
      %p145 = scmp.eq.s32.totalorder %s23, 1
      %p146 = scmp.ne.s32.totalorder %s141, %s143
      %p147 = scmp.eq.s32.totalorder %s23, 0
      %p148 = por %p146, %p147
      %p149 = scmp.ne.s32.totalorder %s141, %s143
      %p150 = scmp.eq.s32.totalorder %s28, 1
      %p151 = por %p149, %p150
      %p152 = scmp.ne.s32.totalorder %s143, %s144
      %p153 = scmp.eq.s32.totalorder %s28, 0
      %p154 = por %p152, %p153
      %p155 = scmp.ne.s32.totalorder %s143, %s144
      %p156 = scmp.eq.s32.totalorder %s29, 1
      %p157 = por %p155, %p156
      %p159 = scmp.ne.s32.totalorder %s144, %s158
      %p160 = scmp.eq.s32.totalorder %s29, 0
      %p161 = por %p159, %p160
      %s163 = sadd.s32 %s162, 1
      %p166 = scmp.eq.s32.totalorder %s23, 1
      %p167 = scmp.ne.s32.totalorder %s162, %s164
      %p168 = scmp.eq.s32.totalorder %s23, 0
      %p169 = por %p167, %p168
      %p170 = scmp.ne.s32.totalorder %s162, %s164
      %p171 = scmp.eq.s32.totalorder %s28, 1
      %p172 = por %p170, %p171
      %p173 = scmp.ne.s32.totalorder %s164, %s165
      %p174 = scmp.eq.s32.totalorder %s28, 0
      %p175 = por %p173, %p174
      %p176 = scmp.ne.s32.totalorder %s164, %s165
      %p177 = scmp.eq.s32.totalorder %s29, 1
      %p178 = por %p176, %p177
      %p180 = scmp.ne.s32.totalorder %s165, %s179
      %p181 = scmp.eq.s32.totalorder %s29, 0
      %p182 = por %p180, %p181
      %s184 = sadd.s32 %s183, 1
      %p187 = scmp.eq.s32.totalorder %s23, 1
      %p188 = scmp.ne.s32.totalorder %s183, %s185
      %p189 = scmp.eq.s32.totalorder %s23, 0
      %p190 = por %p188, %p189
      %p191 = scmp.ne.s32.totalorder %s183, %s185
      %p192 = scmp.eq.s32.totalorder %s28, 1
      %p193 = por %p191, %p192
      %p194 = scmp.ne.s32.totalorder %s185, %s186
      %p195 = scmp.eq.s32.totalorder %s28, 0
      %p196 = por %p194, %p195
      %p197 = scmp.ne.s32.totalorder %s185, %s186
      %p198 = scmp.eq.s32.totalorder %s29, 1
      %p199 = por %p197, %p198
      %p201 = scmp.ne.s32.totalorder %s186, %s200
      %p202 = scmp.eq.s32.totalorder %s29, 0
      %p203 = por %p201, %p202
      %s204 = ssub.s32 %s23, %s30
      %p205 = scmp.eq.s32.totalorder %s204, 0
      %s207 = sadd.s32 %s206, 1
      %s208 = scalar_select %p205, %s206, %s207
      %p211 = pneg %p205
      %p212 = scmp.eq.s32.totalorder %s23, 1
      %p213 = por %p211, %p212
      %p214 = scmp.ne.s32.totalorder %s206, %s209
      %p215 = scmp.eq.s32.totalorder %s23, 0
      %p216 = por %p214, %p215
      %p217 = scmp.ne.s32.totalorder %s206, %s209
      %p218 = scmp.eq.s32.totalorder %s28, 1
      %p219 = por %p217, %p218
      %p220 = scmp.ne.s32.totalorder %s209, %s210
      %p221 = scmp.eq.s32.totalorder %s28, 0
      %p222 = por %p220, %p221
      %p223 = scmp.ne.s32.totalorder %s209, %s210
      %p224 = scmp.eq.s32.totalorder %s29, 1
      %p225 = por %p223, %p224
      %p227 = scmp.ne.s32.totalorder %s210, %s226
      %p228 = scmp.eq.s32.totalorder %s29, 0
      %p229 = por %p227, %p228
      %s231 = sadd.s32 %s230, 1
      %p234 = scmp.eq.s32.totalorder %s23, 1
      %p235 = scmp.ne.s32.totalorder %s230, %s232
      %p236 = scmp.eq.s32.totalorder %s23, 0
      %p237 = por %p235, %p236
      %p238 = scmp.ne.s32.totalorder %s230, %s232
      %p239 = scmp.eq.s32.totalorder %s28, 1
      %p240 = por %p238, %p239
      %p241 = scmp.ne.s32.totalorder %s232, %s233
      %p242 = scmp.eq.s32.totalorder %s28, 0
      %p243 = por %p241, %p242
      %p244 = scmp.ne.s32.totalorder %s232, %s233
      %p245 = scmp.eq.s32.totalorder %s29, 1
      %p246 = por %p244, %p245
      %p248 = scmp.ne.s32.totalorder %s233, %s247
      %p249 = scmp.eq.s32.totalorder %s29, 0
      %p250 = por %p248, %p249
      %s252 = sadd.s32 %s251, 1
      %p255 = scmp.eq.s32.totalorder %s23, 1
      %p256 = scmp.ne.s32.totalorder %s251, %s253
      %p257 = scmp.eq.s32.totalorder %s23, 0
      %p258 = por %p256, %p257
      %p259 = scmp.ne.s32.totalorder %s251, %s253
      %p260 = scmp.eq.s32.totalorder %s28, 1
      %p261 = por %p259, %p260
      %p262 = scmp.ne.s32.totalorder %s253, %s254
      %p263 = scmp.eq.s32.totalorder %s28, 0
      %p264 = por %p262, %p263
      %p265 = scmp.ne.s32.totalorder %s253, %s254
      %p266 = scmp.eq.s32.totalorder %s29, 1
      %p267 = por %p265, %p266
      %p269 = scmp.ne.s32.totalorder %s254, %s268
      %p270 = scmp.eq.s32.totalorder %s29, 0
      %p271 = por %p269, %p270
      %p272 = scmp.le.s32.totalorder 1, %s23
      %p273 = scmp.lt.s32.totalorder %s23, 3
      %p274 = pnand %p272, %p273
      %p275 = pneg %p274
      // Predicated region
      $region9: #{tpu_custom_call.1} parent=5 // pred_check
        _
      $region10: #{tpu_custom_call.1} parent=5 // pred_check_branch
        %277 = sbr.rel (%p274) target = $region12
      $region11: #{tpu_custom_call.1} parent=5 // pred_region
        %s278 = ssub.s32 %s23, 1
        // Predicated region
        $region13: #{tpu_custom_call.1} parent=11 // pred_check
          %p279 = pneg %p70
        $region14: #{tpu_custom_call.1} parent=11 // pred_check_branch
          %281 = sbr.rel (%p279) target = $region16
        $region15: #{tpu_custom_call.1} parent=11 // pred_region
          _
        $region16: #{tpu_custom_call.1} parent=11 // pred_fallthru
          _
        // Predicated region
        $region17: #{tpu_custom_call.1} parent=11 // pred_check
          %p282 = pneg %p91
        $region18: #{tpu_custom_call.1} parent=11 // pred_check_branch
          %284 = sbr.rel (%p282) target = $region20
        $region19: #{tpu_custom_call.1} parent=11 // pred_region
          %286 = vsyncadd [#allocation5], 0
          %s287 = sshll.u32 %s2, 4
          %s288 = int_to_ptr.hbm [resolvable:$true] %s287
          %s289 = sshll.u32 [#allocation4], 4
          %s290 = int_to_ptr.vmem [resolvable:$true] %s289
          %295 = dma.hbm_to_vmem [thread:$0]  %s288, 8192, %s290, [#allocation5], 512, 512, 32
        $region20: #{tpu_custom_call.1} parent=11 // pred_fallthru
          _
        // Predicated region
        $region21: #{tpu_custom_call.1} parent=11 // pred_check
          %p296 = pneg %p112
        $region22: #{tpu_custom_call.1} parent=11 // pred_check_branch
          %298 = sbr.rel (%p296) target = $region24
        $region23: #{tpu_custom_call.1} parent=11 // pred_region
          %300 = vsyncadd [#allocation8], 0
          %s301 = sshll.u32 %s3, 4
          %s302 = int_to_ptr.hbm [resolvable:$true] %s301
          %s303 = sshll.u32 [#allocation7], 4
          %s304 = int_to_ptr.vmem [resolvable:$true] %s303
          %309 = dma.hbm_to_vmem [thread:$0]  %s302, 6144, %s304, [#allocation8], 384, 384, 24
        $region24: #{tpu_custom_call.1} parent=11 // pred_fallthru
          _
        // Predicated region
        $region25: #{tpu_custom_call.1} parent=11 // pred_check
          %p310 = pneg %p133
        $region26: #{tpu_custom_call.1} parent=11 // pred_check_branch
          %312 = sbr.rel (%p310) target = $region28
        $region27: #{tpu_custom_call.1} parent=11 // pred_region
          _
        $region28: #{tpu_custom_call.1} parent=11 // pred_fallthru
          _
        // Predicated region
        $region29: #{tpu_custom_call.1} parent=11 // pred_check
          %p313 = pneg %p154
        $region30: #{tpu_custom_call.1} parent=11 // pred_check_branch
          %315 = sbr.rel (%p313) target = $region32
        $region31: #{tpu_custom_call.1} parent=11 // pred_region
          _
        $region32: #{tpu_custom_call.1} parent=11 // pred_fallthru
          _
        // Predicated region
        $region33: #{tpu_custom_call.1} parent=11 // pred_check
          %p316 = pneg %p175
        $region34: #{tpu_custom_call.1} parent=11 // pred_check_branch
          %318 = sbr.rel (%p316) target = $region36
        $region35: #{tpu_custom_call.1} parent=11 // pred_region
          _
        $region36: #{tpu_custom_call.1} parent=11 // pred_fallthru
          _
        // Predicated region
        $region37: #{tpu_custom_call.1} parent=11 // pred_check
          %p319 = pneg %p196
        $region38: #{tpu_custom_call.1} parent=11 // pred_check_branch
          %321 = sbr.rel (%p319) target = $region40
        $region39: #{tpu_custom_call.1} parent=11 // pred_region
          _
        $region40: #{tpu_custom_call.1} parent=11 // pred_fallthru
          _
      $region12: #{tpu_custom_call.1} parent=5 // pred_fallthru
        _
      %p322 = scmp.lt.s32.totalorder %s23, 2
      // Predicated region
      $region41: #{tpu_custom_call.1} parent=5 // pred_check
        %p323 = pneg %p322
      $region42: #{tpu_custom_call.1} parent=5 // pred_check_branch
        %325 = sbr.rel (%p323) target = $region44
      $region43: #{tpu_custom_call.1} parent=5 // pred_region
        // Predicated region
        $region45: #{tpu_custom_call.1} parent=43 // pred_check
          %p326 = pneg %p43
        $region46: #{tpu_custom_call.1} parent=43 // pred_check_branch
          %328 = sbr.rel (%p326) target = $region48
        $region47: #{tpu_custom_call.1} parent=43 // pred_region
          %p329 = scmp.lt.s32.totalorder %s23, 1
          %s330 = scalar_select %p329, %s23, 1
          %s331 = smul.addr %s330, 4
          %s332 = smul.addr %s331, 8
          %s333 = scalar_lea.vmem %s0, %s332
        $region48: #{tpu_custom_call.1} parent=43 // pred_fallthru
          _
      $region44: #{tpu_custom_call.1} parent=5 // pred_fallthru
        _
      %p334 = scmp.le.s32.totalorder 1, %s23
      %p335 = scmp.lt.s32.totalorder %s23, 3
      %p336 = pnand %p334, %p335
      %p337 = pneg %p336
      // Predicated region
      $region49: #{tpu_custom_call.1} parent=5 // pred_check
        _
      $region50: #{tpu_custom_call.1} parent=5 // pred_check_branch
        %339 = sbr.rel (%p336) target = $region52
      $region51: #{tpu_custom_call.1} parent=5 // pred_region
        %s340 = ssub.s32 %s23, 1
        // Predicated region
        $region53: #{tpu_custom_call.1} parent=51 // pred_check
          %p341 = pneg %p91
        $region54: #{tpu_custom_call.1} parent=51 // pred_check_branch
          %343 = sbr.rel (%p341) target = $region56
        $region55: #{tpu_custom_call.1} parent=51 // pred_region
          %345 = dma.done [#allocation5], 8192
        $region56: #{tpu_custom_call.1} parent=51 // pred_fallthru
          _
        // Predicated region
        $region57: #{tpu_custom_call.1} parent=51 // pred_check
          %p346 = pneg %p112
        $region58: #{tpu_custom_call.1} parent=51 // pred_check_branch
          %348 = sbr.rel (%p346) target = $region60
        $region59: #{tpu_custom_call.1} parent=51 // pred_region
          %350 = dma.done [#allocation8], 6144
        $region60: #{tpu_custom_call.1} parent=51 // pred_fallthru
          _
        %p351 = scmp.lt.s32.totalorder %s28, 1
        %s352 = scalar_select %p351, %s28, 1
        %s353 = smul.addr %s352, 4
        %s354 = smul.addr %s353, 8
        %s355 = scalar_lea.vmem %s0, %s354
        %p356 = pneg %p49
        %p357 = pneg %p46
        %p358 = pneg %p70
        %p359 = pneg %p67
        %p360 = pneg %p91
        %p361 = pneg %p88
        %p362 = pneg %p112
        %p363 = pneg %p109
        %p364 = pneg %p133
        %p365 = pneg %p130
        %p366 = pneg %p154
        %p367 = pneg %p151
        %p368 = pneg %p175
        %p369 = pneg %p172
        %p370 = pneg %p196
        %p371 = pneg %p193
        %p372 = pneg %p222
        %p373 = pneg %p219
        %s374 = sand.u32 %s209, 1
        %s375 = scalar_lea.sflag [#allocation6], %s374
        %s376 = sand.u32 %s209, 1
        %s377 = smul.addr %s376, 32
        %s378 = scalar_lea.vmem [#allocation9], %s377
        %p379 = pneg %p243
        %p380 = pneg %p240
        %p381 = pneg %p264
        %p382 = pneg %p261
        %p383 = scmp.lt.s32.totalorder %s28, 1
        %s384 = scalar_select %p383, %s28, 1
        %s385 = smul.addr %s384, 4
        %s386 = smul.addr %s385, 8
        %s387 = scalar_lea.vmem %s0, %s386
        %s388 = smul.u32 4, %s28
        %p389 = scmp.eq.s32.totalorder %s28, 0
        // Predicated region
        $region61: #{tpu_custom_call.1} parent=51 // pred_check
          %p390 = pneg %p389
        $region62: #{tpu_custom_call.1} parent=51 // pred_check_branch
          %392 = sbr.rel (%p390) target = $region64
        $region63: #{tpu_custom_call.1} parent=51 // pred_region
          %v393 = vld [vmem:[%s6] sm:$0xff]
          %394 = vst [vmem:[#allocation2] sm:$0xff] %v393
          %v395 = vld [vmem:[%s7] sm:$0xff]
          %396 = vst [vmem:[#allocation3] sm:$0xff] %v395
        $region64: #{tpu_custom_call.1} parent=51 // pred_fallthru
          _
        %v397 = vld [vmem:[%s387] sm:$0xff]
        %v398 = vld [vmem:[%s387 + $0x8] sm:$0xff]
        %v399 = vld [vmem:[%s387 + $0x10] sm:$0xff]
        %v400 = vld [vmem:[%s387 + $0x18] sm:$0xff]
        %v401 = vld [vmem:[%s1] sm:$0xff]
        %v402 = vld [vmem:[%s1 + $0x8] sm:$0xff]
        %v403 = vld [vmem:[%s1 + $0x10] sm:$0xff]
        %v404 = vld [vmem:[%s1 + $0x18] sm:$0xff]
        %v405 = vld [vmem:[%s1 + $0x20] sm:$0xff]
        %v406 = vld [vmem:[%s1 + $0x28] sm:$0xff]
        %v407 = vld [vmem:[%s1 + $0x30] sm:$0xff]
        %v408 = vld [vmem:[%s1 + $0x38] sm:$0xff]
        %v409 = vld [vmem:[%s4] sm:$0xf]
        %v411 = vperm.slane %v409, 0
        %v412 = vperm.slane %v409, 1
        %v413 = vperm.slane %v409, 2
        %v414 = vperm.slane %v409, 3
        %vm419 = vcmask 130048
        %v421 = vsel %vm419, %v397, 0
        %v424 = vsel %vm419, %v398, 0
        %v427 = vsel %vm419, %v399, 0
        %v430 = vsel %vm419, %v400, 0
        %432 = vmatpush.msra.mxu0 0.0
        %433 = vmatpush.msra.mxu0 0.0
        %434 = vmatpush.msra.mxu0 0.0
        %435 = vmatpush.msra.mxu0 0.0
        %436 = vmatpush.msra.mxu0 0.0
        %437 = vmatpush.msra.mxu0 0.0
        %438 = vmatpush.msra.mxu0 0.0
        %439 = vmatpush.msra.mxu0 0.0
        %440 = vmatpush.msra.mxu0 0.0
        %441 = vmatpush.msra.mxu0 0.0
        %442 = vmatpush.msra.mxu0 0.0
        %443 = vmatpush.msra.mxu0 0.0
        %444 = vmatpush.msra.mxu0 0.0
        %445 = vmatpush.msra.mxu0 0.0
        %446 = vmatpush.msra.mxu0 %v405
        %447 = vmatpush.msra.mxu0 %v401
        %448 = vmatmul.f32.gmra.mxu0 %v421
        %v449 = vpop.f32.mrf.mxu0
        %v450 = vadd.f32 %v411, %v449
        %451 = vmatmul.f32.gmra.mxu0 %v424
        %v452 = vpop.f32.mrf.mxu0
        %v453 = vadd.f32 %v411, %v452
        %454 = vmatmul.f32.gmra.mxu0 %v427
        %v455 = vpop.f32.mrf.mxu0
        %v456 = vadd.f32 %v411, %v455
        %457 = vmatmul.f32.gmra.mxu0 %v430
        %v458 = vpop.f32.mrf.mxu0
        %v459 = vadd.f32 %v411, %v458
        %460 = vdwg.mxu0
        %461 = vmatpush.msra.mxu0 0.0
        %462 = vmatpush.msra.mxu0 0.0
        %463 = vmatpush.msra.mxu0 0.0
        %464 = vmatpush.msra.mxu0 0.0
        %465 = vmatpush.msra.mxu0 0.0
        %466 = vmatpush.msra.mxu0 0.0
        %467 = vmatpush.msra.mxu0 0.0
        %468 = vmatpush.msra.mxu0 0.0
        %469 = vmatpush.msra.mxu0 0.0
        %470 = vmatpush.msra.mxu0 0.0
        %471 = vmatpush.msra.mxu0 0.0
        %472 = vmatpush.msra.mxu0 0.0
        %473 = vmatpush.msra.mxu0 0.0
        %474 = vmatpush.msra.mxu0 0.0
        %475 = vmatpush.msra.mxu0 %v406
        %476 = vmatpush.msra.mxu0 %v402
        %477 = vmatmul.f32.gmra.mxu0 %v421
        %v478 = vpop.f32.mrf.mxu0
        %v479 = vadd.f32 %v412, %v478
        %480 = vmatmul.f32.gmra.mxu0 %v424
        %v481 = vpop.f32.mrf.mxu0
        %v482 = vadd.f32 %v412, %v481
        %483 = vmatmul.f32.gmra.mxu0 %v427
        %v484 = vpop.f32.mrf.mxu0
        %v485 = vadd.f32 %v412, %v484
        %486 = vmatmul.f32.gmra.mxu0 %v430
        %v487 = vpop.f32.mrf.mxu0
        %v488 = vadd.f32 %v412, %v487
        %489 = vdwg.mxu0
        %490 = vmatpush.msra.mxu0 0.0
        %491 = vmatpush.msra.mxu0 0.0
        %492 = vmatpush.msra.mxu0 0.0
        %493 = vmatpush.msra.mxu0 0.0
        %494 = vmatpush.msra.mxu0 0.0
        %495 = vmatpush.msra.mxu0 0.0
        %496 = vmatpush.msra.mxu0 0.0
        %497 = vmatpush.msra.mxu0 0.0
        %498 = vmatpush.msra.mxu0 0.0
        %499 = vmatpush.msra.mxu0 0.0
        %500 = vmatpush.msra.mxu0 0.0
        %501 = vmatpush.msra.mxu0 0.0
        %502 = vmatpush.msra.mxu0 0.0
        %503 = vmatpush.msra.mxu0 0.0
        %504 = vmatpush.msra.mxu0 %v407
        %505 = vmatpush.msra.mxu0 %v403
        %506 = vmatmul.f32.gmra.mxu0 %v421
        %v507 = vpop.f32.mrf.mxu0
        %v508 = vadd.f32 %v413, %v507
        %509 = vmatmul.f32.gmra.mxu0 %v424
        %v510 = vpop.f32.mrf.mxu0
        %v511 = vadd.f32 %v413, %v510
        %512 = vmatmul.f32.gmra.mxu0 %v427
        %v513 = vpop.f32.mrf.mxu0
        %v514 = vadd.f32 %v413, %v513
        %515 = vmatmul.f32.gmra.mxu0 %v430
        %v516 = vpop.f32.mrf.mxu0
        %v517 = vadd.f32 %v413, %v516
        %518 = vdwg.mxu0
        %519 = vmatpush.msra.mxu0 0.0
        %520 = vmatpush.msra.mxu0 0.0
        %521 = vmatpush.msra.mxu0 0.0
        %522 = vmatpush.msra.mxu0 0.0
        %523 = vmatpush.msra.mxu0 0.0
        %524 = vmatpush.msra.mxu0 0.0
        %525 = vmatpush.msra.mxu0 0.0
        %526 = vmatpush.msra.mxu0 0.0
        %527 = vmatpush.msra.mxu0 0.0
        %528 = vmatpush.msra.mxu0 0.0
        %529 = vmatpush.msra.mxu0 0.0
        %530 = vmatpush.msra.mxu0 0.0
        %531 = vmatpush.msra.mxu0 0.0
        %532 = vmatpush.msra.mxu0 0.0
        %533 = vmatpush.msra.mxu0 %v408
        %534 = vmatpush.msra.mxu0 %v404
        %535 = vmatmul.f32.gmra.mxu0 %v421
        %v536 = vpop.f32.mrf.mxu0
        %v537 = vadd.f32 %v414, %v536
        %538 = vmatmul.f32.gmra.mxu0 %v424
        %v539 = vpop.f32.mrf.mxu0
        %v540 = vadd.f32 %v414, %v539
        %541 = vmatmul.f32.gmra.mxu0 %v427
        %v542 = vpop.f32.mrf.mxu0
        %v543 = vadd.f32 %v414, %v542
        %544 = vmatmul.f32.gmra.mxu0 %v430
        %v545 = vpop.f32.mrf.mxu0
        %v546 = vadd.f32 %v414, %v545
        %547 = vdwg.mxu0
        %v548 = vld [vmem:[%s5] sm:$0x1]
        %v550 = vperm.slane %v548, 0
        %v552 = vld [vmem:[#allocation2] sm:$0xff]
        %v553 = vld [vmem:[#allocation3] sm:$0xff]
        %v554 = vld [vmem:[#allocation4] sm:$0xff]
        %v555 = vld [vmem:[#allocation4 + $0x8] sm:$0xff]
        %v556 = vld [vmem:[#allocation4 + $0x10] sm:$0xff]
        %v557 = vld [vmem:[#allocation4 + $0x18] sm:$0xff]
        %v558 = vld [vmem:[#allocation4 + $0x20] sm:$0xff]
        %v559 = vld [vmem:[#allocation4 + $0x28] sm:$0xff]
        %v560 = vld [vmem:[#allocation4 + $0x30] sm:$0xff]
        %v561 = vld [vmem:[#allocation4 + $0x38] sm:$0xff]
        %v562 = vld [vmem:[#allocation4 + $0x40] sm:$0xff]
        %v563 = vld [vmem:[#allocation4 + $0x48] sm:$0xff]
        %v564 = vld [vmem:[#allocation4 + $0x50] sm:$0xff]
        %v565 = vld [vmem:[#allocation4 + $0x58] sm:$0xff]
        %v566 = vld [vmem:[#allocation4 + $0x60] sm:$0xff]
        %v567 = vld [vmem:[#allocation4 + $0x68] sm:$0xff]
        %v568 = vld [vmem:[#allocation4 + $0x70] sm:$0xff]
        %v569 = vld [vmem:[#allocation4 + $0x78] sm:$0xff]
        %v570 = vld [vmem:[#allocation4 + $0x80] sm:$0xff]
        %v571 = vld [vmem:[#allocation4 + $0x88] sm:$0xff]
        %v572 = vld [vmem:[#allocation4 + $0x90] sm:$0xff]
        %v573 = vld [vmem:[#allocation4 + $0x98] sm:$0xff]
        %v574 = vld [vmem:[#allocation4 + $0xa0] sm:$0xff]
        %v575 = vld [vmem:[#allocation4 + $0xa8] sm:$0xff]
        %v576 = vld [vmem:[#allocation4 + $0xb0] sm:$0xff]
        %v577 = vld [vmem:[#allocation4 + $0xb8] sm:$0xff]
        %v578 = vld [vmem:[#allocation4 + $0xc0] sm:$0xff]
        %v579 = vld [vmem:[#allocation4 + $0xc8] sm:$0xff]
        %v580 = vld [vmem:[#allocation4 + $0xd0] sm:$0xff]
        %v581 = vld [vmem:[#allocation4 + $0xd8] sm:$0xff]
        %v582 = vld [vmem:[#allocation4 + $0xe0] sm:$0xff]
        %v583 = vld [vmem:[#allocation4 + $0xe8] sm:$0xff]
        %v584 = vld [vmem:[#allocation4 + $0xf0] sm:$0xff]
        %v585 = vld [vmem:[#allocation4 + $0xf8] sm:$0xff]
        %v586 = vld [vmem:[#allocation4 + $0x100] sm:$0xff]
        %v587 = vld [vmem:[#allocation4 + $0x108] sm:$0xff]
        %v588 = vld [vmem:[#allocation4 + $0x110] sm:$0xff]
        %v589 = vld [vmem:[#allocation4 + $0x118] sm:$0xff]
        %v590 = vld [vmem:[#allocation4 + $0x120] sm:$0xff]
        %v591 = vld [vmem:[#allocation4 + $0x128] sm:$0xff]
        %v592 = vld [vmem:[#allocation4 + $0x130] sm:$0xff]
        %v593 = vld [vmem:[#allocation4 + $0x138] sm:$0xff]
        %v594 = vld [vmem:[#allocation4 + $0x140] sm:$0xff]
        %v595 = vld [vmem:[#allocation4 + $0x148] sm:$0xff]
        %v596 = vld [vmem:[#allocation4 + $0x150] sm:$0xff]
        %v597 = vld [vmem:[#allocation4 + $0x158] sm:$0xff]
        %v598 = vld [vmem:[#allocation4 + $0x160] sm:$0xff]
        %v599 = vld [vmem:[#allocation4 + $0x168] sm:$0xff]
        %v600 = vld [vmem:[#allocation4 + $0x170] sm:$0xff]
        %v601 = vld [vmem:[#allocation4 + $0x178] sm:$0xff]
        %v602 = vld [vmem:[#allocation4 + $0x180] sm:$0xff]
        %v603 = vld [vmem:[#allocation4 + $0x188] sm:$0xff]
        %v604 = vld [vmem:[#allocation4 + $0x190] sm:$0xff]
        %v605 = vld [vmem:[#allocation4 + $0x198] sm:$0xff]
        %v606 = vld [vmem:[#allocation4 + $0x1a0] sm:$0xff]
        %v607 = vld [vmem:[#allocation4 + $0x1a8] sm:$0xff]
        %v608 = vld [vmem:[#allocation4 + $0x1b0] sm:$0xff]
        %v609 = vld [vmem:[#allocation4 + $0x1b8] sm:$0xff]
        %v610 = vld [vmem:[#allocation4 + $0x1c0] sm:$0xff]
        %v611 = vld [vmem:[#allocation4 + $0x1c8] sm:$0xff]
        %v612 = vld [vmem:[#allocation4 + $0x1d0] sm:$0xff]
        %v613 = vld [vmem:[#allocation4 + $0x1d8] sm:$0xff]
        %v614 = vld [vmem:[#allocation4 + $0x1e0] sm:$0xff]
        %v615 = vld [vmem:[#allocation4 + $0x1e8] sm:$0xff]
        %v616 = vld [vmem:[#allocation4 + $0x1f0] sm:$0xff]
        %v617 = vld [vmem:[#allocation4 + $0x1f8] sm:$0xff]
        %618 = vmatpush.msra.mxu0 %v614
        %619 = vmatpush.msra.mxu0 %v610
        %620 = vmatpush.msra.mxu0 %v606
        %621 = vmatpush.msra.mxu0 %v602
        %622 = vmatpush.msra.mxu0 %v598
        %623 = vmatpush.msra.mxu0 %v594
        %624 = vmatpush.msra.mxu0 %v590
        %625 = vmatpush.msra.mxu0 %v586
        %626 = vmatpush.msra.mxu0 %v582
        %627 = vmatpush.msra.mxu0 %v578
        %628 = vmatpush.msra.mxu0 %v574
        %629 = vmatpush.msra.mxu0 %v570
        %630 = vmatpush.msra.mxu0 %v566
        %631 = vmatpush.msra.mxu0 %v562
        %632 = vmatpush.msra.mxu0 %v558
        %633 = vmatpush.msra.mxu0 %v554
        %634 = vmatmul.f32.gmra.mxu0 %v552
        %v635 = vpop.f32.mrf.mxu0
        %v636 = vadd.f32 0.0, %v635
        %637 = vdwg.mxu0
        %638 = vmatpush.msra.mxu0 %v615
        %639 = vmatpush.msra.mxu0 %v611
        %640 = vmatpush.msra.mxu0 %v607
        %641 = vmatpush.msra.mxu0 %v603
        %642 = vmatpush.msra.mxu0 %v599
        %643 = vmatpush.msra.mxu0 %v595
        %644 = vmatpush.msra.mxu0 %v591
        %645 = vmatpush.msra.mxu0 %v587
        %646 = vmatpush.msra.mxu0 %v583
        %647 = vmatpush.msra.mxu0 %v579
        %648 = vmatpush.msra.mxu0 %v575
        %649 = vmatpush.msra.mxu0 %v571
        %650 = vmatpush.msra.mxu0 %v567
        %651 = vmatpush.msra.mxu0 %v563
        %652 = vmatpush.msra.mxu0 %v559
        %653 = vmatpush.msra.mxu0 %v555
        %654 = vmatmul.f32.gmra.mxu0 %v552
        %v655 = vpop.f32.mrf.mxu0
        %v656 = vadd.f32 0.0, %v655
        %657 = vdwg.mxu0
        %658 = vmatpush.msra.mxu0 %v616
        %659 = vmatpush.msra.mxu0 %v612
        %660 = vmatpush.msra.mxu0 %v608
        %661 = vmatpush.msra.mxu0 %v604
        %662 = vmatpush.msra.mxu0 %v600
        %663 = vmatpush.msra.mxu0 %v596
        %664 = vmatpush.msra.mxu0 %v592
        %665 = vmatpush.msra.mxu0 %v588
        %666 = vmatpush.msra.mxu0 %v584
        %667 = vmatpush.msra.mxu0 %v580
        %668 = vmatpush.msra.mxu0 %v576
        %669 = vmatpush.msra.mxu0 %v572
        %670 = vmatpush.msra.mxu0 %v568
        %671 = vmatpush.msra.mxu0 %v564
        %672 = vmatpush.msra.mxu0 %v560
        %673 = vmatpush.msra.mxu0 %v556
        %674 = vmatmul.f32.gmra.mxu0 %v552
        %v675 = vpop.f32.mrf.mxu0
        %v676 = vadd.f32 0.0, %v675
        %677 = vdwg.mxu0
        %678 = vmatpush.msra.mxu0 %v617
        %679 = vmatpush.msra.mxu0 %v613
        %680 = vmatpush.msra.mxu0 %v609
        %681 = vmatpush.msra.mxu0 %v605
        %682 = vmatpush.msra.mxu0 %v601
        %683 = vmatpush.msra.mxu0 %v597
        %684 = vmatpush.msra.mxu0 %v593
        %685 = vmatpush.msra.mxu0 %v589
        %686 = vmatpush.msra.mxu0 %v585
        %687 = vmatpush.msra.mxu0 %v581
        %688 = vmatpush.msra.mxu0 %v577
        %689 = vmatpush.msra.mxu0 %v573
        %690 = vmatpush.msra.mxu0 %v569
        %691 = vmatpush.msra.mxu0 %v565
        %692 = vmatpush.msra.mxu0 %v561
        %693 = vmatpush.msra.mxu0 %v557
        %694 = vmatmul.f32.gmra.mxu0 %v552
        %v695 = vpop.f32.mrf.mxu0
        %v696 = vadd.f32 0.0, %v695
        %697 = vdwg.mxu0
        %v698 = vld [vmem:[#allocation7] sm:$0xff]
        %v699 = vld [vmem:[#allocation7 + $0x8] sm:$0xff]
        %v700 = vld [vmem:[#allocation7 + $0x10] sm:$0xff]
        %v701 = vld [vmem:[#allocation7 + $0x18] sm:$0xff]
        %v702 = vld [vmem:[#allocation7 + $0x20] sm:$0xff]
        %v703 = vld [vmem:[#allocation7 + $0x28] sm:$0xff]
        %v704 = vld [vmem:[#allocation7 + $0x30] sm:$0xff]
        %v705 = vld [vmem:[#allocation7 + $0x38] sm:$0xff]
        %v706 = vld [vmem:[#allocation7 + $0x40] sm:$0xff]
        %v707 = vld [vmem:[#allocation7 + $0x48] sm:$0xff]
        %v708 = vld [vmem:[#allocation7 + $0x50] sm:$0xff]
        %v709 = vld [vmem:[#allocation7 + $0x58] sm:$0xff]
        %v710 = vld [vmem:[#allocation7 + $0x60] sm:$0xff]
        %v711 = vld [vmem:[#allocation7 + $0x68] sm:$0xff]
        %v712 = vld [vmem:[#allocation7 + $0x70] sm:$0xff]
        %v713 = vld [vmem:[#allocation7 + $0x78] sm:$0xff]
        %v714 = vld [vmem:[#allocation7 + $0x80] sm:$0xff]
        %v715 = vld [vmem:[#allocation7 + $0x88] sm:$0xff]
        %v716 = vld [vmem:[#allocation7 + $0x90] sm:$0xff]
        %v717 = vld [vmem:[#allocation7 + $0x98] sm:$0xff]
        %v718 = vld [vmem:[#allocation7 + $0xa0] sm:$0xff]
        %v719 = vld [vmem:[#allocation7 + $0xa8] sm:$0xff]
        %v720 = vld [vmem:[#allocation7 + $0xb0] sm:$0xff]
        %v721 = vld [vmem:[#allocation7 + $0xb8] sm:$0xff]
        %v722 = vld [vmem:[#allocation7 + $0xc0] sm:$0xff]
        %v723 = vld [vmem:[#allocation7 + $0xc8] sm:$0xff]
        %v724 = vld [vmem:[#allocation7 + $0xd0] sm:$0xff]
        %v725 = vld [vmem:[#allocation7 + $0xd8] sm:$0xff]
        %v726 = vld [vmem:[#allocation7 + $0xe0] sm:$0xff]
        %v727 = vld [vmem:[#allocation7 + $0xe8] sm:$0xff]
        %v728 = vld [vmem:[#allocation7 + $0xf0] sm:$0xff]
        %v729 = vld [vmem:[#allocation7 + $0xf8] sm:$0xff]
        %v730 = vld [vmem:[#allocation7 + $0x100] sm:$0xff]
        %v731 = vld [vmem:[#allocation7 + $0x108] sm:$0xff]
        %v732 = vld [vmem:[#allocation7 + $0x110] sm:$0xff]
        %v733 = vld [vmem:[#allocation7 + $0x118] sm:$0xff]
        %v734 = vld [vmem:[#allocation7 + $0x120] sm:$0xff]
        %v735 = vld [vmem:[#allocation7 + $0x128] sm:$0xff]
        %v736 = vld [vmem:[#allocation7 + $0x130] sm:$0xff]
        %v737 = vld [vmem:[#allocation7 + $0x138] sm:$0xff]
        %v738 = vld [vmem:[#allocation7 + $0x140] sm:$0xff]
        %v739 = vld [vmem:[#allocation7 + $0x148] sm:$0xff]
        %v740 = vld [vmem:[#allocation7 + $0x150] sm:$0xff]
        %v741 = vld [vmem:[#allocation7 + $0x158] sm:$0xff]
        %v742 = vld [vmem:[#allocation7 + $0x160] sm:$0xff]
        %v743 = vld [vmem:[#allocation7 + $0x168] sm:$0xff]
        %v744 = vld [vmem:[#allocation7 + $0x170] sm:$0xff]
        %v745 = vld [vmem:[#allocation7 + $0x178] sm:$0xff]
        %746 = vmatpush.msra.mxu0 %v743
        %747 = vmatpush.msra.mxu0 %v740
        %748 = vmatpush.msra.mxu0 %v737
        %749 = vmatpush.msra.mxu0 %v734
        %750 = vmatpush.msra.mxu0 %v731
        %751 = vmatpush.msra.mxu0 %v728
        %752 = vmatpush.msra.mxu0 %v725
        %753 = vmatpush.msra.mxu0 %v722
        %754 = vmatpush.msra.mxu0 %v719
        %755 = vmatpush.msra.mxu0 %v716
        %756 = vmatpush.msra.mxu0 %v713
        %757 = vmatpush.msra.mxu0 %v710
        %758 = vmatpush.msra.mxu0 %v707
        %759 = vmatpush.msra.mxu0 %v704
        %760 = vmatpush.msra.mxu0 %v701
        %761 = vmatpush.msra.mxu0 %v698
        %762 = vmatmul.f32.gmra.mxu0 %v553
        %v763 = vpop.f32.mrf.mxu0
        %v764 = vadd.f32 0.0, %v763
        %765 = vdwg.mxu0
        %766 = vmatpush.msra.mxu0 %v744
        %767 = vmatpush.msra.mxu0 %v741
        %768 = vmatpush.msra.mxu0 %v738
        %769 = vmatpush.msra.mxu0 %v735
        %770 = vmatpush.msra.mxu0 %v732
        %771 = vmatpush.msra.mxu0 %v729
        %772 = vmatpush.msra.mxu0 %v726
        %773 = vmatpush.msra.mxu0 %v723
        %774 = vmatpush.msra.mxu0 %v720
        %775 = vmatpush.msra.mxu0 %v717
        %776 = vmatpush.msra.mxu0 %v714
        %777 = vmatpush.msra.mxu0 %v711
        %778 = vmatpush.msra.mxu0 %v708
        %779 = vmatpush.msra.mxu0 %v705
        %780 = vmatpush.msra.mxu0 %v702
        %781 = vmatpush.msra.mxu0 %v699
        %782 = vmatmul.f32.gmra.mxu0 %v553
        %v783 = vpop.f32.mrf.mxu0
        %v784 = vadd.f32 0.0, %v783
        %785 = vdwg.mxu0
        %786 = vmatpush.msra.mxu0 %v745
        %787 = vmatpush.msra.mxu0 %v742
        %788 = vmatpush.msra.mxu0 %v739
        %789 = vmatpush.msra.mxu0 %v736
        %790 = vmatpush.msra.mxu0 %v733
        %791 = vmatpush.msra.mxu0 %v730
        %792 = vmatpush.msra.mxu0 %v727
        %793 = vmatpush.msra.mxu0 %v724
        %794 = vmatpush.msra.mxu0 %v721
        %795 = vmatpush.msra.mxu0 %v718
        %796 = vmatpush.msra.mxu0 %v715
        %797 = vmatpush.msra.mxu0 %v712
        %798 = vmatpush.msra.mxu0 %v709
        %799 = vmatpush.msra.mxu0 %v706
        %800 = vmatpush.msra.mxu0 %v703
        %801 = vmatpush.msra.mxu0 %v700
        %802 = vmatmul.f32.gmra.mxu0 %v553
        %v803 = vpop.f32.mrf.mxu0
        %v804 = vadd.f32 0.0, %v803
        %805 = vdwg.mxu0
        %v806 = vadd.f32 %v450, %v636
        %v807 = vadd.f32 %v479, %v656
        %v808 = vadd.f32 %v508, %v676
        %v809 = vadd.f32 %v806, %v764
        %v810 = vadd.f32 %v807, %v784
        %v811 = vadd.f32 %v808, %v804
        %v812 = vxor.u32 %v809, 2147483648
        %v813 = vxor.u32 %v810, 2147483648
        %v814 = vxor.u32 %v811, 2147483648
        %v815 = vmul.f32 %v812, 1.442695
        %v816 = vpow.pop %v815
        %v817 = vmul.f32 %v813, 1.442695
        %v818 = vpow.pop %v817
        %v819 = vmul.f32 %v814, 1.442695
        %v820 = vpow.pop %v819
        %v821 = vadd.f32 %v816, 1.0
        %v822 = vadd.f32 %v818, 1.0
        %v823 = vadd.f32 %v820, 1.0
        %v824 = vrcp.pop %v821
        %v825 = vmul.f32 %v821, %v824
        %v826 = vsub.f32 1.0, %v825
        %v827 = vmul.f32 %v824, %v826
        %v828 = vadd.f32 %v824, %v827
        %vm829 = vweird.f32 %v821
        %vm830 = vweird.f32 %v824
        %vm831 = vmor %vm829, %vm830
        %v832 = vsel %vm831, %v824, %v828
        %v833 = vand.u32 2147483647, %v821
        %vm834 = vcmp.eq.f32.partialorder %v833, 8.507059e+37
        %v835 = vand.u32 %v821, 2147483648
        %v836 = vor.u32 1.1754944e-38, %v835
        %v837 = vsel %vm834, %v836, %v832
        %v838 = vmul.f32 1.0, %v837
        %v839 = vrcp.pop %v822
        %v840 = vmul.f32 %v822, %v839
        %v841 = vsub.f32 1.0, %v840
        %v842 = vmul.f32 %v839, %v841
        %v843 = vadd.f32 %v839, %v842
        %vm844 = vweird.f32 %v822
        %vm845 = vweird.f32 %v839
        %vm846 = vmor %vm844, %vm845
        %v847 = vsel %vm846, %v839, %v843
        %v848 = vand.u32 2147483647, %v822
        %vm849 = vcmp.eq.f32.partialorder %v848, 8.507059e+37
        %v850 = vand.u32 %v822, 2147483648
        %v851 = vor.u32 1.1754944e-38, %v850
        %v852 = vsel %vm849, %v851, %v847
        %v853 = vmul.f32 1.0, %v852
        %v854 = vrcp.pop %v823
        %v855 = vmul.f32 %v823, %v854
        %v856 = vsub.f32 1.0, %v855
        %v857 = vmul.f32 %v854, %v856
        %v858 = vadd.f32 %v854, %v857
        %vm859 = vweird.f32 %v823
        %vm860 = vweird.f32 %v854
        %vm861 = vmor %vm859, %vm860
        %v862 = vsel %vm861, %v854, %v858
        %v863 = vand.u32 2147483647, %v823
        %vm864 = vcmp.eq.f32.partialorder %v863, 8.507059e+37
        %v865 = vand.u32 %v823, 2147483648
        %v866 = vor.u32 1.1754944e-38, %v865
        %v867 = vsel %vm864, %v866, %v862
        %v868 = vmul.f32 1.0, %v867
        %v869 = vadd.f32 %v696, %v550
        %v870 = vtanh.pop %v869
        %v871 = vmul.f32 %v853, %v553
        %v872 = vmul.f32 %v838, %v870
        %v873 = vadd.f32 %v871, %v872
        %v874 = vtanh.pop %v873
        %v875 = vadd.f32 %v874, %v537
        %v876 = vmul.f32 %v868, %v875
        %877 = vst [vmem:[%s378] sm:$0xff] %v876
        %v878 = vld [vmem:[#allocation4] sm:$0xff]
        %v879 = vld [vmem:[#allocation4 + $0x8] sm:$0xff]
        %v880 = vld [vmem:[#allocation4 + $0x10] sm:$0xff]
        %v881 = vld [vmem:[#allocation4 + $0x18] sm:$0xff]
        %v882 = vld [vmem:[#allocation4 + $0x20] sm:$0xff]
        %v883 = vld [vmem:[#allocation4 + $0x28] sm:$0xff]
        %v884 = vld [vmem:[#allocation4 + $0x30] sm:$0xff]
        %v885 = vld [vmem:[#allocation4 + $0x38] sm:$0xff]
        %v886 = vld [vmem:[#allocation4 + $0x40] sm:$0xff]
        %v887 = vld [vmem:[#allocation4 + $0x48] sm:$0xff]
        %v888 = vld [vmem:[#allocation4 + $0x50] sm:$0xff]
        %v889 = vld [vmem:[#allocation4 + $0x58] sm:$0xff]
        %v890 = vld [vmem:[#allocation4 + $0x60] sm:$0xff]
        %v891 = vld [vmem:[#allocation4 + $0x68] sm:$0xff]
        %v892 = vld [vmem:[#allocation4 + $0x70] sm:$0xff]
        %v893 = vld [vmem:[#allocation4 + $0x78] sm:$0xff]
        %v894 = vld [vmem:[#allocation4 + $0x80] sm:$0xff]
        %v895 = vld [vmem:[#allocation4 + $0x88] sm:$0xff]
        %v896 = vld [vmem:[#allocation4 + $0x90] sm:$0xff]
        %v897 = vld [vmem:[#allocation4 + $0x98] sm:$0xff]
        %v898 = vld [vmem:[#allocation4 + $0xa0] sm:$0xff]
        %v899 = vld [vmem:[#allocation4 + $0xa8] sm:$0xff]
        %v900 = vld [vmem:[#allocation4 + $0xb0] sm:$0xff]
        %v901 = vld [vmem:[#allocation4 + $0xb8] sm:$0xff]
        %v902 = vld [vmem:[#allocation4 + $0xc0] sm:$0xff]
        %v903 = vld [vmem:[#allocation4 + $0xc8] sm:$0xff]
        %v904 = vld [vmem:[#allocation4 + $0xd0] sm:$0xff]
        %v905 = vld [vmem:[#allocation4 + $0xd8] sm:$0xff]
        %v906 = vld [vmem:[#allocation4 + $0xe0] sm:$0xff]
        %v907 = vld [vmem:[#allocation4 + $0xe8] sm:$0xff]
        %v908 = vld [vmem:[#allocation4 + $0xf0] sm:$0xff]
        %v909 = vld [vmem:[#allocation4 + $0xf8] sm:$0xff]
        %v910 = vld [vmem:[#allocation4 + $0x100] sm:$0xff]
        %v911 = vld [vmem:[#allocation4 + $0x108] sm:$0xff]
        %v912 = vld [vmem:[#allocation4 + $0x110] sm:$0xff]
        %v913 = vld [vmem:[#allocation4 + $0x118] sm:$0xff]
        %v914 = vld [vmem:[#allocation4 + $0x120] sm:$0xff]
        %v915 = vld [vmem:[#allocation4 + $0x128] sm:$0xff]
        %v916 = vld [vmem:[#allocation4 + $0x130] sm:$0xff]
        %v917 = vld [vmem:[#allocation4 + $0x138] sm:$0xff]
        %v918 = vld [vmem:[#allocation4 + $0x140] sm:$0xff]
        %v919 = vld [vmem:[#allocation4 + $0x148] sm:$0xff]
        %v920 = vld [vmem:[#allocation4 + $0x150] sm:$0xff]
        %v921 = vld [vmem:[#allocation4 + $0x158] sm:$0xff]
        %v922 = vld [vmem:[#allocation4 + $0x160] sm:$0xff]
        %v923 = vld [vmem:[#allocation4 + $0x168] sm:$0xff]
        %v924 = vld [vmem:[#allocation4 + $0x170] sm:$0xff]
        %v925 = vld [vmem:[#allocation4 + $0x178] sm:$0xff]
        %v926 = vld [vmem:[#allocation4 + $0x180] sm:$0xff]
        %v927 = vld [vmem:[#allocation4 + $0x188] sm:$0xff]
        %v928 = vld [vmem:[#allocation4 + $0x190] sm:$0xff]
        %v929 = vld [vmem:[#allocation4 + $0x198] sm:$0xff]
        %v930 = vld [vmem:[#allocation4 + $0x1a0] sm:$0xff]
        %v931 = vld [vmem:[#allocation4 + $0x1a8] sm:$0xff]
        %v932 = vld [vmem:[#allocation4 + $0x1b0] sm:$0xff]
        %v933 = vld [vmem:[#allocation4 + $0x1b8] sm:$0xff]
        %v934 = vld [vmem:[#allocation4 + $0x1c0] sm:$0xff]
        %v935 = vld [vmem:[#allocation4 + $0x1c8] sm:$0xff]
        %v936 = vld [vmem:[#allocation4 + $0x1d0] sm:$0xff]
        %v937 = vld [vmem:[#allocation4 + $0x1d8] sm:$0xff]
        %v938 = vld [vmem:[#allocation4 + $0x1e0] sm:$0xff]
        %v939 = vld [vmem:[#allocation4 + $0x1e8] sm:$0xff]
        %v940 = vld [vmem:[#allocation4 + $0x1f0] sm:$0xff]
        %v941 = vld [vmem:[#allocation4 + $0x1f8] sm:$0xff]
        %942 = vmatpush.msra.mxu0 %v938
        %943 = vmatpush.msra.mxu0 %v934
        %944 = vmatpush.msra.mxu0 %v930
        %945 = vmatpush.msra.mxu0 %v926
        %946 = vmatpush.msra.mxu0 %v922
        %947 = vmatpush.msra.mxu0 %v918
        %948 = vmatpush.msra.mxu0 %v914
        %949 = vmatpush.msra.mxu0 %v910
        %950 = vmatpush.msra.mxu0 %v906
        %951 = vmatpush.msra.mxu0 %v902
        %952 = vmatpush.msra.mxu0 %v898
        %953 = vmatpush.msra.mxu0 %v894
        %954 = vmatpush.msra.mxu0 %v890
        %955 = vmatpush.msra.mxu0 %v886
        %956 = vmatpush.msra.mxu0 %v882
        %957 = vmatpush.msra.mxu0 %v878
        %958 = vmatmul.f32.gmra.mxu0 %v876
        %v959 = vpop.f32.mrf.mxu0
        %v960 = vadd.f32 0.0, %v959
        %961 = vdwg.mxu0
        %962 = vmatpush.msra.mxu0 %v939
        %963 = vmatpush.msra.mxu0 %v935
        %964 = vmatpush.msra.mxu0 %v931
        %965 = vmatpush.msra.mxu0 %v927
        %966 = vmatpush.msra.mxu0 %v923
        %967 = vmatpush.msra.mxu0 %v919
        %968 = vmatpush.msra.mxu0 %v915
        %969 = vmatpush.msra.mxu0 %v911
        %970 = vmatpush.msra.mxu0 %v907
        %971 = vmatpush.msra.mxu0 %v903
        %972 = vmatpush.msra.mxu0 %v899
        %973 = vmatpush.msra.mxu0 %v895
        %974 = vmatpush.msra.mxu0 %v891
        %975 = vmatpush.msra.mxu0 %v887
        %976 = vmatpush.msra.mxu0 %v883
        %977 = vmatpush.msra.mxu0 %v879
        %978 = vmatmul.f32.gmra.mxu0 %v876
        %v979 = vpop.f32.mrf.mxu0
        %v980 = vadd.f32 0.0, %v979
        %981 = vdwg.mxu0
        %982 = vmatpush.msra.mxu0 %v940
        %983 = vmatpush.msra.mxu0 %v936
        %984 = vmatpush.msra.mxu0 %v932
        %985 = vmatpush.msra.mxu0 %v928
        %986 = vmatpush.msra.mxu0 %v924
        %987 = vmatpush.msra.mxu0 %v920
        %988 = vmatpush.msra.mxu0 %v916
        %989 = vmatpush.msra.mxu0 %v912
        %990 = vmatpush.msra.mxu0 %v908
        %991 = vmatpush.msra.mxu0 %v904
        %992 = vmatpush.msra.mxu0 %v900
        %993 = vmatpush.msra.mxu0 %v896
        %994 = vmatpush.msra.mxu0 %v892
        %995 = vmatpush.msra.mxu0 %v888
        %996 = vmatpush.msra.mxu0 %v884
        %997 = vmatpush.msra.mxu0 %v880
        %998 = vmatmul.f32.gmra.mxu0 %v876
        %v999 = vpop.f32.mrf.mxu0
        %v1000 = vadd.f32 0.0, %v999
        %1001 = vdwg.mxu0
        %1002 = vmatpush.msra.mxu0 %v941
        %1003 = vmatpush.msra.mxu0 %v937
        %1004 = vmatpush.msra.mxu0 %v933
        %1005 = vmatpush.msra.mxu0 %v929
        %1006 = vmatpush.msra.mxu0 %v925
        %1007 = vmatpush.msra.mxu0 %v921
        %1008 = vmatpush.msra.mxu0 %v917
        %1009 = vmatpush.msra.mxu0 %v913
        %1010 = vmatpush.msra.mxu0 %v909
        %1011 = vmatpush.msra.mxu0 %v905
        %1012 = vmatpush.msra.mxu0 %v901
        %1013 = vmatpush.msra.mxu0 %v897
        %1014 = vmatpush.msra.mxu0 %v893
        %1015 = vmatpush.msra.mxu0 %v889
        %1016 = vmatpush.msra.mxu0 %v885
        %1017 = vmatpush.msra.mxu0 %v881
        %1018 = vmatmul.f32.gmra.mxu0 %v876
        %v1019 = vpop.f32.mrf.mxu0
        %v1020 = vadd.f32 0.0, %v1019
        %1021 = vdwg.mxu0
        %v1022 = vld [vmem:[#allocation7] sm:$0xff]
        %v1023 = vld [vmem:[#allocation7 + $0x8] sm:$0xff]
        %v1024 = vld [vmem:[#allocation7 + $0x10] sm:$0xff]
        %v1025 = vld [vmem:[#allocation7 + $0x18] sm:$0xff]
        %v1026 = vld [vmem:[#allocation7 + $0x20] sm:$0xff]
        %v1027 = vld [vmem:[#allocation7 + $0x28] sm:$0xff]
        %v1028 = vld [vmem:[#allocation7 + $0x30] sm:$0xff]
        %v1029 = vld [vmem:[#allocation7 + $0x38] sm:$0xff]
        %v1030 = vld [vmem:[#allocation7 + $0x40] sm:$0xff]
        %v1031 = vld [vmem:[#allocation7 + $0x48] sm:$0xff]
        %v1032 = vld [vmem:[#allocation7 + $0x50] sm:$0xff]
        %v1033 = vld [vmem:[#allocation7 + $0x58] sm:$0xff]
        %v1034 = vld [vmem:[#allocation7 + $0x60] sm:$0xff]
        %v1035 = vld [vmem:[#allocation7 + $0x68] sm:$0xff]
        %v1036 = vld [vmem:[#allocation7 + $0x70] sm:$0xff]
        %v1037 = vld [vmem:[#allocation7 + $0x78] sm:$0xff]
        %v1038 = vld [vmem:[#allocation7 + $0x80] sm:$0xff]
        %v1039 = vld [vmem:[#allocation7 + $0x88] sm:$0xff]
        %v1040 = vld [vmem:[#allocation7 + $0x90] sm:$0xff]
        %v1041 = vld [vmem:[#allocation7 + $0x98] sm:$0xff]
        %v1042 = vld [vmem:[#allocation7 + $0xa0] sm:$0xff]
        %v1043 = vld [vmem:[#allocation7 + $0xa8] sm:$0xff]
        %v1044 = vld [vmem:[#allocation7 + $0xb0] sm:$0xff]
        %v1045 = vld [vmem:[#allocation7 + $0xb8] sm:$0xff]
        %v1046 = vld [vmem:[#allocation7 + $0xc0] sm:$0xff]
        %v1047 = vld [vmem:[#allocation7 + $0xc8] sm:$0xff]
        %v1048 = vld [vmem:[#allocation7 + $0xd0] sm:$0xff]
        %v1049 = vld [vmem:[#allocation7 + $0xd8] sm:$0xff]
        %v1050 = vld [vmem:[#allocation7 + $0xe0] sm:$0xff]
        %v1051 = vld [vmem:[#allocation7 + $0xe8] sm:$0xff]
        %v1052 = vld [vmem:[#allocation7 + $0xf0] sm:$0xff]
        %v1053 = vld [vmem:[#allocation7 + $0xf8] sm:$0xff]
        %v1054 = vld [vmem:[#allocation7 + $0x100] sm:$0xff]
        %v1055 = vld [vmem:[#allocation7 + $0x108] sm:$0xff]
        %v1056 = vld [vmem:[#allocation7 + $0x110] sm:$0xff]
        %v1057 = vld [vmem:[#allocation7 + $0x118] sm:$0xff]
        %v1058 = vld [vmem:[#allocation7 + $0x120] sm:$0xff]
        %v1059 = vld [vmem:[#allocation7 + $0x128] sm:$0xff]
        %v1060 = vld [vmem:[#allocation7 + $0x130] sm:$0xff]
        %v1061 = vld [vmem:[#allocation7 + $0x138] sm:$0xff]
        %v1062 = vld [vmem:[#allocation7 + $0x140] sm:$0xff]
        %v1063 = vld [vmem:[#allocation7 + $0x148] sm:$0xff]
        %v1064 = vld [vmem:[#allocation7 + $0x150] sm:$0xff]
        %v1065 = vld [vmem:[#allocation7 + $0x158] sm:$0xff]
        %v1066 = vld [vmem:[#allocation7 + $0x160] sm:$0xff]
        %v1067 = vld [vmem:[#allocation7 + $0x168] sm:$0xff]
        %v1068 = vld [vmem:[#allocation7 + $0x170] sm:$0xff]
        %v1069 = vld [vmem:[#allocation7 + $0x178] sm:$0xff]
        %1070 = vmatpush.msra.mxu0 %v1067
        %1071 = vmatpush.msra.mxu0 %v1064
        %1072 = vmatpush.msra.mxu0 %v1061
        %1073 = vmatpush.msra.mxu0 %v1058
        %1074 = vmatpush.msra.mxu0 %v1055
        %1075 = vmatpush.msra.mxu0 %v1052
        %1076 = vmatpush.msra.mxu0 %v1049
        %1077 = vmatpush.msra.mxu0 %v1046
        %1078 = vmatpush.msra.mxu0 %v1043
        %1079 = vmatpush.msra.mxu0 %v1040
        %1080 = vmatpush.msra.mxu0 %v1037
        %1081 = vmatpush.msra.mxu0 %v1034
        %1082 = vmatpush.msra.mxu0 %v1031
        %1083 = vmatpush.msra.mxu0 %v1028
        %1084 = vmatpush.msra.mxu0 %v1025
        %1085 = vmatpush.msra.mxu0 %v1022
        %1086 = vmatmul.f32.gmra.mxu0 %v873
        %v1087 = vpop.f32.mrf.mxu0
        %v1088 = vadd.f32 0.0, %v1087
        %1089 = vdwg.mxu0
        %1090 = vmatpush.msra.mxu0 %v1068
        %1091 = vmatpush.msra.mxu0 %v1065
        %1092 = vmatpush.msra.mxu0 %v1062
        %1093 = vmatpush.msra.mxu0 %v1059
        %1094 = vmatpush.msra.mxu0 %v1056
        %1095 = vmatpush.msra.mxu0 %v1053
        %1096 = vmatpush.msra.mxu0 %v1050
        %1097 = vmatpush.msra.mxu0 %v1047
        %1098 = vmatpush.msra.mxu0 %v1044
        %1099 = vmatpush.msra.mxu0 %v1041
        %1100 = vmatpush.msra.mxu0 %v1038
        %1101 = vmatpush.msra.mxu0 %v1035
        %1102 = vmatpush.msra.mxu0 %v1032
        %1103 = vmatpush.msra.mxu0 %v1029
        %1104 = vmatpush.msra.mxu0 %v1026
        %1105 = vmatpush.msra.mxu0 %v1023
        %1106 = vmatmul.f32.gmra.mxu0 %v873
        %v1107 = vpop.f32.mrf.mxu0
        %v1108 = vadd.f32 0.0, %v1107
        %1109 = vdwg.mxu0
        %1110 = vmatpush.msra.mxu0 %v1069
        %1111 = vmatpush.msra.mxu0 %v1066
        %1112 = vmatpush.msra.mxu0 %v1063
        %1113 = vmatpush.msra.mxu0 %v1060
        %1114 = vmatpush.msra.mxu0 %v1057
        %1115 = vmatpush.msra.mxu0 %v1054
        %1116 = vmatpush.msra.mxu0 %v1051
        %1117 = vmatpush.msra.mxu0 %v1048
        %1118 = vmatpush.msra.mxu0 %v1045
        %1119 = vmatpush.msra.mxu0 %v1042
        %1120 = vmatpush.msra.mxu0 %v1039
        %1121 = vmatpush.msra.mxu0 %v1036
        %1122 = vmatpush.msra.mxu0 %v1033
        %1123 = vmatpush.msra.mxu0 %v1030
        %1124 = vmatpush.msra.mxu0 %v1027
        %1125 = vmatpush.msra.mxu0 %v1024
        %1126 = vmatmul.f32.gmra.mxu0 %v873
        %v1127 = vpop.f32.mrf.mxu0
        %v1128 = vadd.f32 0.0, %v1127
        %1129 = vdwg.mxu0
        %v1130 = vadd.f32 %v453, %v960
        %v1131 = vadd.f32 %v482, %v980
        %v1132 = vadd.f32 %v511, %v1000
        %v1133 = vadd.f32 %v1130, %v1088
        %v1134 = vadd.f32 %v1131, %v1108
        %v1135 = vadd.f32 %v1132, %v1128
        %v1136 = vxor.u32 %v1133, 2147483648
        %v1137 = vxor.u32 %v1134, 2147483648
        %v1138 = vxor.u32 %v1135, 2147483648
        %v1139 = vmul.f32 %v1136, 1.442695
        %v1140 = vpow.pop %v1139
        %v1141 = vmul.f32 %v1137, 1.442695
        %v1142 = vpow.pop %v1141
        %v1143 = vmul.f32 %v1138, 1.442695
        %v1144 = vpow.pop %v1143
        %v1145 = vadd.f32 %v1140, 1.0
        %v1146 = vadd.f32 %v1142, 1.0
        %v1147 = vadd.f32 %v1144, 1.0
        %v1148 = vrcp.pop %v1145
        %v1149 = vmul.f32 %v1145, %v1148
        %v1150 = vsub.f32 1.0, %v1149
        %v1151 = vmul.f32 %v1148, %v1150
        %v1152 = vadd.f32 %v1148, %v1151
        %vm1153 = vweird.f32 %v1145
        %vm1154 = vweird.f32 %v1148
        %vm1155 = vmor %vm1153, %vm1154
        %v1156 = vsel %vm1155, %v1148, %v1152
        %v1157 = vand.u32 2147483647, %v1145
        %vm1158 = vcmp.eq.f32.partialorder %v1157, 8.507059e+37
        %v1159 = vand.u32 %v1145, 2147483648
        %v1160 = vor.u32 1.1754944e-38, %v1159
        %v1161 = vsel %vm1158, %v1160, %v1156
        %v1162 = vmul.f32 1.0, %v1161
        %v1163 = vrcp.pop %v1146
        %v1164 = vmul.f32 %v1146, %v1163
        %v1165 = vsub.f32 1.0, %v1164
        %v1166 = vmul.f32 %v1163, %v1165
        %v1167 = vadd.f32 %v1163, %v1166
        %vm1168 = vweird.f32 %v1146
        %vm1169 = vweird.f32 %v1163
        %vm1170 = vmor %vm1168, %vm1169
        %v1171 = vsel %vm1170, %v1163, %v1167
        %v1172 = vand.u32 2147483647, %v1146
        %vm1173 = vcmp.eq.f32.partialorder %v1172, 8.507059e+37
        %v1174 = vand.u32 %v1146, 2147483648
        %v1175 = vor.u32 1.1754944e-38, %v1174
        %v1176 = vsel %vm1173, %v1175, %v1171
        %v1177 = vmul.f32 1.0, %v1176
        %v1178 = vrcp.pop %v1147
        %v1179 = vmul.f32 %v1147, %v1178
        %v1180 = vsub.f32 1.0, %v1179
        %v1181 = vmul.f32 %v1178, %v1180
        %v1182 = vadd.f32 %v1178, %v1181
        %vm1183 = vweird.f32 %v1147
        %vm1184 = vweird.f32 %v1178
        %vm1185 = vmor %vm1183, %vm1184
        %v1186 = vsel %vm1185, %v1178, %v1182
        %v1187 = vand.u32 2147483647, %v1147
        %vm1188 = vcmp.eq.f32.partialorder %v1187, 8.507059e+37
        %v1189 = vand.u32 %v1147, 2147483648
        %v1190 = vor.u32 1.1754944e-38, %v1189
        %v1191 = vsel %vm1188, %v1190, %v1186
        %v1192 = vmul.f32 1.0, %v1191
        %v1193 = vadd.f32 %v1020, %v550
        %v1194 = vtanh.pop %v1193
        %v1195 = vmul.f32 %v1177, %v873
        %v1196 = vmul.f32 %v1162, %v1194
        %v1197 = vadd.f32 %v1195, %v1196
        %v1198 = vtanh.pop %v1197
        %v1199 = vadd.f32 %v1198, %v540
        %v1200 = vmul.f32 %v1192, %v1199
        %s1201 = scalar_lea.vmem %s378, 8 [#allocation9]
        %1202 = vst [vmem:[%s1201] sm:$0xff] %v1200
        %v1203 = vld [vmem:[#allocation4] sm:$0xff]
        %v1204 = vld [vmem:[#allocation4 + $0x8] sm:$0xff]
        %v1205 = vld [vmem:[#allocation4 + $0x10] sm:$0xff]
        %v1206 = vld [vmem:[#allocation4 + $0x18] sm:$0xff]
        %v1207 = vld [vmem:[#allocation4 + $0x20] sm:$0xff]
        %v1208 = vld [vmem:[#allocation4 + $0x28] sm:$0xff]
        %v1209 = vld [vmem:[#allocation4 + $0x30] sm:$0xff]
        %v1210 = vld [vmem:[#allocation4 + $0x38] sm:$0xff]
        %v1211 = vld [vmem:[#allocation4 + $0x40] sm:$0xff]
        %v1212 = vld [vmem:[#allocation4 + $0x48] sm:$0xff]
        %v1213 = vld [vmem:[#allocation4 + $0x50] sm:$0xff]
        %v1214 = vld [vmem:[#allocation4 + $0x58] sm:$0xff]
        %v1215 = vld [vmem:[#allocation4 + $0x60] sm:$0xff]
        %v1216 = vld [vmem:[#allocation4 + $0x68] sm:$0xff]
        %v1217 = vld [vmem:[#allocation4 + $0x70] sm:$0xff]
        %v1218 = vld [vmem:[#allocation4 + $0x78] sm:$0xff]
        %v1219 = vld [vmem:[#allocation4 + $0x80] sm:$0xff]
        %v1220 = vld [vmem:[#allocation4 + $0x88] sm:$0xff]
        %v1221 = vld [vmem:[#allocation4 + $0x90] sm:$0xff]
        %v1222 = vld [vmem:[#allocation4 + $0x98] sm:$0xff]
        %v1223 = vld [vmem:[#allocation4 + $0xa0] sm:$0xff]
        %v1224 = vld [vmem:[#allocation4 + $0xa8] sm:$0xff]
        %v1225 = vld [vmem:[#allocation4 + $0xb0] sm:$0xff]
        %v1226 = vld [vmem:[#allocation4 + $0xb8] sm:$0xff]
        %v1227 = vld [vmem:[#allocation4 + $0xc0] sm:$0xff]
        %v1228 = vld [vmem:[#allocation4 + $0xc8] sm:$0xff]
        %v1229 = vld [vmem:[#allocation4 + $0xd0] sm:$0xff]
        %v1230 = vld [vmem:[#allocation4 + $0xd8] sm:$0xff]
        %v1231 = vld [vmem:[#allocation4 + $0xe0] sm:$0xff]
        %v1232 = vld [vmem:[#allocation4 + $0xe8] sm:$0xff]
        %v1233 = vld [vmem:[#allocation4 + $0xf0] sm:$0xff]
        %v1234 = vld [vmem:[#allocation4 + $0xf8] sm:$0xff]
        %v1235 = vld [vmem:[#allocation4 + $0x100] sm:$0xff]
        %v1236 = vld [vmem:[#allocation4 + $0x108] sm:$0xff]
        %v1237 = vld [vmem:[#allocation4 + $0x110] sm:$0xff]
        %v1238 = vld [vmem:[#allocation4 + $0x118] sm:$0xff]
        %v1239 = vld [vmem:[#allocation4 + $0x120] sm:$0xff]
        %v1240 = vld [vmem:[#allocation4 + $0x128] sm:$0xff]
        %v1241 = vld [vmem:[#allocation4 + $0x130] sm:$0xff]
        %v1242 = vld [vmem:[#allocation4 + $0x138] sm:$0xff]
        %v1243 = vld [vmem:[#allocation4 + $0x140] sm:$0xff]
        %v1244 = vld [vmem:[#allocation4 + $0x148] sm:$0xff]
        %v1245 = vld [vmem:[#allocation4 + $0x150] sm:$0xff]
        %v1246 = vld [vmem:[#allocation4 + $0x158] sm:$0xff]
        %v1247 = vld [vmem:[#allocation4 + $0x160] sm:$0xff]
        %v1248 = vld [vmem:[#allocation4 + $0x168] sm:$0xff]
        %v1249 = vld [vmem:[#allocation4 + $0x170] sm:$0xff]
        %v1250 = vld [vmem:[#allocation4 + $0x178] sm:$0xff]
        %v1251 = vld [vmem:[#allocation4 + $0x180] sm:$0xff]
        %v1252 = vld [vmem:[#allocation4 + $0x188] sm:$0xff]
        %v1253 = vld [vmem:[#allocation4 + $0x190] sm:$0xff]
        %v1254 = vld [vmem:[#allocation4 + $0x198] sm:$0xff]
        %v1255 = vld [vmem:[#allocation4 + $0x1a0] sm:$0xff]
        %v1256 = vld [vmem:[#allocation4 + $0x1a8] sm:$0xff]
        %v1257 = vld [vmem:[#allocation4 + $0x1b0] sm:$0xff]
        %v1258 = vld [vmem:[#allocation4 + $0x1b8] sm:$0xff]
        %v1259 = vld [vmem:[#allocation4 + $0x1c0] sm:$0xff]
        %v1260 = vld [vmem:[#allocation4 + $0x1c8] sm:$0xff]
        %v1261 = vld [vmem:[#allocation4 + $0x1d0] sm:$0xff]
        %v1262 = vld [vmem:[#allocation4 + $0x1d8] sm:$0xff]
        %v1263 = vld [vmem:[#allocation4 + $0x1e0] sm:$0xff]
        %v1264 = vld [vmem:[#allocation4 + $0x1e8] sm:$0xff]
        %v1265 = vld [vmem:[#allocation4 + $0x1f0] sm:$0xff]
        %v1266 = vld [vmem:[#allocation4 + $0x1f8] sm:$0xff]
        %1267 = vmatpush.msra.mxu0 %v1263
        %1268 = vmatpush.msra.mxu0 %v1259
        %1269 = vmatpush.msra.mxu0 %v1255
        %1270 = vmatpush.msra.mxu0 %v1251
        %1271 = vmatpush.msra.mxu0 %v1247
        %1272 = vmatpush.msra.mxu0 %v1243
        %1273 = vmatpush.msra.mxu0 %v1239
        %1274 = vmatpush.msra.mxu0 %v1235
        %1275 = vmatpush.msra.mxu0 %v1231
        %1276 = vmatpush.msra.mxu0 %v1227
        %1277 = vmatpush.msra.mxu0 %v1223
        %1278 = vmatpush.msra.mxu0 %v1219
        %1279 = vmatpush.msra.mxu0 %v1215
        %1280 = vmatpush.msra.mxu0 %v1211
        %1281 = vmatpush.msra.mxu0 %v1207
        %1282 = vmatpush.msra.mxu0 %v1203
        %1283 = vmatmul.f32.gmra.mxu0 %v1200
        %v1284 = vpop.f32.mrf.mxu0
        %v1285 = vadd.f32 0.0, %v1284
        %1286 = vdwg.mxu0
        %1287 = vmatpush.msra.mxu0 %v1264
        %1288 = vmatpush.msra.mxu0 %v1260
        %1289 = vmatpush.msra.mxu0 %v1256
        %1290 = vmatpush.msra.mxu0 %v1252
        %1291 = vmatpush.msra.mxu0 %v1248
        %1292 = vmatpush.msra.mxu0 %v1244
        %1293 = vmatpush.msra.mxu0 %v1240
        %1294 = vmatpush.msra.mxu0 %v1236
        %1295 = vmatpush.msra.mxu0 %v1232
        %1296 = vmatpush.msra.mxu0 %v1228
        %1297 = vmatpush.msra.mxu0 %v1224
        %1298 = vmatpush.msra.mxu0 %v1220
        %1299 = vmatpush.msra.mxu0 %v1216
        %1300 = vmatpush.msra.mxu0 %v1212
        %1301 = vmatpush.msra.mxu0 %v1208
        %1302 = vmatpush.msra.mxu0 %v1204
        %1303 = vmatmul.f32.gmra.mxu0 %v1200
        %v1304 = vpop.f32.mrf.mxu0
        %v1305 = vadd.f32 0.0, %v1304
        %1306 = vdwg.mxu0
        %1307 = vmatpush.msra.mxu0 %v1265
        %1308 = vmatpush.msra.mxu0 %v1261
        %1309 = vmatpush.msra.mxu0 %v1257
        %1310 = vmatpush.msra.mxu0 %v1253
        %1311 = vmatpush.msra.mxu0 %v1249
        %1312 = vmatpush.msra.mxu0 %v1245
        %1313 = vmatpush.msra.mxu0 %v1241
        %1314 = vmatpush.msra.mxu0 %v1237
        %1315 = vmatpush.msra.mxu0 %v1233
        %1316 = vmatpush.msra.mxu0 %v1229
        %1317 = vmatpush.msra.mxu0 %v1225
        %1318 = vmatpush.msra.mxu0 %v1221
        %1319 = vmatpush.msra.mxu0 %v1217
        %1320 = vmatpush.msra.mxu0 %v1213
        %1321 = vmatpush.msra.mxu0 %v1209
        %1322 = vmatpush.msra.mxu0 %v1205
        %1323 = vmatmul.f32.gmra.mxu0 %v1200
        %v1324 = vpop.f32.mrf.mxu0
        %v1325 = vadd.f32 0.0, %v1324
        %1326 = vdwg.mxu0
        %1327 = vmatpush.msra.mxu0 %v1266
        %1328 = vmatpush.msra.mxu0 %v1262
        %1329 = vmatpush.msra.mxu0 %v1258
        %1330 = vmatpush.msra.mxu0 %v1254
        %1331 = vmatpush.msra.mxu0 %v1250
        %1332 = vmatpush.msra.mxu0 %v1246
        %1333 = vmatpush.msra.mxu0 %v1242
        %1334 = vmatpush.msra.mxu0 %v1238
        %1335 = vmatpush.msra.mxu0 %v1234
        %1336 = vmatpush.msra.mxu0 %v1230
        %1337 = vmatpush.msra.mxu0 %v1226
        %1338 = vmatpush.msra.mxu0 %v1222
        %1339 = vmatpush.msra.mxu0 %v1218
        %1340 = vmatpush.msra.mxu0 %v1214
        %1341 = vmatpush.msra.mxu0 %v1210
        %1342 = vmatpush.msra.mxu0 %v1206
        %1343 = vmatmul.f32.gmra.mxu0 %v1200
        %v1344 = vpop.f32.mrf.mxu0
        %v1345 = vadd.f32 0.0, %v1344
        %1346 = vdwg.mxu0
        %v1347 = vld [vmem:[#allocation7] sm:$0xff]
        %v1348 = vld [vmem:[#allocation7 + $0x8] sm:$0xff]
        %v1349 = vld [vmem:[#allocation7 + $0x10] sm:$0xff]
        %v1350 = vld [vmem:[#allocation7 + $0x18] sm:$0xff]
        %v1351 = vld [vmem:[#allocation7 + $0x20] sm:$0xff]
        %v1352 = vld [vmem:[#allocation7 + $0x28] sm:$0xff]
        %v1353 = vld [vmem:[#allocation7 + $0x30] sm:$0xff]
        %v1354 = vld [vmem:[#allocation7 + $0x38] sm:$0xff]
        %v1355 = vld [vmem:[#allocation7 + $0x40] sm:$0xff]
        %v1356 = vld [vmem:[#allocation7 + $0x48] sm:$0xff]
        %v1357 = vld [vmem:[#allocation7 + $0x50] sm:$0xff]
        %v1358 = vld [vmem:[#allocation7 + $0x58] sm:$0xff]
        %v1359 = vld [vmem:[#allocation7 + $0x60] sm:$0xff]
        %v1360 = vld [vmem:[#allocation7 + $0x68] sm:$0xff]
        %v1361 = vld [vmem:[#allocation7 + $0x70] sm:$0xff]
        %v1362 = vld [vmem:[#allocation7 + $0x78] sm:$0xff]
        %v1363 = vld [vmem:[#allocation7 + $0x80] sm:$0xff]
        %v1364 = vld [vmem:[#allocation7 + $0x88] sm:$0xff]
        %v1365 = vld [vmem:[#allocation7 + $0x90] sm:$0xff]
        %v1366 = vld [vmem:[#allocation7 + $0x98] sm:$0xff]
        %v1367 = vld [vmem:[#allocation7 + $0xa0] sm:$0xff]
        %v1368 = vld [vmem:[#allocation7 + $0xa8] sm:$0xff]
        %v1369 = vld [vmem:[#allocation7 + $0xb0] sm:$0xff]
        %v1370 = vld [vmem:[#allocation7 + $0xb8] sm:$0xff]
        %v1371 = vld [vmem:[#allocation7 + $0xc0] sm:$0xff]
        %v1372 = vld [vmem:[#allocation7 + $0xc8] sm:$0xff]
        %v1373 = vld [vmem:[#allocation7 + $0xd0] sm:$0xff]
        %v1374 = vld [vmem:[#allocation7 + $0xd8] sm:$0xff]
        %v1375 = vld [vmem:[#allocation7 + $0xe0] sm:$0xff]
        %v1376 = vld [vmem:[#allocation7 + $0xe8] sm:$0xff]
        %v1377 = vld [vmem:[#allocation7 + $0xf0] sm:$0xff]
        %v1378 = vld [vmem:[#allocation7 + $0xf8] sm:$0xff]
        %v1379 = vld [vmem:[#allocation7 + $0x100] sm:$0xff]
        %v1380 = vld [vmem:[#allocation7 + $0x108] sm:$0xff]
        %v1381 = vld [vmem:[#allocation7 + $0x110] sm:$0xff]
        %v1382 = vld [vmem:[#allocation7 + $0x118] sm:$0xff]
        %v1383 = vld [vmem:[#allocation7 + $0x120] sm:$0xff]
        %v1384 = vld [vmem:[#allocation7 + $0x128] sm:$0xff]
        %v1385 = vld [vmem:[#allocation7 + $0x130] sm:$0xff]
        %v1386 = vld [vmem:[#allocation7 + $0x138] sm:$0xff]
        %v1387 = vld [vmem:[#allocation7 + $0x140] sm:$0xff]
        %v1388 = vld [vmem:[#allocation7 + $0x148] sm:$0xff]
        %v1389 = vld [vmem:[#allocation7 + $0x150] sm:$0xff]
        %v1390 = vld [vmem:[#allocation7 + $0x158] sm:$0xff]
        %v1391 = vld [vmem:[#allocation7 + $0x160] sm:$0xff]
        %v1392 = vld [vmem:[#allocation7 + $0x168] sm:$0xff]
        %v1393 = vld [vmem:[#allocation7 + $0x170] sm:$0xff]
        %v1394 = vld [vmem:[#allocation7 + $0x178] sm:$0xff]
        %1395 = vmatpush.msra.mxu0 %v1392
        %1396 = vmatpush.msra.mxu0 %v1389
        %1397 = vmatpush.msra.mxu0 %v1386
        %1398 = vmatpush.msra.mxu0 %v1383
        %1399 = vmatpush.msra.mxu0 %v1380
        %1400 = vmatpush.msra.mxu0 %v1377
        %1401 = vmatpush.msra.mxu0 %v1374
        %1402 = vmatpush.msra.mxu0 %v1371
        %1403 = vmatpush.msra.mxu0 %v1368
        %1404 = vmatpush.msra.mxu0 %v1365
        %1405 = vmatpush.msra.mxu0 %v1362
        %1406 = vmatpush.msra.mxu0 %v1359
        %1407 = vmatpush.msra.mxu0 %v1356
        %1408 = vmatpush.msra.mxu0 %v1353
        %1409 = vmatpush.msra.mxu0 %v1350
        %1410 = vmatpush.msra.mxu0 %v1347
        %1411 = vmatmul.f32.gmra.mxu0 %v1197
        %v1412 = vpop.f32.mrf.mxu0
        %v1413 = vadd.f32 0.0, %v1412
        %1414 = vdwg.mxu0
        %1415 = vmatpush.msra.mxu0 %v1393
        %1416 = vmatpush.msra.mxu0 %v1390
        %1417 = vmatpush.msra.mxu0 %v1387
        %1418 = vmatpush.msra.mxu0 %v1384
        %1419 = vmatpush.msra.mxu0 %v1381
        %1420 = vmatpush.msra.mxu0 %v1378
        %1421 = vmatpush.msra.mxu0 %v1375
        %1422 = vmatpush.msra.mxu0 %v1372
        %1423 = vmatpush.msra.mxu0 %v1369
        %1424 = vmatpush.msra.mxu0 %v1366
        %1425 = vmatpush.msra.mxu0 %v1363
        %1426 = vmatpush.msra.mxu0 %v1360
        %1427 = vmatpush.msra.mxu0 %v1357
        %1428 = vmatpush.msra.mxu0 %v1354
        %1429 = vmatpush.msra.mxu0 %v1351
        %1430 = vmatpush.msra.mxu0 %v1348
        %1431 = vmatmul.f32.gmra.mxu0 %v1197
        %v1432 = vpop.f32.mrf.mxu0
        %v1433 = vadd.f32 0.0, %v1432
        %1434 = vdwg.mxu0
        %1435 = vmatpush.msra.mxu0 %v1394
        %1436 = vmatpush.msra.mxu0 %v1391
        %1437 = vmatpush.msra.mxu0 %v1388
        %1438 = vmatpush.msra.mxu0 %v1385
        %1439 = vmatpush.msra.mxu0 %v1382
        %1440 = vmatpush.msra.mxu0 %v1379
        %1441 = vmatpush.msra.mxu0 %v1376
        %1442 = vmatpush.msra.mxu0 %v1373
        %1443 = vmatpush.msra.mxu0 %v1370
        %1444 = vmatpush.msra.mxu0 %v1367
        %1445 = vmatpush.msra.mxu0 %v1364
        %1446 = vmatpush.msra.mxu0 %v1361
        %1447 = vmatpush.msra.mxu0 %v1358
        %1448 = vmatpush.msra.mxu0 %v1355
        %1449 = vmatpush.msra.mxu0 %v1352
        %1450 = vmatpush.msra.mxu0 %v1349
        %1451 = vmatmul.f32.gmra.mxu0 %v1197
        %v1452 = vpop.f32.mrf.mxu0
        %v1453 = vadd.f32 0.0, %v1452
        %1454 = vdwg.mxu0
        %v1455 = vadd.f32 %v456, %v1285
        %v1456 = vadd.f32 %v485, %v1305
        %v1457 = vadd.f32 %v514, %v1325
        %v1458 = vadd.f32 %v1455, %v1413
        %v1459 = vadd.f32 %v1456, %v1433
        %v1460 = vadd.f32 %v1457, %v1453
        %v1461 = vxor.u32 %v1458, 2147483648
        %v1462 = vxor.u32 %v1459, 2147483648
        %v1463 = vxor.u32 %v1460, 2147483648
        %v1464 = vmul.f32 %v1461, 1.442695
        %v1465 = vpow.pop %v1464
        %v1466 = vmul.f32 %v1462, 1.442695
        %v1467 = vpow.pop %v1466
        %v1468 = vmul.f32 %v1463, 1.442695
        %v1469 = vpow.pop %v1468
        %v1470 = vadd.f32 %v1465, 1.0
        %v1471 = vadd.f32 %v1467, 1.0
        %v1472 = vadd.f32 %v1469, 1.0
        %v1473 = vrcp.pop %v1470
        %v1474 = vmul.f32 %v1470, %v1473
        %v1475 = vsub.f32 1.0, %v1474
        %v1476 = vmul.f32 %v1473, %v1475
        %v1477 = vadd.f32 %v1473, %v1476
        %vm1478 = vweird.f32 %v1470
        %vm1479 = vweird.f32 %v1473
        %vm1480 = vmor %vm1478, %vm1479
        %v1481 = vsel %vm1480, %v1473, %v1477
        %v1482 = vand.u32 2147483647, %v1470
        %vm1483 = vcmp.eq.f32.partialorder %v1482, 8.507059e+37
        %v1484 = vand.u32 %v1470, 2147483648
        %v1485 = vor.u32 1.1754944e-38, %v1484
        %v1486 = vsel %vm1483, %v1485, %v1481
        %v1487 = vmul.f32 1.0, %v1486
        %v1488 = vrcp.pop %v1471
        %v1489 = vmul.f32 %v1471, %v1488
        %v1490 = vsub.f32 1.0, %v1489
        %v1491 = vmul.f32 %v1488, %v1490
        %v1492 = vadd.f32 %v1488, %v1491
        %vm1493 = vweird.f32 %v1471
        %vm1494 = vweird.f32 %v1488
        %vm1495 = vmor %vm1493, %vm1494
        %v1496 = vsel %vm1495, %v1488, %v1492
        %v1497 = vand.u32 2147483647, %v1471
        %vm1498 = vcmp.eq.f32.partialorder %v1497, 8.507059e+37
        %v1499 = vand.u32 %v1471, 2147483648
        %v1500 = vor.u32 1.1754944e-38, %v1499
        %v1501 = vsel %vm1498, %v1500, %v1496
        %v1502 = vmul.f32 1.0, %v1501
        %v1503 = vrcp.pop %v1472
        %v1504 = vmul.f32 %v1472, %v1503
        %v1505 = vsub.f32 1.0, %v1504
        %v1506 = vmul.f32 %v1503, %v1505
        %v1507 = vadd.f32 %v1503, %v1506
        %vm1508 = vweird.f32 %v1472
        %vm1509 = vweird.f32 %v1503
        %vm1510 = vmor %vm1508, %vm1509
        %v1511 = vsel %vm1510, %v1503, %v1507
        %v1512 = vand.u32 2147483647, %v1472
        %vm1513 = vcmp.eq.f32.partialorder %v1512, 8.507059e+37
        %v1514 = vand.u32 %v1472, 2147483648
        %v1515 = vor.u32 1.1754944e-38, %v1514
        %v1516 = vsel %vm1513, %v1515, %v1511
        %v1517 = vmul.f32 1.0, %v1516
        %v1518 = vadd.f32 %v1345, %v550
        %v1519 = vtanh.pop %v1518
        %v1520 = vmul.f32 %v1502, %v1197
        %v1521 = vmul.f32 %v1487, %v1519
        %v1522 = vadd.f32 %v1520, %v1521
        %v1523 = vtanh.pop %v1522
        %v1524 = vadd.f32 %v1523, %v543
        %v1525 = vmul.f32 %v1517, %v1524
        %s1526 = scalar_lea.vmem %s378, 16 [#allocation9]
        %1527 = vst [vmem:[%s1526] sm:$0xff] %v1525
        %v1528 = vld [vmem:[#allocation4] sm:$0xff]
        %v1529 = vld [vmem:[#allocation4 + $0x8] sm:$0xff]
        %v1530 = vld [vmem:[#allocation4 + $0x10] sm:$0xff]
        %v1531 = vld [vmem:[#allocation4 + $0x18] sm:$0xff]
        %v1532 = vld [vmem:[#allocation4 + $0x20] sm:$0xff]
        %v1533 = vld [vmem:[#allocation4 + $0x28] sm:$0xff]
        %v1534 = vld [vmem:[#allocation4 + $0x30] sm:$0xff]
        %v1535 = vld [vmem:[#allocation4 + $0x38] sm:$0xff]
        %v1536 = vld [vmem:[#allocation4 + $0x40] sm:$0xff]
        %v1537 = vld [vmem:[#allocation4 + $0x48] sm:$0xff]
        %v1538 = vld [vmem:[#allocation4 + $0x50] sm:$0xff]
        %v1539 = vld [vmem:[#allocation4 + $0x58] sm:$0xff]
        %v1540 = vld [vmem:[#allocation4 + $0x60] sm:$0xff]
        %v1541 = vld [vmem:[#allocation4 + $0x68] sm:$0xff]
        %v1542 = vld [vmem:[#allocation4 + $0x70] sm:$0xff]
        %v1543 = vld [vmem:[#allocation4 + $0x78] sm:$0xff]
        %v1544 = vld [vmem:[#allocation4 + $0x80] sm:$0xff]
        %v1545 = vld [vmem:[#allocation4 + $0x88] sm:$0xff]
        %v1546 = vld [vmem:[#allocation4 + $0x90] sm:$0xff]
        %v1547 = vld [vmem:[#allocation4 + $0x98] sm:$0xff]
        %v1548 = vld [vmem:[#allocation4 + $0xa0] sm:$0xff]
        %v1549 = vld [vmem:[#allocation4 + $0xa8] sm:$0xff]
        %v1550 = vld [vmem:[#allocation4 + $0xb0] sm:$0xff]
        %v1551 = vld [vmem:[#allocation4 + $0xb8] sm:$0xff]
        %v1552 = vld [vmem:[#allocation4 + $0xc0] sm:$0xff]
        %v1553 = vld [vmem:[#allocation4 + $0xc8] sm:$0xff]
        %v1554 = vld [vmem:[#allocation4 + $0xd0] sm:$0xff]
        %v1555 = vld [vmem:[#allocation4 + $0xd8] sm:$0xff]
        %v1556 = vld [vmem:[#allocation4 + $0xe0] sm:$0xff]
        %v1557 = vld [vmem:[#allocation4 + $0xe8] sm:$0xff]
        %v1558 = vld [vmem:[#allocation4 + $0xf0] sm:$0xff]
        %v1559 = vld [vmem:[#allocation4 + $0xf8] sm:$0xff]
        %v1560 = vld [vmem:[#allocation4 + $0x100] sm:$0xff]
        %v1561 = vld [vmem:[#allocation4 + $0x108] sm:$0xff]
        %v1562 = vld [vmem:[#allocation4 + $0x110] sm:$0xff]
        %v1563 = vld [vmem:[#allocation4 + $0x118] sm:$0xff]
        %v1564 = vld [vmem:[#allocation4 + $0x120] sm:$0xff]
        %v1565 = vld [vmem:[#allocation4 + $0x128] sm:$0xff]
        %v1566 = vld [vmem:[#allocation4 + $0x130] sm:$0xff]
        %v1567 = vld [vmem:[#allocation4 + $0x138] sm:$0xff]
        %v1568 = vld [vmem:[#allocation4 + $0x140] sm:$0xff]
        %v1569 = vld [vmem:[#allocation4 + $0x148] sm:$0xff]
        %v1570 = vld [vmem:[#allocation4 + $0x150] sm:$0xff]
        %v1571 = vld [vmem:[#allocation4 + $0x158] sm:$0xff]
        %v1572 = vld [vmem:[#allocation4 + $0x160] sm:$0xff]
        %v1573 = vld [vmem:[#allocation4 + $0x168] sm:$0xff]
        %v1574 = vld [vmem:[#allocation4 + $0x170] sm:$0xff]
        %v1575 = vld [vmem:[#allocation4 + $0x178] sm:$0xff]
        %v1576 = vld [vmem:[#allocation4 + $0x180] sm:$0xff]
        %v1577 = vld [vmem:[#allocation4 + $0x188] sm:$0xff]
        %v1578 = vld [vmem:[#allocation4 + $0x190] sm:$0xff]
        %v1579 = vld [vmem:[#allocation4 + $0x198] sm:$0xff]
        %v1580 = vld [vmem:[#allocation4 + $0x1a0] sm:$0xff]
        %v1581 = vld [vmem:[#allocation4 + $0x1a8] sm:$0xff]
        %v1582 = vld [vmem:[#allocation4 + $0x1b0] sm:$0xff]
        %v1583 = vld [vmem:[#allocation4 + $0x1b8] sm:$0xff]
        %v1584 = vld [vmem:[#allocation4 + $0x1c0] sm:$0xff]
        %v1585 = vld [vmem:[#allocation4 + $0x1c8] sm:$0xff]
        %v1586 = vld [vmem:[#allocation4 + $0x1d0] sm:$0xff]
        %v1587 = vld [vmem:[#allocation4 + $0x1d8] sm:$0xff]
        %v1588 = vld [vmem:[#allocation4 + $0x1e0] sm:$0xff]
        %v1589 = vld [vmem:[#allocation4 + $0x1e8] sm:$0xff]
        %v1590 = vld [vmem:[#allocation4 + $0x1f0] sm:$0xff]
        %v1591 = vld [vmem:[#allocation4 + $0x1f8] sm:$0xff]
        %1592 = vmatpush.msra.mxu0 %v1588
        %1593 = vmatpush.msra.mxu0 %v1584
        %1594 = vmatpush.msra.mxu0 %v1580
        %1595 = vmatpush.msra.mxu0 %v1576
        %1596 = vmatpush.msra.mxu0 %v1572
        %1597 = vmatpush.msra.mxu0 %v1568
        %1598 = vmatpush.msra.mxu0 %v1564
        %1599 = vmatpush.msra.mxu0 %v1560
        %1600 = vmatpush.msra.mxu0 %v1556
        %1601 = vmatpush.msra.mxu0 %v1552
        %1602 = vmatpush.msra.mxu0 %v1548
        %1603 = vmatpush.msra.mxu0 %v1544
        %1604 = vmatpush.msra.mxu0 %v1540
        %1605 = vmatpush.msra.mxu0 %v1536
        %1606 = vmatpush.msra.mxu0 %v1532
        %1607 = vmatpush.msra.mxu0 %v1528
        %1608 = vmatmul.f32.gmra.mxu0 %v1525
        %v1609 = vpop.f32.mrf.mxu0
        %v1610 = vadd.f32 0.0, %v1609
        %1611 = vdwg.mxu0
        %1612 = vmatpush.msra.mxu0 %v1589
        %1613 = vmatpush.msra.mxu0 %v1585
        %1614 = vmatpush.msra.mxu0 %v1581
        %1615 = vmatpush.msra.mxu0 %v1577
        %1616 = vmatpush.msra.mxu0 %v1573
        %1617 = vmatpush.msra.mxu0 %v1569
        %1618 = vmatpush.msra.mxu0 %v1565
        %1619 = vmatpush.msra.mxu0 %v1561
        %1620 = vmatpush.msra.mxu0 %v1557
        %1621 = vmatpush.msra.mxu0 %v1553
        %1622 = vmatpush.msra.mxu0 %v1549
        %1623 = vmatpush.msra.mxu0 %v1545
        %1624 = vmatpush.msra.mxu0 %v1541
        %1625 = vmatpush.msra.mxu0 %v1537
        %1626 = vmatpush.msra.mxu0 %v1533
        %1627 = vmatpush.msra.mxu0 %v1529
        %1628 = vmatmul.f32.gmra.mxu0 %v1525
        %v1629 = vpop.f32.mrf.mxu0
        %v1630 = vadd.f32 0.0, %v1629
        %1631 = vdwg.mxu0
        %1632 = vmatpush.msra.mxu0 %v1590
        %1633 = vmatpush.msra.mxu0 %v1586
        %1634 = vmatpush.msra.mxu0 %v1582
        %1635 = vmatpush.msra.mxu0 %v1578
        %1636 = vmatpush.msra.mxu0 %v1574
        %1637 = vmatpush.msra.mxu0 %v1570
        %1638 = vmatpush.msra.mxu0 %v1566
        %1639 = vmatpush.msra.mxu0 %v1562
        %1640 = vmatpush.msra.mxu0 %v1558
        %1641 = vmatpush.msra.mxu0 %v1554
        %1642 = vmatpush.msra.mxu0 %v1550
        %1643 = vmatpush.msra.mxu0 %v1546
        %1644 = vmatpush.msra.mxu0 %v1542
        %1645 = vmatpush.msra.mxu0 %v1538
        %1646 = vmatpush.msra.mxu0 %v1534
        %1647 = vmatpush.msra.mxu0 %v1530
        %1648 = vmatmul.f32.gmra.mxu0 %v1525
        %v1649 = vpop.f32.mrf.mxu0
        %v1650 = vadd.f32 0.0, %v1649
        %1651 = vdwg.mxu0
        %1652 = vmatpush.msra.mxu0 %v1591
        %1653 = vmatpush.msra.mxu0 %v1587
        %1654 = vmatpush.msra.mxu0 %v1583
        %1655 = vmatpush.msra.mxu0 %v1579
        %1656 = vmatpush.msra.mxu0 %v1575
        %1657 = vmatpush.msra.mxu0 %v1571
        %1658 = vmatpush.msra.mxu0 %v1567
        %1659 = vmatpush.msra.mxu0 %v1563
        %1660 = vmatpush.msra.mxu0 %v1559
        %1661 = vmatpush.msra.mxu0 %v1555
        %1662 = vmatpush.msra.mxu0 %v1551
        %1663 = vmatpush.msra.mxu0 %v1547
        %1664 = vmatpush.msra.mxu0 %v1543
        %1665 = vmatpush.msra.mxu0 %v1539
        %1666 = vmatpush.msra.mxu0 %v1535
        %1667 = vmatpush.msra.mxu0 %v1531
        %1668 = vmatmul.f32.gmra.mxu0 %v1525
        %v1669 = vpop.f32.mrf.mxu0
        %v1670 = vadd.f32 0.0, %v1669
        %1671 = vdwg.mxu0
        %v1672 = vld [vmem:[#allocation7] sm:$0xff]
        %v1673 = vld [vmem:[#allocation7 + $0x8] sm:$0xff]
        %v1674 = vld [vmem:[#allocation7 + $0x10] sm:$0xff]
        %v1675 = vld [vmem:[#allocation7 + $0x18] sm:$0xff]
        %v1676 = vld [vmem:[#allocation7 + $0x20] sm:$0xff]
        %v1677 = vld [vmem:[#allocation7 + $0x28] sm:$0xff]
        %v1678 = vld [vmem:[#allocation7 + $0x30] sm:$0xff]
        %v1679 = vld [vmem:[#allocation7 + $0x38] sm:$0xff]
        %v1680 = vld [vmem:[#allocation7 + $0x40] sm:$0xff]
        %v1681 = vld [vmem:[#allocation7 + $0x48] sm:$0xff]
        %v1682 = vld [vmem:[#allocation7 + $0x50] sm:$0xff]
        %v1683 = vld [vmem:[#allocation7 + $0x58] sm:$0xff]
        %v1684 = vld [vmem:[#allocation7 + $0x60] sm:$0xff]
        %v1685 = vld [vmem:[#allocation7 + $0x68] sm:$0xff]
        %v1686 = vld [vmem:[#allocation7 + $0x70] sm:$0xff]
        %v1687 = vld [vmem:[#allocation7 + $0x78] sm:$0xff]
        %v1688 = vld [vmem:[#allocation7 + $0x80] sm:$0xff]
        %v1689 = vld [vmem:[#allocation7 + $0x88] sm:$0xff]
        %v1690 = vld [vmem:[#allocation7 + $0x90] sm:$0xff]
        %v1691 = vld [vmem:[#allocation7 + $0x98] sm:$0xff]
        %v1692 = vld [vmem:[#allocation7 + $0xa0] sm:$0xff]
        %v1693 = vld [vmem:[#allocation7 + $0xa8] sm:$0xff]
        %v1694 = vld [vmem:[#allocation7 + $0xb0] sm:$0xff]
        %v1695 = vld [vmem:[#allocation7 + $0xb8] sm:$0xff]
        %v1696 = vld [vmem:[#allocation7 + $0xc0] sm:$0xff]
        %v1697 = vld [vmem:[#allocation7 + $0xc8] sm:$0xff]
        %v1698 = vld [vmem:[#allocation7 + $0xd0] sm:$0xff]
        %v1699 = vld [vmem:[#allocation7 + $0xd8] sm:$0xff]
        %v1700 = vld [vmem:[#allocation7 + $0xe0] sm:$0xff]
        %v1701 = vld [vmem:[#allocation7 + $0xe8] sm:$0xff]
        %v1702 = vld [vmem:[#allocation7 + $0xf0] sm:$0xff]
        %v1703 = vld [vmem:[#allocation7 + $0xf8] sm:$0xff]
        %v1704 = vld [vmem:[#allocation7 + $0x100] sm:$0xff]
        %v1705 = vld [vmem:[#allocation7 + $0x108] sm:$0xff]
        %v1706 = vld [vmem:[#allocation7 + $0x110] sm:$0xff]
        %v1707 = vld [vmem:[#allocation7 + $0x118] sm:$0xff]
        %v1708 = vld [vmem:[#allocation7 + $0x120] sm:$0xff]
        %v1709 = vld [vmem:[#allocation7 + $0x128] sm:$0xff]
        %v1710 = vld [vmem:[#allocation7 + $0x130] sm:$0xff]
        %v1711 = vld [vmem:[#allocation7 + $0x138] sm:$0xff]
        %v1712 = vld [vmem:[#allocation7 + $0x140] sm:$0xff]
        %v1713 = vld [vmem:[#allocation7 + $0x148] sm:$0xff]
        %v1714 = vld [vmem:[#allocation7 + $0x150] sm:$0xff]
        %v1715 = vld [vmem:[#allocation7 + $0x158] sm:$0xff]
        %v1716 = vld [vmem:[#allocation7 + $0x160] sm:$0xff]
        %v1717 = vld [vmem:[#allocation7 + $0x168] sm:$0xff]
        %v1718 = vld [vmem:[#allocation7 + $0x170] sm:$0xff]
        %v1719 = vld [vmem:[#allocation7 + $0x178] sm:$0xff]
        %1720 = vmatpush.msra.mxu0 %v1717
        %1721 = vmatpush.msra.mxu0 %v1714
        %1722 = vmatpush.msra.mxu0 %v1711
        %1723 = vmatpush.msra.mxu0 %v1708
        %1724 = vmatpush.msra.mxu0 %v1705
        %1725 = vmatpush.msra.mxu0 %v1702
        %1726 = vmatpush.msra.mxu0 %v1699
        %1727 = vmatpush.msra.mxu0 %v1696
        %1728 = vmatpush.msra.mxu0 %v1693
        %1729 = vmatpush.msra.mxu0 %v1690
        %1730 = vmatpush.msra.mxu0 %v1687
        %1731 = vmatpush.msra.mxu0 %v1684
        %1732 = vmatpush.msra.mxu0 %v1681
        %1733 = vmatpush.msra.mxu0 %v1678
        %1734 = vmatpush.msra.mxu0 %v1675
        %1735 = vmatpush.msra.mxu0 %v1672
        %1736 = vmatmul.f32.gmra.mxu0 %v1522
        %v1737 = vpop.f32.mrf.mxu0
        %v1738 = vadd.f32 0.0, %v1737
        %1739 = vdwg.mxu0
        %1740 = vmatpush.msra.mxu0 %v1718
        %1741 = vmatpush.msra.mxu0 %v1715
        %1742 = vmatpush.msra.mxu0 %v1712
        %1743 = vmatpush.msra.mxu0 %v1709
        %1744 = vmatpush.msra.mxu0 %v1706
        %1745 = vmatpush.msra.mxu0 %v1703
        %1746 = vmatpush.msra.mxu0 %v1700
        %1747 = vmatpush.msra.mxu0 %v1697
        %1748 = vmatpush.msra.mxu0 %v1694
        %1749 = vmatpush.msra.mxu0 %v1691
        %1750 = vmatpush.msra.mxu0 %v1688
        %1751 = vmatpush.msra.mxu0 %v1685
        %1752 = vmatpush.msra.mxu0 %v1682
        %1753 = vmatpush.msra.mxu0 %v1679
        %1754 = vmatpush.msra.mxu0 %v1676
        %1755 = vmatpush.msra.mxu0 %v1673
        %1756 = vmatmul.f32.gmra.mxu0 %v1522
        %v1757 = vpop.f32.mrf.mxu0
        %v1758 = vadd.f32 0.0, %v1757
        %1759 = vdwg.mxu0
        %1760 = vmatpush.msra.mxu0 %v1719
        %1761 = vmatpush.msra.mxu0 %v1716
        %1762 = vmatpush.msra.mxu0 %v1713
        %1763 = vmatpush.msra.mxu0 %v1710
        %1764 = vmatpush.msra.mxu0 %v1707
        %1765 = vmatpush.msra.mxu0 %v1704
        %1766 = vmatpush.msra.mxu0 %v1701
        %1767 = vmatpush.msra.mxu0 %v1698
        %1768 = vmatpush.msra.mxu0 %v1695
        %1769 = vmatpush.msra.mxu0 %v1692
        %1770 = vmatpush.msra.mxu0 %v1689
        %1771 = vmatpush.msra.mxu0 %v1686
        %1772 = vmatpush.msra.mxu0 %v1683
        %1773 = vmatpush.msra.mxu0 %v1680
        %1774 = vmatpush.msra.mxu0 %v1677
        %1775 = vmatpush.msra.mxu0 %v1674
        %1776 = vmatmul.f32.gmra.mxu0 %v1522
        %v1777 = vpop.f32.mrf.mxu0
        %v1778 = vadd.f32 0.0, %v1777
        %1779 = vdwg.mxu0
        %v1780 = vadd.f32 %v459, %v1610
        %v1781 = vadd.f32 %v488, %v1630
        %v1782 = vadd.f32 %v517, %v1650
        %v1783 = vadd.f32 %v1780, %v1738
        %v1784 = vadd.f32 %v1781, %v1758
        %v1785 = vadd.f32 %v1782, %v1778
        %v1786 = vxor.u32 %v1783, 2147483648
        %v1787 = vxor.u32 %v1784, 2147483648
        %v1788 = vxor.u32 %v1785, 2147483648
        %v1789 = vmul.f32 %v1786, 1.442695
        %v1790 = vpow.pop %v1789
        %v1791 = vmul.f32 %v1787, 1.442695
        %v1792 = vpow.pop %v1791
        %v1793 = vmul.f32 %v1788, 1.442695
        %v1794 = vpow.pop %v1793
        %v1795 = vadd.f32 %v1790, 1.0
        %v1796 = vadd.f32 %v1792, 1.0
        %v1797 = vadd.f32 %v1794, 1.0
        %v1798 = vrcp.pop %v1795
        %v1799 = vmul.f32 %v1795, %v1798
        %v1800 = vsub.f32 1.0, %v1799
        %v1801 = vmul.f32 %v1798, %v1800
        %v1802 = vadd.f32 %v1798, %v1801
        %vm1803 = vweird.f32 %v1795
        %vm1804 = vweird.f32 %v1798
        %vm1805 = vmor %vm1803, %vm1804
        %v1806 = vsel %vm1805, %v1798, %v1802
        %v1807 = vand.u32 2147483647, %v1795
        %vm1808 = vcmp.eq.f32.partialorder %v1807, 8.507059e+37
        %v1809 = vand.u32 %v1795, 2147483648
        %v1810 = vor.u32 1.1754944e-38, %v1809
        %v1811 = vsel %vm1808, %v1810, %v1806
        %v1812 = vmul.f32 1.0, %v1811
        %v1813 = vrcp.pop %v1796
        %v1814 = vmul.f32 %v1796, %v1813
        %v1815 = vsub.f32 1.0, %v1814
        %v1816 = vmul.f32 %v1813, %v1815
        %v1817 = vadd.f32 %v1813, %v1816
        %vm1818 = vweird.f32 %v1796
        %vm1819 = vweird.f32 %v1813
        %vm1820 = vmor %vm1818, %vm1819
        %v1821 = vsel %vm1820, %v1813, %v1817
        %v1822 = vand.u32 2147483647, %v1796
        %vm1823 = vcmp.eq.f32.partialorder %v1822, 8.507059e+37
        %v1824 = vand.u32 %v1796, 2147483648
        %v1825 = vor.u32 1.1754944e-38, %v1824
        %v1826 = vsel %vm1823, %v1825, %v1821
        %v1827 = vmul.f32 1.0, %v1826
        %v1828 = vrcp.pop %v1797
        %v1829 = vmul.f32 %v1797, %v1828
        %v1830 = vsub.f32 1.0, %v1829
        %v1831 = vmul.f32 %v1828, %v1830
        %v1832 = vadd.f32 %v1828, %v1831
        %vm1833 = vweird.f32 %v1797
        %vm1834 = vweird.f32 %v1828
        %vm1835 = vmor %vm1833, %vm1834
        %v1836 = vsel %vm1835, %v1828, %v1832
        %v1837 = vand.u32 2147483647, %v1797
        %vm1838 = vcmp.eq.f32.partialorder %v1837, 8.507059e+37
        %v1839 = vand.u32 %v1797, 2147483648
        %v1840 = vor.u32 1.1754944e-38, %v1839
        %v1841 = vsel %vm1838, %v1840, %v1836
        %v1842 = vmul.f32 1.0, %v1841
        %v1843 = vadd.f32 %v1670, %v550
        %v1844 = vtanh.pop %v1843
        %v1845 = vmul.f32 %v1827, %v1522
        %v1846 = vmul.f32 %v1812, %v1844
        %v1847 = vadd.f32 %v1845, %v1846
        %v1848 = vtanh.pop %v1847
        %v1849 = vadd.f32 %v1848, %v546
        %v1850 = vmul.f32 %v1842, %v1849
        %s1851 = scalar_lea.vmem %s378, 24 [#allocation9]
        %1852 = vst [vmem:[%s1851] sm:$0xff] %v1850
        %1853 = vst [vmem:[#allocation2] sm:$0xff] %v1850
        %1854 = vst [vmem:[#allocation3] sm:$0xff] %v1847
        %p1855 = scmp.eq.s32.totalorder %s28, 1
        // Predicated region
        $region65: #{tpu_custom_call.1} parent=51 // pred_check
          %p1856 = pneg %p1855
        $region66: #{tpu_custom_call.1} parent=51 // pred_check_branch
          %1858 = sbr.rel (%p1856) target = $region68
        $region67: #{tpu_custom_call.1} parent=51 // pred_region
          %1859 = vst [vmem:[#allocation10] sm:$0xff] %v1850
          %1860 = vst [vmem:[#allocation12] sm:$0xff] %v1847
        $region68: #{tpu_custom_call.1} parent=51 // pred_fallthru
          _
        %s1861 = sand.u32 %s209, 1
        %s1862 = scalar_lea.sflag [#allocation6], %s1861
        %s1863 = sand.u32 %s209, 1
        %s1864 = smul.addr %s1863, 32
        %s1865 = scalar_lea.vmem [#allocation9], %s1864
        // Predicated region
        $region69: #{tpu_custom_call.1} parent=51 // pred_check
          %p1866 = pneg %p219
        $region70: #{tpu_custom_call.1} parent=51 // pred_check_branch
          %1868 = sbr.rel (%p1866) target = $region72
        $region71: #{tpu_custom_call.1} parent=51 // pred_region
          %s1869 = smul.u32 4, %s28
          %1871 = vsyncadd %s1862, 0
          %s1872 = smul.addr %s1869, 8
          %s1873 = scalar_lea.hbm %s8, %s1872
          %s1874 = sshll.u32 %s1865, 4
          %s1875 = int_to_ptr.vmem [resolvable:$true] %s1874
          %s1876 = sshll.u32 %s1873, 4
          %s1877 = int_to_ptr.hbm [resolvable:$true] %s1876
          %1882 = dma.vmem_to_hbm [thread:$0]  %s1875, 512, %s1877, %s1862, 128, 128, 8
        $region72: #{tpu_custom_call.1} parent=51 // pred_fallthru
          _
        // Predicated region
        $region73: #{tpu_custom_call.1} parent=51 // pred_check
          %p1883 = pneg %p240
        $region74: #{tpu_custom_call.1} parent=51 // pred_check_branch
          %1885 = sbr.rel (%p1883) target = $region76
        $region75: #{tpu_custom_call.1} parent=51 // pred_region
          %1887 = vsyncadd [#allocation11], 0
          %s1889 = sshll.u32 [#allocation10], 4
          %s1890 = int_to_ptr.vmem [resolvable:$true] %s1889
          %s1891 = sshll.u32 %s9, 4
          %s1892 = int_to_ptr.hbm [resolvable:$true] %s1891
          %1894 = dma.vmem_to_hbm [thread:$0]  %s1890, 128, %s1892, [#allocation11]
        $region76: #{tpu_custom_call.1} parent=51 // pred_fallthru
          _
        // Predicated region
        $region77: #{tpu_custom_call.1} parent=51 // pred_check
          %p1895 = pneg %p261
        $region78: #{tpu_custom_call.1} parent=51 // pred_check_branch
          %1897 = sbr.rel (%p1895) target = $region80
        $region79: #{tpu_custom_call.1} parent=51 // pred_region
          %1899 = vsyncadd [#allocation11], 0
          %s1901 = sshll.u32 [#allocation12], 4
          %s1902 = int_to_ptr.vmem [resolvable:$true] %s1901
          %s1903 = sshll.u32 %s10, 4
          %s1904 = int_to_ptr.hbm [resolvable:$true] %s1903
          %1906 = dma.vmem_to_hbm [thread:$0]  %s1902, 128, %s1904, [#allocation11]
        $region80: #{tpu_custom_call.1} parent=51 // pred_fallthru
          _
        // Predicated region
        $region81: #{tpu_custom_call.1} parent=51 // pred_check
          %p1907 = pneg %p240
        $region82: #{tpu_custom_call.1} parent=51 // pred_check_branch
          %1909 = sbr.rel (%p1907) target = $region84
        $region83: #{tpu_custom_call.1} parent=51 // pred_region
          %1911 = dma.done [#allocation11], 128
        $region84: #{tpu_custom_call.1} parent=51 // pred_fallthru
          _
        // Predicated region
        $region85: #{tpu_custom_call.1} parent=51 // pred_check
          %p1912 = pneg %p261
        $region86: #{tpu_custom_call.1} parent=51 // pred_check_branch
          %1914 = sbr.rel (%p1912) target = $region88
        $region87: #{tpu_custom_call.1} parent=51 // pred_region
          %1916 = dma.done [#allocation11], 128
        $region88: #{tpu_custom_call.1} parent=51 // pred_fallthru
          _
      $region52: #{tpu_custom_call.1} parent=5 // pred_fallthru
        _
      %p1917 = scmp.le.s32.totalorder 2, %s23
      // Predicated region
      $region89: #{tpu_custom_call.1} parent=5 // pred_check
        %p1918 = pneg %p1917
      $region90: #{tpu_custom_call.1} parent=5 // pred_check_branch
        %1920 = sbr.rel (%p1918) target = $region92
      $region91: #{tpu_custom_call.1} parent=5 // pred_region
        %s1921 = ssub.s32 %s23, 2
        // Predicated region
        $region93: #{tpu_custom_call.1} parent=91 // pred_check
          %p1922 = pneg %p225
        $region94: #{tpu_custom_call.1} parent=91 // pred_check_branch
          %1924 = sbr.rel (%p1922) target = $region96
        $region95: #{tpu_custom_call.1} parent=91 // pred_region
          %s1925 = sand.u32 %s210, 1
          %s1926 = scalar_lea.sflag [#allocation6], %s1925
          %s1927 = sand.u32 %s210, 1
          %s1928 = smul.addr %s1927, 32
          %s1929 = scalar_lea.vmem [#allocation9], %s1928
          %1931 = dma.done %s1926, 512
        $region96: #{tpu_custom_call.1} parent=91 // pred_fallthru
          _
      $region92: #{tpu_custom_call.1} parent=5 // pred_fallthru
        _
    $region6: #{tpu_custom_call.1} parent=1 // loop_footer
      %s27 = sadd.s32 1, %s23
    $region7: #{tpu_custom_call.1} parent=1 // loop_footer_branch
      %22 = sbr.rel target = $region3
    $region8: #{tpu_custom_call.1} parent=1 // loop_exit
      _
    %1932 = vsyncpa [#allocation5], 1
    %s1933 = scalar_lea.sflag [#allocation5], 1
    %1934 = vsyncpa %s1933, 1
    %1935 = vsyncpa [#allocation8], 1
    %1936 = vsyncpa [#allocation6], 1
    %s1937 = scalar_lea.sflag [#allocation6], 1
    %1938 = vsyncpa %s1937, 1
    %1939 = vsyncpa [#allocation11], 1

</llo_original>
